<compile_context>
chip_gen: v6e
topology: v6e:2x2x1
jax: 0.10.0
libtpu: 0.0.40
codegen_flags: <defaults>
</compile_context>

<pallas_src>
import numpy as np

import jax
import jax.numpy as jnp
from jax.experimental import pallas as pl
from jax.experimental.pallas import tpu as pltpu

PAD = 0  # Constants.PAD


def _round_up(x, m):
    return ((x + m - 1) // m) * m


def _cdiv(a, b):
    return (a + b - 1) // b


def _vmem_budget_bytes():
    """~3/4 of physical VMEM: ~96 MiB on v5e/v6e (128 MiB), ~48 MiB on v7x (64 MiB)."""
    try:
        phys = int(pltpu.get_tpu_info().vmem_capacity_bytes)
    except Exception:
        phys = 64 * 1024 * 1024          # conservative fallback (v7x per-TC)
    return min(phys * 3 // 4, 100 * 1024 * 1024)


def _choose_batch_tiling(T, B, H_pad, vmem_budget):
    """Largest B_tile (multiple of 8, <= 256) whose double-buffered blocks fit."""
    b8 = _round_up(max(B, 1), 8)
    g3 = 3 * H_pad
    per_row = 4 * (2 * 2 * T * g3          # gx_f + gx_r blocks (double-buffered)
                   + 2 * 2 * T * H_pad     # out_f + out_r blocks (double-buffered)
                   + 2 * 2 * H_pad)        # hN block
    fixed = 4 * (2 * 2 * H_pad * g3 + 4 * H_pad) + (2 << 20)   # weights (x2 buf) + slack
    cap = max((vmem_budget - fixed) // per_row, 8)
    cap = max((int(cap) // 8) * 8, 8)
    cap = min(cap, 256)                    # fills the 256-row MXU on v6e/v7x
    n_tiles = _cdiv(b8, cap)
    b_tile = _round_up(_cdiv(b8, n_tiles), 8)
    return b_tile, b_tile * n_tiles


# ---------------------------------------------------------------------------
# Pallas kernel: one bidirectional GRU layer, both directions fused per step.
# Only the serial part (h @ Wh + gate math + pack/pad masking) is in-kernel;
# the input projection GX is hoisted to one batched matmul in the wrapper.
# ---------------------------------------------------------------------------
def _make_gru_kernel(T: int, H_pad: int, B_tile: int):
    unroll = True if T <= 16 else 8

    def kernel(lens_ref, gxf_ref, gxr_ref, whf_ref, whr_ref,
               bhnf_ref, bhnr_ref, outf_ref, outr_ref, hN_ref):
        # lens_ref: (B_tile, 1) int32  sequence lengths (0 for padded rows)
        # gx{f,r}_ref: (T, B_tile, 3*H_pad) f32  precomputed x@Wi + bi (+bh_r,bh_z)
        # wh{f,r}_ref: (H_pad, 3*H_pad) f32      fused recurrent weights (r,z,n)
        # bhn{f,r}_ref: (1, H_pad) f32           recurrent bias of the n gate
        # out{f,r}_ref: (T, B_tile, H_pad)       per-direction output half
        # hN_ref: (2, B_tile, H_pad)             final hidden states (fwd, rev)
        lens = lens_ref[...]
        wh_f = whf_ref[...]
        wh_r = whr_ref[...]
        bhn_f = bhnf_ref[...]
        bhn_r = bhnr_ref[...]

        def gates(gx, gh, bhn, h):
            r = jax.nn.sigmoid(gx[:, 0:H_pad] + gh[:, 0:H_pad])
            z = jax.nn.sigmoid(gx[:, H_pad:2 * H_pad] + gh[:, H_pad:2 * H_pad])
            n = jnp.tanh(gx[:, 2 * H_pad:] + r * (gh[:, 2 * H_pad:] + bhn))
            return (1.0 - z) * n + z * h

        def step(t, carry):
            h_f, h_r = carry
            tr = T - 1 - t
            gx_f = gxf_ref[t]                                       # (B_t, 3Hp)
            gx_r = gxr_ref[tr]
            # Two independent MXU pushes per step -> ILP in the serial chain.
            gh_f = jnp.dot(h_f, wh_f, preferred_element_type=jnp.float32)
            gh_r = jnp.dot(h_r, wh_r, preferred_element_type=jnp.float32)
            hn_f = gates(gx_f, gh_f, bhn_f, h_f)
            hn_r = gates(gx_r, gh_r, bhn_r, h_r)
            # pack_padded_sequence semantics: only valid timesteps update h;
            # padded output positions are zero.
            m_f = t < lens                                          # (B_t, 1)
            m_r = tr < lens
            outf_ref[t] = jnp.where(m_f, hn_f, 0.0).astype(outf_ref.dtype)
            outr_ref[tr] = jnp.where(m_r, hn_r, 0.0).astype(outr_ref.dtype)
            return (jnp.where(m_f, hn_f, h_f), jnp.where(m_r, hn_r, h_r))

        h0 = jnp.zeros((B_tile, H_pad), jnp.float32)
        h_f, h_r = jax.lax.fori_loop(0, T, step, (h0, h0), unroll=unroll)
        hN_ref[0] = h_f.astype(hN_ref.dtype)
        hN_ref[1] = h_r.astype(hN_ref.dtype)

    return kernel


def _run_gru_layer(gx_f, gx_r, wh_pad, bhn_pad, lens_p, H_pad, B_tile, vmem_limit):
    T, B_pad, G3 = gx_f.shape
    kernel = _make_gru_kernel(T, H_pad, B_tile)
    grid = (B_pad // B_tile,)
    out_f, out_r, hN = pl.pallas_call(
        kernel,
        out_shape=(
            jax.ShapeDtypeStruct((T, B_pad, H_pad), jnp.float32),
            jax.ShapeDtypeStruct((T, B_pad, H_pad), jnp.float32),
            jax.ShapeDtypeStruct((2, B_pad, H_pad), jnp.float32),
        ),
        grid=grid,
        in_specs=[
            pl.BlockSpec((B_tile, 1), lambda bt: (bt, 0)),
            pl.BlockSpec((T, B_tile, G3), lambda bt: (0, bt, 0)),
            pl.BlockSpec((T, B_tile, G3), lambda bt: (0, bt, 0)),
            pl.BlockSpec((H_pad, G3), lambda bt: (0, 0)),
            pl.BlockSpec((H_pad, G3), lambda bt: (0, 0)),
            pl.BlockSpec((1, H_pad), lambda bt: (0, 0)),
            pl.BlockSpec((1, H_pad), lambda bt: (0, 0)),
        ],
        out_specs=(
            pl.BlockSpec((T, B_tile, H_pad), lambda bt: (0, bt, 0)),
            pl.BlockSpec((T, B_tile, H_pad), lambda bt: (0, bt, 0)),
            pl.BlockSpec((2, B_tile, H_pad), lambda bt: (0, bt, 0)),
        ),
        compiler_params=pltpu.CompilerParams(
            dimension_semantics=("parallel",),
            vmem_limit_bytes=int(vmem_limit),
        ),
    )(lens_p, gx_f, gx_r, wh_pad[0], wh_pad[1], bhn_pad[0], bhn_pad[1])
    return out_f, out_r, hN


# ---------------------------------------------------------------------------
# Wrapper-side weight prep (tiny tensors get padded, not the big activations)
# ---------------------------------------------------------------------------
def _pad_gates(a, H, H_pad):
    """(..., 3H) -> (..., 3*H_pad): zero-pad each gate block to H_pad lanes."""
    if H_pad == H:
        return a
    parts = [a[..., i * H:(i + 1) * H] for i in range(3)]
    padw = [(0, 0)] * (a.ndim - 1) + [(0, H_pad - H)]
    return jnp.concatenate([jnp.pad(p, padw) for p in parts], axis=-1)


def _prep_layer(layer, H, H_pad, first_layer):
    wi, wh, bi, bh = layer["wi"], layer["wh"], layer["bi"], layer["bh"]
    # bi fully folded; bh_r / bh_z folded too (bh_n stays apart: r*(h@Wh_n+bh_n)).
    bias = bi + jnp.concatenate([bh[:, :2 * H], jnp.zeros((2, H), bh.dtype)], -1)
    bias_pad = _pad_gates(bias, H, H_pad)                                # (2, 3*H_pad)
    bhn_pad = jnp.pad(bh[:, 2 * H:], ((0, 0), (0, H_pad - H)))[:, None, :]  # (2,1,H_pad)
    wh_pad = _pad_gates(jnp.pad(wh, ((0, 0), (0, H_pad - H), (0, 0))), H, H_pad)
    # Input-weight chunks matching the layer-input feature slabs.
    if first_layer:
        wi_chunks = [_pad_gates(wi, H, H_pad)]                           # [(2, E, 3Hp)]
    else:
        wi_chunks = [
            _pad_gates(jnp.pad(wi[:, :H, :], ((0, 0), (0, H_pad - H), (0, 0))), H, H_pad),
            _pad_gates(jnp.pad(wi[:, H:, :], ((0, 0), (0, H_pad - H), (0, 0))), H, H_pad),
        ]                                                                # 2x (2, Hp, 3Hp)
    return wi_chunks, wh_pad, bias_pad, bhn_pad


def _input_projection(xs, wi_chunks, bias_pad, d):
    """Hoisted GX_d = sum_chunks x_chunk @ Wi_chunk[d] + folded bias (padded layout)."""
    acc = None
    for x, w in zip(xs, wi_chunks):
        term = jnp.einsum("tbd,dg->tbg", x, w[d],
                          preferred_element_type=jnp.float32)
        acc = term if acc is None else acc + term
    return acc + bias_pad[d]


# ---------------------------------------------------------------------------
# EncoderRNN forward (embedding lookup + layer stacking = plain-JAX glue)
# ---------------------------------------------------------------------------
def encoder_forward(params, input_seqs, input_lengths):
    """input_seqs: (T, B) int32, input_lengths: (B,) int32 (sorted desc)."""
    T, B = input_seqs.shape
    H = params["hidden_size"]
    H_pad = _round_up(H, 128)
    vmem_limit = _vmem_budget_bytes()
    B_tile, B_pad = _choose_batch_tiling(T, B, H_pad, vmem_limit)

    # Pad once at the token / length level; everything stays padded until the end.
    ids_p = jnp.pad(input_seqs, ((0, 0), (0, B_pad - B)), constant_values=PAD)
    lens_p = jnp.pad(input_lengths.astype(jnp.int32),
                     (0, B_pad - B)).reshape(B_pad, 1)

    xs = [jnp.take(params["embedding"], ids_p, axis=0)]     # [(T, B_pad, E)]
    hiddens = []
    for li, layer in enumerate(params["gru"]):
        wi_chunks, wh_pad, bias_pad, bhn_pad = _prep_layer(layer, H, H_pad, li == 0)
        gx_f = _input_projection(xs, wi_chunks, bias_pad, 0)  # (T, B_pad, 3*H_pad)
        gx_r = _input_projection(xs, wi_chunks, bias_pad, 1)
        out_f, out_r, hN = _run_gru_layer(gx_f, gx_r, wh_pad, bhn_pad,
                                          lens_p, H_pad, B_tile, vmem_limit)
        hiddens.append(hN)
        xs = [out_f, out_r]        # padded halves feed the next layer directly

    # Strip padding exactly once, after the last layer.
    outputs = jnp.concatenate([xs[0][:, :B, :H], xs[1][:, :B, :H]], axis=-1)
    hidden = jnp.concatenate(hiddens, axis=0)[:, :B, :H]     # (n_layers*2, B, H)
    return outputs, hidden


# ---------------------------------------------------------------------------
# Deterministic parameter init (shapes mirror nn.Embedding + nn.GRU),
# gate weights stored fused along the last axis in (r, z, n) order.
# ---------------------------------------------------------------------------
def init_params(key, vocab_size, embedding_size, hidden_size, n_layers):
    keys = iter(jax.random.split(key, 1 + 4 * n_layers))
    emb = jax.random.normal(next(keys), (vocab_size, embedding_size),
                            jnp.float32) * 0.1
    emb = emb.at[PAD].set(0.0)  # padding_idx=Constants.PAD

    bound = 1.0 / np.sqrt(hidden_size)
    gru = []
    for layer in range(n_layers):
        d_in = embedding_size if layer == 0 else 2 * hidden_size
        wi = jax.random.uniform(next(keys), (2, d_in, 3 * hidden_size),
                                jnp.float32, -bound, bound)
        wh = jax.random.uniform(next(keys), (2, hidden_size, 3 * hidden_size),
                                jnp.float32, -bound, bound)
        bi = jax.random.uniform(next(keys), (2, 3 * hidden_size),
                                jnp.float32, -bound, bound)
        bh = jax.random.uniform(next(keys), (2, 3 * hidden_size),
                                jnp.float32, -bound, bound)
        gru.append({"wi": wi, "wh": wh, "bi": bi, "bh": bh})

    return {"embedding": emb, "gru": gru, "hidden_size": hidden_size}


# ---------------------------------------------------------------------------
# Pure-JAX reference (same math, python time loop) for verification
# ---------------------------------------------------------------------------
def _gru_direction_ref(x, lengths, wi, wh, bi, bh, h0, reverse, H):
    T, B, _ = x.shape
    h = h0
    out = jnp.zeros((T, B, H), jnp.float32)
    lens = lengths.reshape(-1, 1)
    order = range(T - 1, -1, -1) if reverse else range(T)
    for t in order:
        gx = x[t] @ wi + bi
        gh = h @ wh + bh
        r = jax.nn.sigmoid(gx[:, 0:H] + gh[:, 0:H])
        z = jax.nn.sigmoid(gx[:, H:2 * H] + gh[:, H:2 * H])
        n = jnp.tanh(gx[:, 2 * H:] + r * gh[:, 2 * H:])
        h_new = (1.0 - z) * n + z * h
        mask = t < lens
        h = jnp.where(mask, h_new, h)
        out = out.at[t].set(jnp.where(mask, h_new, 0.0))
    return out, h


def encoder_forward_ref(params, input_seqs, input_lengths):
    emb = jnp.take(params["embedding"], input_seqs, axis=0)
    H = params["hidden_size"]
    B = input_seqs.shape[1]
    lens = input_lengths.astype(jnp.int32)
    x = emb
    hiddens = []
    for layer in params["gru"]:
        outs = []
        for d, rev in enumerate((False, True)):
            h0 = jnp.zeros((B, H), jnp.float32)
            o, hN = _gru_direction_ref(x, lens, layer["wi"][d], layer["wh"][d],
                                       layer["bi"][d], layer["bh"][d],
                                       h0, rev, H)
            outs.append(o)
            hiddens.append(hN)
        x = jnp.concatenate(outs, axis=-1)
    return x, jnp.stack(hiddens, axis=0)


# ---------------------------------------------------------------------------
if __name__ == "__main__":
    vocab_size = 20
    embedding_size = 16
    hidden_size = 32
    n_layers = 2
    T, B = 8, 4

    key = jax.random.PRNGKey(0)
    k_params, k_tokens = jax.random.split(key)
    params = init_params(k_params, vocab_size, embedding_size,
                         hidden_size, n_layers)

    # Sorted-descending lengths (as pack_padded_sequence requires); max == T.
    input_lengths = jnp.array([8, 6, 5, 3], dtype=jnp.int32)
    tokens = jax.random.randint(k_tokens, (T, B), 1, vocab_size, jnp.int32)
    t_idx = jnp.arange(T)[:, None]
    input_seqs = jnp.where(t_idx < input_lengths[None, :], tokens, PAD)

    outputs, hidden = encoder_forward(params, input_seqs, input_lengths)
    outputs = jax.block_until_ready(outputs)
    hidden = jax.block_until_ready(hidden)

    assert outputs.shape == (T, B, 2 * hidden_size)
    assert hidden.shape == (n_layers * 2, B, hidden_size)

    # Verify against pure-JAX reference.
    ref_out, ref_hid = encoder_forward_ref(params, input_seqs, input_lengths)
    np.testing.assert_allclose(np.asarray(outputs), np.asarray(ref_out),
                               rtol=1e-4, atol=1e-4)
    np.testing.assert_allclose(np.asarray(hidden), np.asarray(ref_hid),
                               rtol=1e-4, atol=1e-4)

    print("KERNEL_OK")
</pallas_src>

<mosaic_0001>
module attributes {stable_mosaic.version = 11 : i64} {
  func.func @kernel(%arg0: i32, %arg1: memref<8x1xi32, #tpu.memory_space<vmem>>, %arg2: memref<8x8x384xf32, #tpu.memory_space<vmem>>, %arg3: memref<8x8x384xf32, #tpu.memory_space<vmem>>, %arg4: memref<128x384xf32, #tpu.memory_space<vmem>>, %arg5: memref<128x384xf32, #tpu.memory_space<vmem>>, %arg6: memref<1x128xf32, #tpu.memory_space<vmem>>, %arg7: memref<1x128xf32, #tpu.memory_space<vmem>>, %arg8: memref<8x8x128xf32, #tpu.memory_space<vmem>>, %arg9: memref<8x8x128xf32, #tpu.memory_space<vmem>>, %arg10: memref<2x8x128xf32, #tpu.memory_space<vmem>>) attributes {dimension_semantics = [#tpu.dimension_semantics<parallel>], iteration_bounds = array<i64: 1>, scalar_prefetch = 0 : i64, scratch_operands = 0 : i64, tpu.core_type = #tpu.core_type<tc>, window_params = [{transform_indices = @transform_0, window_bounds = array<i64: 8, 1>}, {transform_indices = @transform_1, window_bounds = array<i64: 8, 8, 384>}, {transform_indices = @transform_2, window_bounds = array<i64: 8, 8, 384>}, {pipeline_mode = #tpu.pipeline_mode<synchronous>, transform_indices = @transform_3, window_bounds = array<i64: 128, 384>}, {pipeline_mode = #tpu.pipeline_mode<synchronous>, transform_indices = @transform_4, window_bounds = array<i64: 128, 384>}, {pipeline_mode = #tpu.pipeline_mode<synchronous>, transform_indices = @transform_5, window_bounds = array<i64: 1, 128>}, {pipeline_mode = #tpu.pipeline_mode<synchronous>, transform_indices = @transform_6, window_bounds = array<i64: 1, 128>}, {transform_indices = @transform_7, window_bounds = array<i64: 8, 8, 128>}, {transform_indices = @transform_8, window_bounds = array<i64: 8, 8, 128>}, {transform_indices = @transform_9, window_bounds = array<i64: 2, 8, 128>}]} {
    %c0 = arith.constant 0 : index
    %c0_0 = arith.constant 0 : index
    %0 = vector.load %arg1[%c0, %c0_0] : memref<8x1xi32, #tpu.memory_space<vmem>>, vector<8x1xi32>
    %c0_1 = arith.constant 0 : index
    %c0_2 = arith.constant 0 : index
    %1 = vector.load %arg4[%c0_1, %c0_2] : memref<128x384xf32, #tpu.memory_space<vmem>>, vector<128x384xf32>
    %c0_3 = arith.constant 0 : index
    %c0_4 = arith.constant 0 : index
    %2 = vector.load %arg5[%c0_3, %c0_4] : memref<128x384xf32, #tpu.memory_space<vmem>>, vector<128x384xf32>
    %c0_5 = arith.constant 0 : index
    %c0_6 = arith.constant 0 : index
    %3 = vector.load %arg6[%c0_5, %c0_6] : memref<1x128xf32, #tpu.memory_space<vmem>>, vector<1x128xf32>
    %c0_7 = arith.constant 0 : index
    %c0_8 = arith.constant 0 : index
    %4 = vector.load %arg7[%c0_7, %c0_8] : memref<1x128xf32, #tpu.memory_space<vmem>>, vector<1x128xf32>
    %cst = arith.constant 0.000000e+00 : f32
    %5 = vector.broadcast %cst : f32 to vector<8x128xf32>
    %c0_i32 = arith.constant 0 : i32
    %c7_i32 = arith.constant 7 : i32
    %6 = arith.subi %c7_i32, %c0_i32 : i32
    %7 = arith.index_cast %c0_i32 : i32 to index
    %c0_9 = arith.constant 0 : index
    %c0_10 = arith.constant 0 : index
    %8 = vector.load %arg2[%7, %c0_9, %c0_10] : memref<8x8x384xf32, #tpu.memory_space<vmem>>, vector<1x8x384xf32>
    %9 = vector.shape_cast %8 : vector<1x8x384xf32> to vector<8x384xf32>
    %10 = arith.index_cast %6 : i32 to index
    %c0_11 = arith.constant 0 : index
    %c0_12 = arith.constant 0 : index
    %11 = vector.load %arg3[%10, %c0_11, %c0_12] : memref<8x8x384xf32, #tpu.memory_space<vmem>>, vector<1x8x384xf32>
    %12 = vector.shape_cast %11 : vector<1x8x384xf32> to vector<8x384xf32>
    %cst_13 = arith.constant dense<0.000000e+00> : vector<8x384xf32>
    %13 = tpu.matmul %5, %1, %cst_13 {dimension_numbers = #tpu.dot_dimension_numbers<[1], [0], [0], [1], [0, 0, 1, 1], [], []>} : vector<8x128xf32>, vector<128x384xf32>, vector<8x384xf32> -> vector<8x384xf32>
    %cst_14 = arith.constant dense<0.000000e+00> : vector<8x384xf32>
    %14 = tpu.matmul %5, %2, %cst_14 {dimension_numbers = #tpu.dot_dimension_numbers<[1], [0], [0], [1], [0, 0, 1, 1], [], []>} : vector<8x128xf32>, vector<128x384xf32>, vector<8x384xf32> -> vector<8x384xf32>
    %15 = vector.extract_strided_slice %9 {offsets = [0, 0], sizes = [8, 128], strides = [1, 1]} : vector<8x384xf32> to vector<8x128xf32>
    %16 = vector.extract_strided_slice %13 {offsets = [0, 0], sizes = [8, 128], strides = [1, 1]} : vector<8x384xf32> to vector<8x128xf32>
    %17 = arith.addf %15, %16 : vector<8x128xf32>
    %18 = arith.negf %17 : vector<8x128xf32>
    %19 = math.exp %18 : vector<8x128xf32>
    %cst_15 = arith.constant 1.000000e+00 : f32
    %20 = vector.broadcast %cst_15 : f32 to vector<8x128xf32>
    %21 = arith.addf %20, %19 : vector<8x128xf32>
    %22 = arith.divf %20, %21 : vector<8x128xf32>
    %23 = vector.extract_strided_slice %9 {offsets = [0, 128], sizes = [8, 128], strides = [1, 1]} : vector<8x384xf32> to vector<8x128xf32>
    %24 = vector.extract_strided_slice %13 {offsets = [0, 128], sizes = [8, 128], strides = [1, 1]} : vector<8x384xf32> to vector<8x128xf32>
    %25 = arith.addf %23, %24 : vector<8x128xf32>
    %26 = arith.negf %25 : vector<8x128xf32>
    %27 = math.exp %26 : vector<8x128xf32>
    %cst_16 = arith.constant 1.000000e+00 : f32
    %28 = vector.broadcast %cst_16 : f32 to vector<8x128xf32>
    %29 = arith.addf %28, %27 : vector<8x128xf32>
    %30 = arith.divf %28, %29 : vector<8x128xf32>
    %31 = vector.extract_strided_slice %9 {offsets = [0, 256], sizes = [8, 128], strides = [1, 1]} : vector<8x384xf32> to vector<8x128xf32>
    %32 = vector.extract_strided_slice %13 {offsets = [0, 256], sizes = [8, 128], strides = [1, 1]} : vector<8x384xf32> to vector<8x128xf32>
    %33 = vector.broadcast %3 : vector<1x128xf32> to vector<8x128xf32>
    %34 = arith.addf %32, %33 : vector<8x128xf32>
    %35 = arith.mulf %22, %34 : vector<8x128xf32>
    %36 = arith.addf %31, %35 : vector<8x128xf32>
    %37 = math.tanh %36 : vector<8x128xf32>
    %cst_17 = arith.constant 1.000000e+00 : f32
    %38 = vector.broadcast %cst_17 : f32 to vector<8x128xf32>
    %39 = arith.subf %38, %30 : vector<8x128xf32>
    %40 = arith.mulf %39, %37 : vector<8x128xf32>
    %41 = arith.mulf %30, %5 : vector<8x128xf32>
    %42 = arith.addf %40, %41 : vector<8x128xf32>
    %43 = vector.extract_strided_slice %12 {offsets = [0, 0], sizes = [8, 128], strides = [1, 1]} : vector<8x384xf32> to vector<8x128xf32>
    %44 = vector.extract_strided_slice %14 {offsets = [0, 0], sizes = [8, 128], strides = [1, 1]} : vector<8x384xf32> to vector<8x128xf32>
    %45 = arith.addf %43, %44 : vector<8x128xf32>
    %46 = arith.negf %45 : vector<8x128xf32>
    %47 = math.exp %46 : vector<8x128xf32>
    %cst_18 = arith.constant 1.000000e+00 : f32
    %48 = vector.broadcast %cst_18 : f32 to vector<8x128xf32>
    %49 = arith.addf %48, %47 : vector<8x128xf32>
    %50 = arith.divf %48, %49 : vector<8x128xf32>
    %51 = vector.extract_strided_slice %12 {offsets = [0, 128], sizes = [8, 128], strides = [1, 1]} : vector<8x384xf32> to vector<8x128xf32>
    %52 = vector.extract_strided_slice %14 {offsets = [0, 128], sizes = [8, 128], strides = [1, 1]} : vector<8x384xf32> to vector<8x128xf32>
    %53 = arith.addf %51, %52 : vector<8x128xf32>
    %54 = arith.negf %53 : vector<8x128xf32>
    %55 = math.exp %54 : vector<8x128xf32>
    %cst_19 = arith.constant 1.000000e+00 : f32
    %56 = vector.broadcast %cst_19 : f32 to vector<8x128xf32>
    %57 = arith.addf %56, %55 : vector<8x128xf32>
    %58 = arith.divf %56, %57 : vector<8x128xf32>
    %59 = vector.extract_strided_slice %12 {offsets = [0, 256], sizes = [8, 128], strides = [1, 1]} : vector<8x384xf32> to vector<8x128xf32>
    %60 = vector.extract_strided_slice %14 {offsets = [0, 256], sizes = [8, 128], strides = [1, 1]} : vector<8x384xf32> to vector<8x128xf32>
    %61 = vector.broadcast %4 : vector<1x128xf32> to vector<8x128xf32>
    %62 = arith.addf %60, %61 : vector<8x128xf32>
    %63 = arith.mulf %50, %62 : vector<8x128xf32>
    %64 = arith.addf %59, %63 : vector<8x128xf32>
    %65 = math.tanh %64 : vector<8x128xf32>
    %cst_20 = arith.constant 1.000000e+00 : f32
    %66 = vector.broadcast %cst_20 : f32 to vector<8x128xf32>
    %67 = arith.subf %66, %58 : vector<8x128xf32>
    %68 = arith.mulf %67, %65 : vector<8x128xf32>
    %69 = arith.mulf %58, %5 : vector<8x128xf32>
    %70 = arith.addf %68, %69 : vector<8x128xf32>
    %71 = vector.broadcast %c0_i32 : i32 to vector<8x1xi32>
    %72 = arith.cmpi slt, %71, %0 : vector<8x1xi32>
    %73 = vector.broadcast %6 : i32 to vector<8x1xi32>
    %74 = arith.cmpi slt, %73, %0 : vector<8x1xi32>
    %cst_21 = arith.constant 0.000000e+00 : f32
    %75 = vector.shape_cast %72 : vector<8x1xi1> to vector<8x1xi1>
    %76 = vector.broadcast %75 : vector<8x1xi1> to vector<8x128xi1>
    %77 = vector.broadcast %cst_21 : f32 to vector<8x128xf32>
    %78 = arith.select %76, %42, %77 : vector<8x128xi1>, vector<8x128xf32>
    %79 = arith.index_cast %c0_i32 : i32 to index
    %c0_22 = arith.constant 0 : index
    %c0_23 = arith.constant 0 : index
    %80 = vector.load %arg8[%79, %c0_22, %c0_23] : memref<8x8x128xf32, #tpu.memory_space<vmem>>, vector<1x8x128xf32>
    %81 = vector.shape_cast %80 : vector<1x8x128xf32> to vector<8x128xf32>
    %82 = vector.shape_cast %78 : vector<8x128xf32> to vector<1x8x128xf32>
    tpu.vector_store %arg8[%79, %c0_22, %c0_23], %82 {strides = array<i32>} : memref<8x8x128xf32, #tpu.memory_space<vmem>>, vector<1x8x128xf32>,
    %cst_24 = arith.constant 0.000000e+00 : f32
    %83 = vector.shape_cast %74 : vector<8x1xi1> to vector<8x1xi1>
    %84 = vector.broadcast %83 : vector<8x1xi1> to vector<8x128xi1>
    %85 = vector.broadcast %cst_24 : f32 to vector<8x128xf32>
    %86 = arith.select %84, %70, %85 : vector<8x128xi1>, vector<8x128xf32>
    %87 = arith.index_cast %6 : i32 to index
    %c0_25 = arith.constant 0 : index
    %c0_26 = arith.constant 0 : index
    %88 = vector.load %arg9[%87, %c0_25, %c0_26] : memref<8x8x128xf32, #tpu.memory_space<vmem>>, vector<1x8x128xf32>
    %89 = vector.shape_cast %88 : vector<1x8x128xf32> to vector<8x128xf32>
    %90 = vector.shape_cast %86 : vector<8x128xf32> to vector<1x8x128xf32>
    tpu.vector_store %arg9[%87, %c0_25, %c0_26], %90 {strides = array<i32>} : memref<8x8x128xf32, #tpu.memory_space<vmem>>, vector<1x8x128xf32>,
    %91 = vector.shape_cast %72 : vector<8x1xi1> to vector<8x1xi1>
    %92 = vector.broadcast %91 : vector<8x1xi1> to vector<8x128xi1>
    %93 = arith.select %92, %42, %5 : vector<8x128xi1>, vector<8x128xf32>
    %94 = vector.shape_cast %74 : vector<8x1xi1> to vector<8x1xi1>
    %95 = vector.broadcast %94 : vector<8x1xi1> to vector<8x128xi1>
    %96 = arith.select %95, %70, %5 : vector<8x128xi1>, vector<8x128xf32>
    %c1_i32 = arith.constant 1 : i32
    %c7_i32_27 = arith.constant 7 : i32
    %97 = arith.subi %c7_i32_27, %c1_i32 : i32
    %98 = arith.index_cast %c1_i32 : i32 to index
    %c0_28 = arith.constant 0 : index
    %c0_29 = arith.constant 0 : index
    %99 = vector.load %arg2[%98, %c0_28, %c0_29] : memref<8x8x384xf32, #tpu.memory_space<vmem>>, vector<1x8x384xf32>
    %100 = vector.shape_cast %99 : vector<1x8x384xf32> to vector<8x384xf32>
    %101 = arith.index_cast %97 : i32 to index
    %c0_30 = arith.constant 0 : index
    %c0_31 = arith.constant 0 : index
    %102 = vector.load %arg3[%101, %c0_30, %c0_31] : memref<8x8x384xf32, #tpu.memory_space<vmem>>, vector<1x8x384xf32>
    %103 = vector.shape_cast %102 : vector<1x8x384xf32> to vector<8x384xf32>
    %cst_32 = arith.constant dense<0.000000e+00> : vector<8x384xf32>
    %104 = tpu.matmul %93, %1, %cst_32 {dimension_numbers = #tpu.dot_dimension_numbers<[1], [0], [0], [1], [0, 0, 1, 1], [], []>} : vector<8x128xf32>, vector<128x384xf32>, vector<8x384xf32> -> vector<8x384xf32>
    %cst_33 = arith.constant dense<0.000000e+00> : vector<8x384xf32>
    %105 = tpu.matmul %96, %2, %cst_33 {dimension_numbers = #tpu.dot_dimension_numbers<[1], [0], [0], [1], [0, 0, 1, 1], [], []>} : vector<8x128xf32>, vector<128x384xf32>, vector<8x384xf32> -> vector<8x384xf32>
    %106 = vector.extract_strided_slice %100 {offsets = [0, 0], sizes = [8, 128], strides = [1, 1]} : vector<8x384xf32> to vector<8x128xf32>
    %107 = vector.extract_strided_slice %104 {offsets = [0, 0], sizes = [8, 128], strides = [1, 1]} : vector<8x384xf32> to vector<8x128xf32>
    %108 = arith.addf %106, %107 : vector<8x128xf32>
    %109 = arith.negf %108 : vector<8x128xf32>
    %110 = math.exp %109 : vector<8x128xf32>
    %cst_34 = arith.constant 1.000000e+00 : f32
    %111 = vector.broadcast %cst_34 : f32 to vector<8x128xf32>
    %112 = arith.addf %111, %110 : vector<8x128xf32>
    %113 = arith.divf %111, %112 : vector<8x128xf32>
    %114 = vector.extract_strided_slice %100 {offsets = [0, 128], sizes = [8, 128], strides = [1, 1]} : vector<8x384xf32> to vector<8x128xf32>
    %115 = vector.extract_strided_slice %104 {offsets = [0, 128], sizes = [8, 128], strides = [1, 1]} : vector<8x384xf32> to vector<8x128xf32>
    %116 = arith.addf %114, %115 : vector<8x128xf32>
    %117 = arith.negf %116 : vector<8x128xf32>
    %118 = math.exp %117 : vector<8x128xf32>
    %cst_35 = arith.constant 1.000000e+00 : f32
    %119 = vector.broadcast %cst_35 : f32 to vector<8x128xf32>
    %120 = arith.addf %119, %118 : vector<8x128xf32>
    %121 = arith.divf %119, %120 : vector<8x128xf32>
    %122 = vector.extract_strided_slice %100 {offsets = [0, 256], sizes = [8, 128], strides = [1, 1]} : vector<8x384xf32> to vector<8x128xf32>
    %123 = vector.extract_strided_slice %104 {offsets = [0, 256], sizes = [8, 128], strides = [1, 1]} : vector<8x384xf32> to vector<8x128xf32>
    %124 = vector.broadcast %3 : vector<1x128xf32> to vector<8x128xf32>
    %125 = arith.addf %123, %124 : vector<8x128xf32>
    %126 = arith.mulf %113, %125 : vector<8x128xf32>
    %127 = arith.addf %122, %126 : vector<8x128xf32>
    %128 = math.tanh %127 : vector<8x128xf32>
    %cst_36 = arith.constant 1.000000e+00 : f32
    %129 = vector.broadcast %cst_36 : f32 to vector<8x128xf32>
    %130 = arith.subf %129, %121 : vector<8x128xf32>
    %131 = arith.mulf %130, %128 : vector<8x128xf32>
    %132 = arith.mulf %121, %93 : vector<8x128xf32>
    %133 = arith.addf %131, %132 : vector<8x128xf32>
    %134 = vector.extract_strided_slice %103 {offsets = [0, 0], sizes = [8, 128], strides = [1, 1]} : vector<8x384xf32> to vector<8x128xf32>
    %135 = vector.extract_strided_slice %105 {offsets = [0, 0], sizes = [8, 128], strides = [1, 1]} : vector<8x384xf32> to vector<8x128xf32>
    %136 = arith.addf %134, %135 : vector<8x128xf32>
    %137 = arith.negf %136 : vector<8x128xf32>
    %138 = math.exp %137 : vector<8x128xf32>
    %cst_37 = arith.constant 1.000000e+00 : f32
    %139 = vector.broadcast %cst_37 : f32 to vector<8x128xf32>
    %140 = arith.addf %139, %138 : vector<8x128xf32>
    %141 = arith.divf %139, %140 : vector<8x128xf32>
    %142 = vector.extract_strided_slice %103 {offsets = [0, 128], sizes = [8, 128], strides = [1, 1]} : vector<8x384xf32> to vector<8x128xf32>
    %143 = vector.extract_strided_slice %105 {offsets = [0, 128], sizes = [8, 128], strides = [1, 1]} : vector<8x384xf32> to vector<8x128xf32>
    %144 = arith.addf %142, %143 : vector<8x128xf32>
    %145 = arith.negf %144 : vector<8x128xf32>
    %146 = math.exp %145 : vector<8x128xf32>
    %cst_38 = arith.constant 1.000000e+00 : f32
    %147 = vector.broadcast %cst_38 : f32 to vector<8x128xf32>
    %148 = arith.addf %147, %146 : vector<8x128xf32>
    %149 = arith.divf %147, %148 : vector<8x128xf32>
    %150 = vector.extract_strided_slice %103 {offsets = [0, 256], sizes = [8, 128], strides = [1, 1]} : vector<8x384xf32> to vector<8x128xf32>
    %151 = vector.extract_strided_slice %105 {offsets = [0, 256], sizes = [8, 128], strides = [1, 1]} : vector<8x384xf32> to vector<8x128xf32>
    %152 = vector.broadcast %4 : vector<1x128xf32> to vector<8x128xf32>
    %153 = arith.addf %151, %152 : vector<8x128xf32>
    %154 = arith.mulf %141, %153 : vector<8x128xf32>
    %155 = arith.addf %150, %154 : vector<8x128xf32>
    %156 = math.tanh %155 : vector<8x128xf32>
    %cst_39 = arith.constant 1.000000e+00 : f32
    %157 = vector.broadcast %cst_39 : f32 to vector<8x128xf32>
    %158 = arith.subf %157, %149 : vector<8x128xf32>
    %159 = arith.mulf %158, %156 : vector<8x128xf32>
    %160 = arith.mulf %149, %96 : vector<8x128xf32>
    %161 = arith.addf %159, %160 : vector<8x128xf32>
    %162 = vector.broadcast %c1_i32 : i32 to vector<8x1xi32>
    %163 = arith.cmpi slt, %162, %0 : vector<8x1xi32>
    %164 = vector.broadcast %97 : i32 to vector<8x1xi32>
    %165 = arith.cmpi slt, %164, %0 : vector<8x1xi32>
    %cst_40 = arith.constant 0.000000e+00 : f32
    %166 = vector.shape_cast %163 : vector<8x1xi1> to vector<8x1xi1>
    %167 = vector.broadcast %166 : vector<8x1xi1> to vector<8x128xi1>
    %168 = vector.broadcast %cst_40 : f32 to vector<8x128xf32>
    %169 = arith.select %167, %133, %168 : vector<8x128xi1>, vector<8x128xf32>
    %170 = arith.index_cast %c1_i32 : i32 to index
    %c0_41 = arith.constant 0 : index
    %c0_42 = arith.constant 0 : index
    %171 = vector.load %arg8[%170, %c0_41, %c0_42] : memref<8x8x128xf32, #tpu.memory_space<vmem>>, vector<1x8x128xf32>
    %172 = vector.shape_cast %171 : vector<1x8x128xf32> to vector<8x128xf32>
    %173 = vector.shape_cast %169 : vector<8x128xf32> to vector<1x8x128xf32>
    tpu.vector_store %arg8[%170, %c0_41, %c0_42], %173 {strides = array<i32>} : memref<8x8x128xf32, #tpu.memory_space<vmem>>, vector<1x8x128xf32>,
    %cst_43 = arith.constant 0.000000e+00 : f32
    %174 = vector.shape_cast %165 : vector<8x1xi1> to vector<8x1xi1>
    %175 = vector.broadcast %174 : vector<8x1xi1> to vector<8x128xi1>
    %176 = vector.broadcast %cst_43 : f32 to vector<8x128xf32>
    %177 = arith.select %175, %161, %176 : vector<8x128xi1>, vector<8x128xf32>
    %178 = arith.index_cast %97 : i32 to index
    %c0_44 = arith.constant 0 : index
    %c0_45 = arith.constant 0 : index
    %179 = vector.load %arg9[%178, %c0_44, %c0_45] : memref<8x8x128xf32, #tpu.memory_space<vmem>>, vector<1x8x128xf32>
    %180 = vector.shape_cast %179 : vector<1x8x128xf32> to vector<8x128xf32>
    %181 = vector.shape_cast %177 : vector<8x128xf32> to vector<1x8x128xf32>
    tpu.vector_store %arg9[%178, %c0_44, %c0_45], %181 {strides = array<i32>} : memref<8x8x128xf32, #tpu.memory_space<vmem>>, vector<1x8x128xf32>,
    %182 = vector.shape_cast %163 : vector<8x1xi1> to vector<8x1xi1>
    %183 = vector.broadcast %182 : vector<8x1xi1> to vector<8x128xi1>
    %184 = arith.select %183, %133, %93 : vector<8x128xi1>, vector<8x128xf32>
    %185 = vector.shape_cast %165 : vector<8x1xi1> to vector<8x1xi1>
    %186 = vector.broadcast %185 : vector<8x1xi1> to vector<8x128xi1>
    %187 = arith.select %186, %161, %96 : vector<8x128xi1>, vector<8x128xf32>
    %c2_i32 = arith.constant 2 : i32
    %c7_i32_46 = arith.constant 7 : i32
    %188 = arith.subi %c7_i32_46, %c2_i32 : i32
    %189 = arith.index_cast %c2_i32 : i32 to index
    %c0_47 = arith.constant 0 : index
    %c0_48 = arith.constant 0 : index
    %190 = vector.load %arg2[%189, %c0_47, %c0_48] : memref<8x8x384xf32, #tpu.memory_space<vmem>>, vector<1x8x384xf32>
    %191 = vector.shape_cast %190 : vector<1x8x384xf32> to vector<8x384xf32>
    %192 = arith.index_cast %188 : i32 to index
    %c0_49 = arith.constant 0 : index
    %c0_50 = arith.constant 0 : index
    %193 = vector.load %arg3[%192, %c0_49, %c0_50] : memref<8x8x384xf32, #tpu.memory_space<vmem>>, vector<1x8x384xf32>
    %194 = vector.shape_cast %193 : vector<1x8x384xf32> to vector<8x384xf32>
    %cst_51 = arith.constant dense<0.000000e+00> : vector<8x384xf32>
    %195 = tpu.matmul %184, %1, %cst_51 {dimension_numbers = #tpu.dot_dimension_numbers<[1], [0], [0], [1], [0, 0, 1, 1], [], []>} : vector<8x128xf32>, vector<128x384xf32>, vector<8x384xf32> -> vector<8x384xf32>
    %cst_52 = arith.constant dense<0.000000e+00> : vector<8x384xf32>
    %196 = tpu.matmul %187, %2, %cst_52 {dimension_numbers = #tpu.dot_dimension_numbers<[1], [0], [0], [1], [0, 0, 1, 1], [], []>} : vector<8x128xf32>, vector<128x384xf32>, vector<8x384xf32> -> vector<8x384xf32>
    %197 = vector.extract_strided_slice %191 {offsets = [0, 0], sizes = [8, 128], strides = [1, 1]} : vector<8x384xf32> to vector<8x128xf32>
    %198 = vector.extract_strided_slice %195 {offsets = [0, 0], sizes = [8, 128], strides = [1, 1]} : vector<8x384xf32> to vector<8x128xf32>
    %199 = arith.addf %197, %198 : vector<8x128xf32>
    %200 = arith.negf %199 : vector<8x128xf32>
    %201 = math.exp %200 : vector<8x128xf32>
    %cst_53 = arith.constant 1.000000e+00 : f32
    %202 = vector.broadcast %cst_53 : f32 to vector<8x128xf32>
    %203 = arith.addf %202, %201 : vector<8x128xf32>
    %204 = arith.divf %202, %203 : vector<8x128xf32>
    %205 = vector.extract_strided_slice %191 {offsets = [0, 128], sizes = [8, 128], strides = [1, 1]} : vector<8x384xf32> to vector<8x128xf32>
    %206 = vector.extract_strided_slice %195 {offsets = [0, 128], sizes = [8, 128], strides = [1, 1]} : vector<8x384xf32> to vector<8x128xf32>
    %207 = arith.addf %205, %206 : vector<8x128xf32>
    %208 = arith.negf %207 : vector<8x128xf32>
    %209 = math.exp %208 : vector<8x128xf32>
    %cst_54 = arith.constant 1.000000e+00 : f32
    %210 = vector.broadcast %cst_54 : f32 to vector<8x128xf32>
    %211 = arith.addf %210, %209 : vector<8x128xf32>
    %212 = arith.divf %210, %211 : vector<8x128xf32>
    %213 = vector.extract_strided_slice %191 {offsets = [0, 256], sizes = [8, 128], strides = [1, 1]} : vector<8x384xf32> to vector<8x128xf32>
    %214 = vector.extract_strided_slice %195 {offsets = [0, 256], sizes = [8, 128], strides = [1, 1]} : vector<8x384xf32> to vector<8x128xf32>
    %215 = vector.broadcast %3 : vector<1x128xf32> to vector<8x128xf32>
    %216 = arith.addf %214, %215 : vector<8x128xf32>
    %217 = arith.mulf %204, %216 : vector<8x128xf32>
    %218 = arith.addf %213, %217 : vector<8x128xf32>
    %219 = math.tanh %218 : vector<8x128xf32>
    %cst_55 = arith.constant 1.000000e+00 : f32
    %220 = vector.broadcast %cst_55 : f32 to vector<8x128xf32>
    %221 = arith.subf %220, %212 : vector<8x128xf32>
    %222 = arith.mulf %221, %219 : vector<8x128xf32>
    %223 = arith.mulf %212, %184 : vector<8x128xf32>
    %224 = arith.addf %222, %223 : vector<8x128xf32>
    %225 = vector.extract_strided_slice %194 {offsets = [0, 0], sizes = [8, 128], strides = [1, 1]} : vector<8x384xf32> to vector<8x128xf32>
    %226 = vector.extract_strided_slice %196 {offsets = [0, 0], sizes = [8, 128], strides = [1, 1]} : vector<8x384xf32> to vector<8x128xf32>
    %227 = arith.addf %225, %226 : vector<8x128xf32>
    %228 = arith.negf %227 : vector<8x128xf32>
    %229 = math.exp %228 : vector<8x128xf32>
    %cst_56 = arith.constant 1.000000e+00 : f32
    %230 = vector.broadcast %cst_56 : f32 to vector<8x128xf32>
    %231 = arith.addf %230, %229 : vector<8x128xf32>
    %232 = arith.divf %230, %231 : vector<8x128xf32>
    %233 = vector.extract_strided_slice %194 {offsets = [0, 128], sizes = [8, 128], strides = [1, 1]} : vector<8x384xf32> to vector<8x128xf32>
    %234 = vector.extract_strided_slice %196 {offsets = [0, 128], sizes = [8, 128], strides = [1, 1]} : vector<8x384xf32> to vector<8x128xf32>
    %235 = arith.addf %233, %234 : vector<8x128xf32>
    %236 = arith.negf %235 : vector<8x128xf32>
    %237 = math.exp %236 : vector<8x128xf32>
    %cst_57 = arith.constant 1.000000e+00 : f32
    %238 = vector.broadcast %cst_57 : f32 to vector<8x128xf32>
    %239 = arith.addf %238, %237 : vector<8x128xf32>
    %240 = arith.divf %238, %239 : vector<8x128xf32>
    %241 = vector.extract_strided_slice %194 {offsets = [0, 256], sizes = [8, 128], strides = [1, 1]} : vector<8x384xf32> to vector<8x128xf32>
    %242 = vector.extract_strided_slice %196 {offsets = [0, 256], sizes = [8, 128], strides = [1, 1]} : vector<8x384xf32> to vector<8x128xf32>
    %243 = vector.broadcast %4 : vector<1x128xf32> to vector<8x128xf32>
    %244 = arith.addf %242, %243 : vector<8x128xf32>
    %245 = arith.mulf %232, %244 : vector<8x128xf32>
    %246 = arith.addf %241, %245 : vector<8x128xf32>
    %247 = math.tanh %246 : vector<8x128xf32>
    %cst_58 = arith.constant 1.000000e+00 : f32
    %248 = vector.broadcast %cst_58 : f32 to vector<8x128xf32>
    %249 = arith.subf %248, %240 : vector<8x128xf32>
    %250 = arith.mulf %249, %247 : vector<8x128xf32>
    %251 = arith.mulf %240, %187 : vector<8x128xf32>
    %252 = arith.addf %250, %251 : vector<8x128xf32>
    %253 = vector.broadcast %c2_i32 : i32 to vector<8x1xi32>
    %254 = arith.cmpi slt, %253, %0 : vector<8x1xi32>
    %255 = vector.broadcast %188 : i32 to vector<8x1xi32>
    %256 = arith.cmpi slt, %255, %0 : vector<8x1xi32>
    %cst_59 = arith.constant 0.000000e+00 : f32
    %257 = vector.shape_cast %254 : vector<8x1xi1> to vector<8x1xi1>
    %258 = vector.broadcast %257 : vector<8x1xi1> to vector<8x128xi1>
    %259 = vector.broadcast %cst_59 : f32 to vector<8x128xf32>
    %260 = arith.select %258, %224, %259 : vector<8x128xi1>, vector<8x128xf32>
    %261 = arith.index_cast %c2_i32 : i32 to index
    %c0_60 = arith.constant 0 : index
    %c0_61 = arith.constant 0 : index
    %262 = vector.load %arg8[%261, %c0_60, %c0_61] : memref<8x8x128xf32, #tpu.memory_space<vmem>>, vector<1x8x128xf32>
    %263 = vector.shape_cast %262 : vector<1x8x128xf32> to vector<8x128xf32>
    %264 = vector.shape_cast %260 : vector<8x128xf32> to vector<1x8x128xf32>
    tpu.vector_store %arg8[%261, %c0_60, %c0_61], %264 {strides = array<i32>} : memref<8x8x128xf32, #tpu.memory_space<vmem>>, vector<1x8x128xf32>,
    %cst_62 = arith.constant 0.000000e+00 : f32
    %265 = vector.shape_cast %256 : vector<8x1xi1> to vector<8x1xi1>
    %266 = vector.broadcast %265 : vector<8x1xi1> to vector<8x128xi1>
    %267 = vector.broadcast %cst_62 : f32 to vector<8x128xf32>
    %268 = arith.select %266, %252, %267 : vector<8x128xi1>, vector<8x128xf32>
    %269 = arith.index_cast %188 : i32 to index
    %c0_63 = arith.constant 0 : index
    %c0_64 = arith.constant 0 : index
    %270 = vector.load %arg9[%269, %c0_63, %c0_64] : memref<8x8x128xf32, #tpu.memory_space<vmem>>, vector<1x8x128xf32>
    %271 = vector.shape_cast %270 : vector<1x8x128xf32> to vector<8x128xf32>
    %272 = vector.shape_cast %268 : vector<8x128xf32> to vector<1x8x128xf32>
    tpu.vector_store %arg9[%269, %c0_63, %c0_64], %272 {strides = array<i32>} : memref<8x8x128xf32, #tpu.memory_space<vmem>>, vector<1x8x128xf32>,
    %273 = vector.shape_cast %254 : vector<8x1xi1> to vector<8x1xi1>
    %274 = vector.broadcast %273 : vector<8x1xi1> to vector<8x128xi1>
    %275 = arith.select %274, %224, %184 : vector<8x128xi1>, vector<8x128xf32>
    %276 = vector.shape_cast %256 : vector<8x1xi1> to vector<8x1xi1>
    %277 = vector.broadcast %276 : vector<8x1xi1> to vector<8x128xi1>
    %278 = arith.select %277, %252, %187 : vector<8x128xi1>, vector<8x128xf32>
    %c3_i32 = arith.constant 3 : i32
    %c7_i32_65 = arith.constant 7 : i32
    %279 = arith.subi %c7_i32_65, %c3_i32 : i32
    %280 = arith.index_cast %c3_i32 : i32 to index
    %c0_66 = arith.constant 0 : index
    %c0_67 = arith.constant 0 : index
    %281 = vector.load %arg2[%280, %c0_66, %c0_67] : memref<8x8x384xf32, #tpu.memory_space<vmem>>, vector<1x8x384xf32>
    %282 = vector.shape_cast %281 : vector<1x8x384xf32> to vector<8x384xf32>
    %283 = arith.index_cast %279 : i32 to index
    %c0_68 = arith.constant 0 : index
    %c0_69 = arith.constant 0 : index
    %284 = vector.load %arg3[%283, %c0_68, %c0_69] : memref<8x8x384xf32, #tpu.memory_space<vmem>>, vector<1x8x384xf32>
    %285 = vector.shape_cast %284 : vector<1x8x384xf32> to vector<8x384xf32>
    %cst_70 = arith.constant dense<0.000000e+00> : vector<8x384xf32>
    %286 = tpu.matmul %275, %1, %cst_70 {dimension_numbers = #tpu.dot_dimension_numbers<[1], [0], [0], [1], [0, 0, 1, 1], [], []>} : vector<8x128xf32>, vector<128x384xf32>, vector<8x384xf32> -> vector<8x384xf32>
    %cst_71 = arith.constant dense<0.000000e+00> : vector<8x384xf32>
    %287 = tpu.matmul %278, %2, %cst_71 {dimension_numbers = #tpu.dot_dimension_numbers<[1], [0], [0], [1], [0, 0, 1, 1], [], []>} : vector<8x128xf32>, vector<128x384xf32>, vector<8x384xf32> -> vector<8x384xf32>
    %288 = vector.extract_strided_slice %282 {offsets = [0, 0], sizes = [8, 128], strides = [1, 1]} : vector<8x384xf32> to vector<8x128xf32>
    %289 = vector.extract_strided_slice %286 {offsets = [0, 0], sizes = [8, 128], strides = [1, 1]} : vector<8x384xf32> to vector<8x128xf32>
    %290 = arith.addf %288, %289 : vector<8x128xf32>
    %291 = arith.negf %290 : vector<8x128xf32>
    %292 = math.exp %291 : vector<8x128xf32>
    %cst_72 = arith.constant 1.000000e+00 : f32
    %293 = vector.broadcast %cst_72 : f32 to vector<8x128xf32>
    %294 = arith.addf %293, %292 : vector<8x128xf32>
    %295 = arith.divf %293, %294 : vector<8x128xf32>
    %296 = vector.extract_strided_slice %282 {offsets = [0, 128], sizes = [8, 128], strides = [1, 1]} : vector<8x384xf32> to vector<8x128xf32>
    %297 = vector.extract_strided_slice %286 {offsets = [0, 128], sizes = [8, 128], strides = [1, 1]} : vector<8x384xf32> to vector<8x128xf32>
    %298 = arith.addf %296, %297 : vector<8x128xf32>
    %299 = arith.negf %298 : vector<8x128xf32>
    %300 = math.exp %299 : vector<8x128xf32>
    %cst_73 = arith.constant 1.000000e+00 : f32
    %301 = vector.broadcast %cst_73 : f32 to vector<8x128xf32>
    %302 = arith.addf %301, %300 : vector<8x128xf32>
    %303 = arith.divf %301, %302 : vector<8x128xf32>
    %304 = vector.extract_strided_slice %282 {offsets = [0, 256], sizes = [8, 128], strides = [1, 1]} : vector<8x384xf32> to vector<8x128xf32>
    %305 = vector.extract_strided_slice %286 {offsets = [0, 256], sizes = [8, 128], strides = [1, 1]} : vector<8x384xf32> to vector<8x128xf32>
    %306 = vector.broadcast %3 : vector<1x128xf32> to vector<8x128xf32>
    %307 = arith.addf %305, %306 : vector<8x128xf32>
    %308 = arith.mulf %295, %307 : vector<8x128xf32>
    %309 = arith.addf %304, %308 : vector<8x128xf32>
    %310 = math.tanh %309 : vector<8x128xf32>
    %cst_74 = arith.constant 1.000000e+00 : f32
    %311 = vector.broadcast %cst_74 : f32 to vector<8x128xf32>
    %312 = arith.subf %311, %303 : vector<8x128xf32>
    %313 = arith.mulf %312, %310 : vector<8x128xf32>
    %314 = arith.mulf %303, %275 : vector<8x128xf32>
    %315 = arith.addf %313, %314 : vector<8x128xf32>
    %316 = vector.extract_strided_slice %285 {offsets = [0, 0], sizes = [8, 128], strides = [1, 1]} : vector<8x384xf32> to vector<8x128xf32>
    %317 = vector.extract_strided_slice %287 {offsets = [0, 0], sizes = [8, 128], strides = [1, 1]} : vector<8x384xf32> to vector<8x128xf32>
    %318 = arith.addf %316, %317 : vector<8x128xf32>
    %319 = arith.negf %318 : vector<8x128xf32>
    %320 = math.exp %319 : vector<8x128xf32>
    %cst_75 = arith.constant 1.000000e+00 : f32
    %321 = vector.broadcast %cst_75 : f32 to vector<8x128xf32>
    %322 = arith.addf %321, %320 : vector<8x128xf32>
    %323 = arith.divf %321, %322 : vector<8x128xf32>
    %324 = vector.extract_strided_slice %285 {offsets = [0, 128], sizes = [8, 128], strides = [1, 1]} : vector<8x384xf32> to vector<8x128xf32>
    %325 = vector.extract_strided_slice %287 {offsets = [0, 128], sizes = [8, 128], strides = [1, 1]} : vector<8x384xf32> to vector<8x128xf32>
    %326 = arith.addf %324, %325 : vector<8x128xf32>
    %327 = arith.negf %326 : vector<8x128xf32>
    %328 = math.exp %327 : vector<8x128xf32>
    %cst_76 = arith.constant 1.000000e+00 : f32
    %329 = vector.broadcast %cst_76 : f32 to vector<8x128xf32>
    %330 = arith.addf %329, %328 : vector<8x128xf32>
    %331 = arith.divf %329, %330 : vector<8x128xf32>
    %332 = vector.extract_strided_slice %285 {offsets = [0, 256], sizes = [8, 128], strides = [1, 1]} : vector<8x384xf32> to vector<8x128xf32>
    %333 = vector.extract_strided_slice %287 {offsets = [0, 256], sizes = [8, 128], strides = [1, 1]} : vector<8x384xf32> to vector<8x128xf32>
    %334 = vector.broadcast %4 : vector<1x128xf32> to vector<8x128xf32>
    %335 = arith.addf %333, %334 : vector<8x128xf32>
    %336 = arith.mulf %323, %335 : vector<8x128xf32>
    %337 = arith.addf %332, %336 : vector<8x128xf32>
    %338 = math.tanh %337 : vector<8x128xf32>
    %cst_77 = arith.constant 1.000000e+00 : f32
    %339 = vector.broadcast %cst_77 : f32 to vector<8x128xf32>
    %340 = arith.subf %339, %331 : vector<8x128xf32>
    %341 = arith.mulf %340, %338 : vector<8x128xf32>
    %342 = arith.mulf %331, %278 : vector<8x128xf32>
    %343 = arith.addf %341, %342 : vector<8x128xf32>
    %344 = vector.broadcast %c3_i32 : i32 to vector<8x1xi32>
    %345 = arith.cmpi slt, %344, %0 : vector<8x1xi32>
    %346 = vector.broadcast %279 : i32 to vector<8x1xi32>
    %347 = arith.cmpi slt, %346, %0 : vector<8x1xi32>
    %cst_78 = arith.constant 0.000000e+00 : f32
    %348 = vector.shape_cast %345 : vector<8x1xi1> to vector<8x1xi1>
    %349 = vector.broadcast %348 : vector<8x1xi1> to vector<8x128xi1>
    %350 = vector.broadcast %cst_78 : f32 to vector<8x128xf32>
    %351 = arith.select %349, %315, %350 : vector<8x128xi1>, vector<8x128xf32>
    %352 = arith.index_cast %c3_i32 : i32 to index
    %c0_79 = arith.constant 0 : index
    %c0_80 = arith.constant 0 : index
    %353 = vector.load %arg8[%352, %c0_79, %c0_80] : memref<8x8x128xf32, #tpu.memory_space<vmem>>, vector<1x8x128xf32>
    %354 = vector.shape_cast %353 : vector<1x8x128xf32> to vector<8x128xf32>
    %355 = vector.shape_cast %351 : vector<8x128xf32> to vector<1x8x128xf32>
    tpu.vector_store %arg8[%352, %c0_79, %c0_80], %355 {strides = array<i32>} : memref<8x8x128xf32, #tpu.memory_space<vmem>>, vector<1x8x128xf32>,
    %cst_81 = arith.constant 0.000000e+00 : f32
    %356 = vector.shape_cast %347 : vector<8x1xi1> to vector<8x1xi1>
    %357 = vector.broadcast %356 : vector<8x1xi1> to vector<8x128xi1>
    %358 = vector.broadcast %cst_81 : f32 to vector<8x128xf32>
    %359 = arith.select %357, %343, %358 : vector<8x128xi1>, vector<8x128xf32>
    %360 = arith.index_cast %279 : i32 to index
    %c0_82 = arith.constant 0 : index
    %c0_83 = arith.constant 0 : index
    %361 = vector.load %arg9[%360, %c0_82, %c0_83] : memref<8x8x128xf32, #tpu.memory_space<vmem>>, vector<1x8x128xf32>
    %362 = vector.shape_cast %361 : vector<1x8x128xf32> to vector<8x128xf32>
    %363 = vector.shape_cast %359 : vector<8x128xf32> to vector<1x8x128xf32>
    tpu.vector_store %arg9[%360, %c0_82, %c0_83], %363 {strides = array<i32>} : memref<8x8x128xf32, #tpu.memory_space<vmem>>, vector<1x8x128xf32>,
    %364 = vector.shape_cast %345 : vector<8x1xi1> to vector<8x1xi1>
    %365 = vector.broadcast %364 : vector<8x1xi1> to vector<8x128xi1>
    %366 = arith.select %365, %315, %275 : vector<8x128xi1>, vector<8x128xf32>
    %367 = vector.shape_cast %347 : vector<8x1xi1> to vector<8x1xi1>
    %368 = vector.broadcast %367 : vector<8x1xi1> to vector<8x128xi1>
    %369 = arith.select %368, %343, %278 : vector<8x128xi1>, vector<8x128xf32>
    %c4_i32 = arith.constant 4 : i32
    %c7_i32_84 = arith.constant 7 : i32
    %370 = arith.subi %c7_i32_84, %c4_i32 : i32
    %371 = arith.index_cast %c4_i32 : i32 to index
    %c0_85 = arith.constant 0 : index
    %c0_86 = arith.constant 0 : index
    %372 = vector.load %arg2[%371, %c0_85, %c0_86] : memref<8x8x384xf32, #tpu.memory_space<vmem>>, vector<1x8x384xf32>
    %373 = vector.shape_cast %372 : vector<1x8x384xf32> to vector<8x384xf32>
    %374 = arith.index_cast %370 : i32 to index
    %c0_87 = arith.constant 0 : index
    %c0_88 = arith.constant 0 : index
    %375 = vector.load %arg3[%374, %c0_87, %c0_88] : memref<8x8x384xf32, #tpu.memory_space<vmem>>, vector<1x8x384xf32>
    %376 = vector.shape_cast %375 : vector<1x8x384xf32> to vector<8x384xf32>
    %cst_89 = arith.constant dense<0.000000e+00> : vector<8x384xf32>
    %377 = tpu.matmul %366, %1, %cst_89 {dimension_numbers = #tpu.dot_dimension_numbers<[1], [0], [0], [1], [0, 0, 1, 1], [], []>} : vector<8x128xf32>, vector<128x384xf32>, vector<8x384xf32> -> vector<8x384xf32>
    %cst_90 = arith.constant dense<0.000000e+00> : vector<8x384xf32>
    %378 = tpu.matmul %369, %2, %cst_90 {dimension_numbers = #tpu.dot_dimension_numbers<[1], [0], [0], [1], [0, 0, 1, 1], [], []>} : vector<8x128xf32>, vector<128x384xf32>, vector<8x384xf32> -> vector<8x384xf32>
    %379 = vector.extract_strided_slice %373 {offsets = [0, 0], sizes = [8, 128], strides = [1, 1]} : vector<8x384xf32> to vector<8x128xf32>
    %380 = vector.extract_strided_slice %377 {offsets = [0, 0], sizes = [8, 128], strides = [1, 1]} : vector<8x384xf32> to vector<8x128xf32>
    %381 = arith.addf %379, %380 : vector<8x128xf32>
    %382 = arith.negf %381 : vector<8x128xf32>
    %383 = math.exp %382 : vector<8x128xf32>
    %cst_91 = arith.constant 1.000000e+00 : f32
    %384 = vector.broadcast %cst_91 : f32 to vector<8x128xf32>
    %385 = arith.addf %384, %383 : vector<8x128xf32>
    %386 = arith.divf %384, %385 : vector<8x128xf32>
    %387 = vector.extract_strided_slice %373 {offsets = [0, 128], sizes = [8, 128], strides = [1, 1]} : vector<8x384xf32> to vector<8x128xf32>
    %388 = vector.extract_strided_slice %377 {offsets = [0, 128], sizes = [8, 128], strides = [1, 1]} : vector<8x384xf32> to vector<8x128xf32>
    %389 = arith.addf %387, %388 : vector<8x128xf32>
    %390 = arith.negf %389 : vector<8x128xf32>
    %391 = math.exp %390 : vector<8x128xf32>
    %cst_92 = arith.constant 1.000000e+00 : f32
    %392 = vector.broadcast %cst_92 : f32 to vector<8x128xf32>
    %393 = arith.addf %392, %391 : vector<8x128xf32>
    %394 = arith.divf %392, %393 : vector<8x128xf32>
    %395 = vector.extract_strided_slice %373 {offsets = [0, 256], sizes = [8, 128], strides = [1, 1]} : vector<8x384xf32> to vector<8x128xf32>
    %396 = vector.extract_strided_slice %377 {offsets = [0, 256], sizes = [8, 128], strides = [1, 1]} : vector<8x384xf32> to vector<8x128xf32>
    %397 = vector.broadcast %3 : vector<1x128xf32> to vector<8x128xf32>
    %398 = arith.addf %396, %397 : vector<8x128xf32>
    %399 = arith.mulf %386, %398 : vector<8x128xf32>
    %400 = arith.addf %395, %399 : vector<8x128xf32>
    %401 = math.tanh %400 : vector<8x128xf32>
    %cst_93 = arith.constant 1.000000e+00 : f32
    %402 = vector.broadcast %cst_93 : f32 to vector<8x128xf32>
    %403 = arith.subf %402, %394 : vector<8x128xf32>
    %404 = arith.mulf %403, %401 : vector<8x128xf32>
    %405 = arith.mulf %394, %366 : vector<8x128xf32>
    %406 = arith.addf %404, %405 : vector<8x128xf32>
    %407 = vector.extract_strided_slice %376 {offsets = [0, 0], sizes = [8, 128], strides = [1, 1]} : vector<8x384xf32> to vector<8x128xf32>
    %408 = vector.extract_strided_slice %378 {offsets = [0, 0], sizes = [8, 128], strides = [1, 1]} : vector<8x384xf32> to vector<8x128xf32>
    %409 = arith.addf %407, %408 : vector<8x128xf32>
    %410 = arith.negf %409 : vector<8x128xf32>
    %411 = math.exp %410 : vector<8x128xf32>
    %cst_94 = arith.constant 1.000000e+00 : f32
    %412 = vector.broadcast %cst_94 : f32 to vector<8x128xf32>
    %413 = arith.addf %412, %411 : vector<8x128xf32>
    %414 = arith.divf %412, %413 : vector<8x128xf32>
    %415 = vector.extract_strided_slice %376 {offsets = [0, 128], sizes = [8, 128], strides = [1, 1]} : vector<8x384xf32> to vector<8x128xf32>
    %416 = vector.extract_strided_slice %378 {offsets = [0, 128], sizes = [8, 128], strides = [1, 1]} : vector<8x384xf32> to vector<8x128xf32>
    %417 = arith.addf %415, %416 : vector<8x128xf32>
    %418 = arith.negf %417 : vector<8x128xf32>
    %419 = math.exp %418 : vector<8x128xf32>
    %cst_95 = arith.constant 1.000000e+00 : f32
    %420 = vector.broadcast %cst_95 : f32 to vector<8x128xf32>
    %421 = arith.addf %420, %419 : vector<8x128xf32>
    %422 = arith.divf %420, %421 : vector<8x128xf32>
    %423 = vector.extract_strided_slice %376 {offsets = [0, 256], sizes = [8, 128], strides = [1, 1]} : vector<8x384xf32> to vector<8x128xf32>
    %424 = vector.extract_strided_slice %378 {offsets = [0, 256], sizes = [8, 128], strides = [1, 1]} : vector<8x384xf32> to vector<8x128xf32>
    %425 = vector.broadcast %4 : vector<1x128xf32> to vector<8x128xf32>
    %426 = arith.addf %424, %425 : vector<8x128xf32>
    %427 = arith.mulf %414, %426 : vector<8x128xf32>
    %428 = arith.addf %423, %427 : vector<8x128xf32>
    %429 = math.tanh %428 : vector<8x128xf32>
    %cst_96 = arith.constant 1.000000e+00 : f32
    %430 = vector.broadcast %cst_96 : f32 to vector<8x128xf32>
    %431 = arith.subf %430, %422 : vector<8x128xf32>
    %432 = arith.mulf %431, %429 : vector<8x128xf32>
    %433 = arith.mulf %422, %369 : vector<8x128xf32>
    %434 = arith.addf %432, %433 : vector<8x128xf32>
    %435 = vector.broadcast %c4_i32 : i32 to vector<8x1xi32>
    %436 = arith.cmpi slt, %435, %0 : vector<8x1xi32>
    %437 = vector.broadcast %370 : i32 to vector<8x1xi32>
    %438 = arith.cmpi slt, %437, %0 : vector<8x1xi32>
    %cst_97 = arith.constant 0.000000e+00 : f32
    %439 = vector.shape_cast %436 : vector<8x1xi1> to vector<8x1xi1>
    %440 = vector.broadcast %439 : vector<8x1xi1> to vector<8x128xi1>
    %441 = vector.broadcast %cst_97 : f32 to vector<8x128xf32>
    %442 = arith.select %440, %406, %441 : vector<8x128xi1>, vector<8x128xf32>
    %443 = arith.index_cast %c4_i32 : i32 to index
    %c0_98 = arith.constant 0 : index
    %c0_99 = arith.constant 0 : index
    %444 = vector.load %arg8[%443, %c0_98, %c0_99] : memref<8x8x128xf32, #tpu.memory_space<vmem>>, vector<1x8x128xf32>
    %445 = vector.shape_cast %444 : vector<1x8x128xf32> to vector<8x128xf32>
    %446 = vector.shape_cast %442 : vector<8x128xf32> to vector<1x8x128xf32>
    tpu.vector_store %arg8[%443, %c0_98, %c0_99], %446 {strides = array<i32>} : memref<8x8x128xf32, #tpu.memory_space<vmem>>, vector<1x8x128xf32>,
    %cst_100 = arith.constant 0.000000e+00 : f32
    %447 = vector.shape_cast %438 : vector<8x1xi1> to vector<8x1xi1>
    %448 = vector.broadcast %447 : vector<8x1xi1> to vector<8x128xi1>
    %449 = vector.broadcast %cst_100 : f32 to vector<8x128xf32>
    %450 = arith.select %448, %434, %449 : vector<8x128xi1>, vector<8x128xf32>
    %451 = arith.index_cast %370 : i32 to index
    %c0_101 = arith.constant 0 : index
    %c0_102 = arith.constant 0 : index
    %452 = vector.load %arg9[%451, %c0_101, %c0_102] : memref<8x8x128xf32, #tpu.memory_space<vmem>>, vector<1x8x128xf32>
    %453 = vector.shape_cast %452 : vector<1x8x128xf32> to vector<8x128xf32>
    %454 = vector.shape_cast %450 : vector<8x128xf32> to vector<1x8x128xf32>
    tpu.vector_store %arg9[%451, %c0_101, %c0_102], %454 {strides = array<i32>} : memref<8x8x128xf32, #tpu.memory_space<vmem>>, vector<1x8x128xf32>,
    %455 = vector.shape_cast %436 : vector<8x1xi1> to vector<8x1xi1>
    %456 = vector.broadcast %455 : vector<8x1xi1> to vector<8x128xi1>
    %457 = arith.select %456, %406, %366 : vector<8x128xi1>, vector<8x128xf32>
    %458 = vector.shape_cast %438 : vector<8x1xi1> to vector<8x1xi1>
    %459 = vector.broadcast %458 : vector<8x1xi1> to vector<8x128xi1>
    %460 = arith.select %459, %434, %369 : vector<8x128xi1>, vector<8x128xf32>
    %c5_i32 = arith.constant 5 : i32
    %c7_i32_103 = arith.constant 7 : i32
    %461 = arith.subi %c7_i32_103, %c5_i32 : i32
    %462 = arith.index_cast %c5_i32 : i32 to index
    %c0_104 = arith.constant 0 : index
    %c0_105 = arith.constant 0 : index
    %463 = vector.load %arg2[%462, %c0_104, %c0_105] : memref<8x8x384xf32, #tpu.memory_space<vmem>>, vector<1x8x384xf32>
    %464 = vector.shape_cast %463 : vector<1x8x384xf32> to vector<8x384xf32>
    %465 = arith.index_cast %461 : i32 to index
    %c0_106 = arith.constant 0 : index
    %c0_107 = arith.constant 0 : index
    %466 = vector.load %arg3[%465, %c0_106, %c0_107] : memref<8x8x384xf32, #tpu.memory_space<vmem>>, vector<1x8x384xf32>
    %467 = vector.shape_cast %466 : vector<1x8x384xf32> to vector<8x384xf32>
    %cst_108 = arith.constant dense<0.000000e+00> : vector<8x384xf32>
    %468 = tpu.matmul %457, %1, %cst_108 {dimension_numbers = #tpu.dot_dimension_numbers<[1], [0], [0], [1], [0, 0, 1, 1], [], []>} : vector<8x128xf32>, vector<128x384xf32>, vector<8x384xf32> -> vector<8x384xf32>
    %cst_109 = arith.constant dense<0.000000e+00> : vector<8x384xf32>
    %469 = tpu.matmul %460, %2, %cst_109 {dimension_numbers = #tpu.dot_dimension_numbers<[1], [0], [0], [1], [0, 0, 1, 1], [], []>} : vector<8x128xf32>, vector<128x384xf32>, vector<8x384xf32> -> vector<8x384xf32>
    %470 = vector.extract_strided_slice %464 {offsets = [0, 0], sizes = [8, 128], strides = [1, 1]} : vector<8x384xf32> to vector<8x128xf32>
    %471 = vector.extract_strided_slice %468 {offsets = [0, 0], sizes = [8, 128], strides = [1, 1]} : vector<8x384xf32> to vector<8x128xf32>
    %472 = arith.addf %470, %471 : vector<8x128xf32>
    %473 = arith.negf %472 : vector<8x128xf32>
    %474 = math.exp %473 : vector<8x128xf32>
    %cst_110 = arith.constant 1.000000e+00 : f32
    %475 = vector.broadcast %cst_110 : f32 to vector<8x128xf32>
    %476 = arith.addf %475, %474 : vector<8x128xf32>
    %477 = arith.divf %475, %476 : vector<8x128xf32>
    %478 = vector.extract_strided_slice %464 {offsets = [0, 128], sizes = [8, 128], strides = [1, 1]} : vector<8x384xf32> to vector<8x128xf32>
    %479 = vector.extract_strided_slice %468 {offsets = [0, 128], sizes = [8, 128], strides = [1, 1]} : vector<8x384xf32> to vector<8x128xf32>
    %480 = arith.addf %478, %479 : vector<8x128xf32>
    %481 = arith.negf %480 : vector<8x128xf32>
    %482 = math.exp %481 : vector<8x128xf32>
    %cst_111 = arith.constant 1.000000e+00 : f32
    %483 = vector.broadcast %cst_111 : f32 to vector<8x128xf32>
    %484 = arith.addf %483, %482 : vector<8x128xf32>
    %485 = arith.divf %483, %484 : vector<8x128xf32>
    %486 = vector.extract_strided_slice %464 {offsets = [0, 256], sizes = [8, 128], strides = [1, 1]} : vector<8x384xf32> to vector<8x128xf32>
    %487 = vector.extract_strided_slice %468 {offsets = [0, 256], sizes = [8, 128], strides = [1, 1]} : vector<8x384xf32> to vector<8x128xf32>
    %488 = vector.broadcast %3 : vector<1x128xf32> to vector<8x128xf32>
    %489 = arith.addf %487, %488 : vector<8x128xf32>
    %490 = arith.mulf %477, %489 : vector<8x128xf32>
    %491 = arith.addf %486, %490 : vector<8x128xf32>
    %492 = math.tanh %491 : vector<8x128xf32>
    %cst_112 = arith.constant 1.000000e+00 : f32
    %493 = vector.broadcast %cst_112 : f32 to vector<8x128xf32>
    %494 = arith.subf %493, %485 : vector<8x128xf32>
    %495 = arith.mulf %494, %492 : vector<8x128xf32>
    %496 = arith.mulf %485, %457 : vector<8x128xf32>
    %497 = arith.addf %495, %496 : vector<8x128xf32>
    %498 = vector.extract_strided_slice %467 {offsets = [0, 0], sizes = [8, 128], strides = [1, 1]} : vector<8x384xf32> to vector<8x128xf32>
    %499 = vector.extract_strided_slice %469 {offsets = [0, 0], sizes = [8, 128], strides = [1, 1]} : vector<8x384xf32> to vector<8x128xf32>
    %500 = arith.addf %498, %499 : vector<8x128xf32>
    %501 = arith.negf %500 : vector<8x128xf32>
    %502 = math.exp %501 : vector<8x128xf32>
    %cst_113 = arith.constant 1.000000e+00 : f32
    %503 = vector.broadcast %cst_113 : f32 to vector<8x128xf32>
    %504 = arith.addf %503, %502 : vector<8x128xf32>
    %505 = arith.divf %503, %504 : vector<8x128xf32>
    %506 = vector.extract_strided_slice %467 {offsets = [0, 128], sizes = [8, 128], strides = [1, 1]} : vector<8x384xf32> to vector<8x128xf32>
    %507 = vector.extract_strided_slice %469 {offsets = [0, 128], sizes = [8, 128], strides = [1, 1]} : vector<8x384xf32> to vector<8x128xf32>
    %508 = arith.addf %506, %507 : vector<8x128xf32>
    %509 = arith.negf %508 : vector<8x128xf32>
    %510 = math.exp %509 : vector<8x128xf32>
    %cst_114 = arith.constant 1.000000e+00 : f32
    %511 = vector.broadcast %cst_114 : f32 to vector<8x128xf32>
    %512 = arith.addf %511, %510 : vector<8x128xf32>
    %513 = arith.divf %511, %512 : vector<8x128xf32>
    %514 = vector.extract_strided_slice %467 {offsets = [0, 256], sizes = [8, 128], strides = [1, 1]} : vector<8x384xf32> to vector<8x128xf32>
    %515 = vector.extract_strided_slice %469 {offsets = [0, 256], sizes = [8, 128], strides = [1, 1]} : vector<8x384xf32> to vector<8x128xf32>
    %516 = vector.broadcast %4 : vector<1x128xf32> to vector<8x128xf32>
    %517 = arith.addf %515, %516 : vector<8x128xf32>
    %518 = arith.mulf %505, %517 : vector<8x128xf32>
    %519 = arith.addf %514, %518 : vector<8x128xf32>
    %520 = math.tanh %519 : vector<8x128xf32>
    %cst_115 = arith.constant 1.000000e+00 : f32
    %521 = vector.broadcast %cst_115 : f32 to vector<8x128xf32>
    %522 = arith.subf %521, %513 : vector<8x128xf32>
    %523 = arith.mulf %522, %520 : vector<8x128xf32>
    %524 = arith.mulf %513, %460 : vector<8x128xf32>
    %525 = arith.addf %523, %524 : vector<8x128xf32>
    %526 = vector.broadcast %c5_i32 : i32 to vector<8x1xi32>
    %527 = arith.cmpi slt, %526, %0 : vector<8x1xi32>
    %528 = vector.broadcast %461 : i32 to vector<8x1xi32>
    %529 = arith.cmpi slt, %528, %0 : vector<8x1xi32>
    %cst_116 = arith.constant 0.000000e+00 : f32
    %530 = vector.shape_cast %527 : vector<8x1xi1> to vector<8x1xi1>
    %531 = vector.broadcast %530 : vector<8x1xi1> to vector<8x128xi1>
    %532 = vector.broadcast %cst_116 : f32 to vector<8x128xf32>
    %533 = arith.select %531, %497, %532 : vector<8x128xi1>, vector<8x128xf32>
    %534 = arith.index_cast %c5_i32 : i32 to index
    %c0_117 = arith.constant 0 : index
    %c0_118 = arith.constant 0 : index
    %535 = vector.load %arg8[%534, %c0_117, %c0_118] : memref<8x8x128xf32, #tpu.memory_space<vmem>>, vector<1x8x128xf32>
    %536 = vector.shape_cast %535 : vector<1x8x128xf32> to vector<8x128xf32>
    %537 = vector.shape_cast %533 : vector<8x128xf32> to vector<1x8x128xf32>
    tpu.vector_store %arg8[%534, %c0_117, %c0_118], %537 {strides = array<i32>} : memref<8x8x128xf32, #tpu.memory_space<vmem>>, vector<1x8x128xf32>,
    %cst_119 = arith.constant 0.000000e+00 : f32
    %538 = vector.shape_cast %529 : vector<8x1xi1> to vector<8x1xi1>
    %539 = vector.broadcast %538 : vector<8x1xi1> to vector<8x128xi1>
    %540 = vector.broadcast %cst_119 : f32 to vector<8x128xf32>
    %541 = arith.select %539, %525, %540 : vector<8x128xi1>, vector<8x128xf32>
    %542 = arith.index_cast %461 : i32 to index
    %c0_120 = arith.constant 0 : index
    %c0_121 = arith.constant 0 : index
    %543 = vector.load %arg9[%542, %c0_120, %c0_121] : memref<8x8x128xf32, #tpu.memory_space<vmem>>, vector<1x8x128xf32>
    %544 = vector.shape_cast %543 : vector<1x8x128xf32> to vector<8x128xf32>
    %545 = vector.shape_cast %541 : vector<8x128xf32> to vector<1x8x128xf32>
    tpu.vector_store %arg9[%542, %c0_120, %c0_121], %545 {strides = array<i32>} : memref<8x8x128xf32, #tpu.memory_space<vmem>>, vector<1x8x128xf32>,
    %546 = vector.shape_cast %527 : vector<8x1xi1> to vector<8x1xi1>
    %547 = vector.broadcast %546 : vector<8x1xi1> to vector<8x128xi1>
    %548 = arith.select %547, %497, %457 : vector<8x128xi1>, vector<8x128xf32>
    %549 = vector.shape_cast %529 : vector<8x1xi1> to vector<8x1xi1>
    %550 = vector.broadcast %549 : vector<8x1xi1> to vector<8x128xi1>
    %551 = arith.select %550, %525, %460 : vector<8x128xi1>, vector<8x128xf32>
    %c6_i32 = arith.constant 6 : i32
    %c7_i32_122 = arith.constant 7 : i32
    %552 = arith.subi %c7_i32_122, %c6_i32 : i32
    %553 = arith.index_cast %c6_i32 : i32 to index
    %c0_123 = arith.constant 0 : index
    %c0_124 = arith.constant 0 : index
    %554 = vector.load %arg2[%553, %c0_123, %c0_124] : memref<8x8x384xf32, #tpu.memory_space<vmem>>, vector<1x8x384xf32>
    %555 = vector.shape_cast %554 : vector<1x8x384xf32> to vector<8x384xf32>
    %556 = arith.index_cast %552 : i32 to index
    %c0_125 = arith.constant 0 : index
    %c0_126 = arith.constant 0 : index
    %557 = vector.load %arg3[%556, %c0_125, %c0_126] : memref<8x8x384xf32, #tpu.memory_space<vmem>>, vector<1x8x384xf32>
    %558 = vector.shape_cast %557 : vector<1x8x384xf32> to vector<8x384xf32>
    %cst_127 = arith.constant dense<0.000000e+00> : vector<8x384xf32>
    %559 = tpu.matmul %548, %1, %cst_127 {dimension_numbers = #tpu.dot_dimension_numbers<[1], [0], [0], [1], [0, 0, 1, 1], [], []>} : vector<8x128xf32>, vector<128x384xf32>, vector<8x384xf32> -> vector<8x384xf32>
    %cst_128 = arith.constant dense<0.000000e+00> : vector<8x384xf32>
    %560 = tpu.matmul %551, %2, %cst_128 {dimension_numbers = #tpu.dot_dimension_numbers<[1], [0], [0], [1], [0, 0, 1, 1], [], []>} : vector<8x128xf32>, vector<128x384xf32>, vector<8x384xf32> -> vector<8x384xf32>
    %561 = vector.extract_strided_slice %555 {offsets = [0, 0], sizes = [8, 128], strides = [1, 1]} : vector<8x384xf32> to vector<8x128xf32>
    %562 = vector.extract_strided_slice %559 {offsets = [0, 0], sizes = [8, 128], strides = [1, 1]} : vector<8x384xf32> to vector<8x128xf32>
    %563 = arith.addf %561, %562 : vector<8x128xf32>
    %564 = arith.negf %563 : vector<8x128xf32>
    %565 = math.exp %564 : vector<8x128xf32>
    %cst_129 = arith.constant 1.000000e+00 : f32
    %566 = vector.broadcast %cst_129 : f32 to vector<8x128xf32>
    %567 = arith.addf %566, %565 : vector<8x128xf32>
    %568 = arith.divf %566, %567 : vector<8x128xf32>
    %569 = vector.extract_strided_slice %555 {offsets = [0, 128], sizes = [8, 128], strides = [1, 1]} : vector<8x384xf32> to vector<8x128xf32>
    %570 = vector.extract_strided_slice %559 {offsets = [0, 128], sizes = [8, 128], strides = [1, 1]} : vector<8x384xf32> to vector<8x128xf32>
    %571 = arith.addf %569, %570 : vector<8x128xf32>
    %572 = arith.negf %571 : vector<8x128xf32>
    %573 = math.exp %572 : vector<8x128xf32>
    %cst_130 = arith.constant 1.000000e+00 : f32
    %574 = vector.broadcast %cst_130 : f32 to vector<8x128xf32>
    %575 = arith.addf %574, %573 : vector<8x128xf32>
    %576 = arith.divf %574, %575 : vector<8x128xf32>
    %577 = vector.extract_strided_slice %555 {offsets = [0, 256], sizes = [8, 128], strides = [1, 1]} : vector<8x384xf32> to vector<8x128xf32>
    %578 = vector.extract_strided_slice %559 {offsets = [0, 256], sizes = [8, 128], strides = [1, 1]} : vector<8x384xf32> to vector<8x128xf32>
    %579 = vector.broadcast %3 : vector<1x128xf32> to vector<8x128xf32>
    %580 = arith.addf %578, %579 : vector<8x128xf32>
    %581 = arith.mulf %568, %580 : vector<8x128xf32>
    %582 = arith.addf %577, %581 : vector<8x128xf32>
    %583 = math.tanh %582 : vector<8x128xf32>
    %cst_131 = arith.constant 1.000000e+00 : f32
    %584 = vector.broadcast %cst_131 : f32 to vector<8x128xf32>
    %585 = arith.subf %584, %576 : vector<8x128xf32>
    %586 = arith.mulf %585, %583 : vector<8x128xf32>
    %587 = arith.mulf %576, %548 : vector<8x128xf32>
    %588 = arith.addf %586, %587 : vector<8x128xf32>
    %589 = vector.extract_strided_slice %558 {offsets = [0, 0], sizes = [8, 128], strides = [1, 1]} : vector<8x384xf32> to vector<8x128xf32>
    %590 = vector.extract_strided_slice %560 {offsets = [0, 0], sizes = [8, 128], strides = [1, 1]} : vector<8x384xf32> to vector<8x128xf32>
    %591 = arith.addf %589, %590 : vector<8x128xf32>
    %592 = arith.negf %591 : vector<8x128xf32>
    %593 = math.exp %592 : vector<8x128xf32>
    %cst_132 = arith.constant 1.000000e+00 : f32
    %594 = vector.broadcast %cst_132 : f32 to vector<8x128xf32>
    %595 = arith.addf %594, %593 : vector<8x128xf32>
    %596 = arith.divf %594, %595 : vector<8x128xf32>
    %597 = vector.extract_strided_slice %558 {offsets = [0, 128], sizes = [8, 128], strides = [1, 1]} : vector<8x384xf32> to vector<8x128xf32>
    %598 = vector.extract_strided_slice %560 {offsets = [0, 128], sizes = [8, 128], strides = [1, 1]} : vector<8x384xf32> to vector<8x128xf32>
    %599 = arith.addf %597, %598 : vector<8x128xf32>
    %600 = arith.negf %599 : vector<8x128xf32>
    %601 = math.exp %600 : vector<8x128xf32>
    %cst_133 = arith.constant 1.000000e+00 : f32
    %602 = vector.broadcast %cst_133 : f32 to vector<8x128xf32>
    %603 = arith.addf %602, %601 : vector<8x128xf32>
    %604 = arith.divf %602, %603 : vector<8x128xf32>
    %605 = vector.extract_strided_slice %558 {offsets = [0, 256], sizes = [8, 128], strides = [1, 1]} : vector<8x384xf32> to vector<8x128xf32>
    %606 = vector.extract_strided_slice %560 {offsets = [0, 256], sizes = [8, 128], strides = [1, 1]} : vector<8x384xf32> to vector<8x128xf32>
    %607 = vector.broadcast %4 : vector<1x128xf32> to vector<8x128xf32>
    %608 = arith.addf %606, %607 : vector<8x128xf32>
    %609 = arith.mulf %596, %608 : vector<8x128xf32>
    %610 = arith.addf %605, %609 : vector<8x128xf32>
    %611 = math.tanh %610 : vector<8x128xf32>
    %cst_134 = arith.constant 1.000000e+00 : f32
    %612 = vector.broadcast %cst_134 : f32 to vector<8x128xf32>
    %613 = arith.subf %612, %604 : vector<8x128xf32>
    %614 = arith.mulf %613, %611 : vector<8x128xf32>
    %615 = arith.mulf %604, %551 : vector<8x128xf32>
    %616 = arith.addf %614, %615 : vector<8x128xf32>
    %617 = vector.broadcast %c6_i32 : i32 to vector<8x1xi32>
    %618 = arith.cmpi slt, %617, %0 : vector<8x1xi32>
    %619 = vector.broadcast %552 : i32 to vector<8x1xi32>
    %620 = arith.cmpi slt, %619, %0 : vector<8x1xi32>
    %cst_135 = arith.constant 0.000000e+00 : f32
    %621 = vector.shape_cast %618 : vector<8x1xi1> to vector<8x1xi1>
    %622 = vector.broadcast %621 : vector<8x1xi1> to vector<8x128xi1>
    %623 = vector.broadcast %cst_135 : f32 to vector<8x128xf32>
    %624 = arith.select %622, %588, %623 : vector<8x128xi1>, vector<8x128xf32>
    %625 = arith.index_cast %c6_i32 : i32 to index
    %c0_136 = arith.constant 0 : index
    %c0_137 = arith.constant 0 : index
    %626 = vector.load %arg8[%625, %c0_136, %c0_137] : memref<8x8x128xf32, #tpu.memory_space<vmem>>, vector<1x8x128xf32>
    %627 = vector.shape_cast %626 : vector<1x8x128xf32> to vector<8x128xf32>
    %628 = vector.shape_cast %624 : vector<8x128xf32> to vector<1x8x128xf32>
    tpu.vector_store %arg8[%625, %c0_136, %c0_137], %628 {strides = array<i32>} : memref<8x8x128xf32, #tpu.memory_space<vmem>>, vector<1x8x128xf32>,
    %cst_138 = arith.constant 0.000000e+00 : f32
    %629 = vector.shape_cast %620 : vector<8x1xi1> to vector<8x1xi1>
    %630 = vector.broadcast %629 : vector<8x1xi1> to vector<8x128xi1>
    %631 = vector.broadcast %cst_138 : f32 to vector<8x128xf32>
    %632 = arith.select %630, %616, %631 : vector<8x128xi1>, vector<8x128xf32>
    %633 = arith.index_cast %552 : i32 to index
    %c0_139 = arith.constant 0 : index
    %c0_140 = arith.constant 0 : index
    %634 = vector.load %arg9[%633, %c0_139, %c0_140] : memref<8x8x128xf32, #tpu.memory_space<vmem>>, vector<1x8x128xf32>
    %635 = vector.shape_cast %634 : vector<1x8x128xf32> to vector<8x128xf32>
    %636 = vector.shape_cast %632 : vector<8x128xf32> to vector<1x8x128xf32>
    tpu.vector_store %arg9[%633, %c0_139, %c0_140], %636 {strides = array<i32>} : memref<8x8x128xf32, #tpu.memory_space<vmem>>, vector<1x8x128xf32>,
    %637 = vector.shape_cast %618 : vector<8x1xi1> to vector<8x1xi1>
    %638 = vector.broadcast %637 : vector<8x1xi1> to vector<8x128xi1>
    %639 = arith.select %638, %588, %548 : vector<8x128xi1>, vector<8x128xf32>
    %640 = vector.shape_cast %620 : vector<8x1xi1> to vector<8x1xi1>
    %641 = vector.broadcast %640 : vector<8x1xi1> to vector<8x128xi1>
    %642 = arith.select %641, %616, %551 : vector<8x128xi1>, vector<8x128xf32>
    %c7_i32_141 = arith.constant 7 : i32
    %c7_i32_142 = arith.constant 7 : i32
    %643 = arith.subi %c7_i32_142, %c7_i32_141 : i32
    %644 = arith.index_cast %c7_i32_141 : i32 to index
    %c0_143 = arith.constant 0 : index
    %c0_144 = arith.constant 0 : index
    %645 = vector.load %arg2[%644, %c0_143, %c0_144] : memref<8x8x384xf32, #tpu.memory_space<vmem>>, vector<1x8x384xf32>
    %646 = vector.shape_cast %645 : vector<1x8x384xf32> to vector<8x384xf32>
    %647 = arith.index_cast %643 : i32 to index
    %c0_145 = arith.constant 0 : index
    %c0_146 = arith.constant 0 : index
    %648 = vector.load %arg3[%647, %c0_145, %c0_146] : memref<8x8x384xf32, #tpu.memory_space<vmem>>, vector<1x8x384xf32>
    %649 = vector.shape_cast %648 : vector<1x8x384xf32> to vector<8x384xf32>
    %cst_147 = arith.constant dense<0.000000e+00> : vector<8x384xf32>
    %650 = tpu.matmul %639, %1, %cst_147 {dimension_numbers = #tpu.dot_dimension_numbers<[1], [0], [0], [1], [0, 0, 1, 1], [], []>} : vector<8x128xf32>, vector<128x384xf32>, vector<8x384xf32> -> vector<8x384xf32>
    %cst_148 = arith.constant dense<0.000000e+00> : vector<8x384xf32>
    %651 = tpu.matmul %642, %2, %cst_148 {dimension_numbers = #tpu.dot_dimension_numbers<[1], [0], [0], [1], [0, 0, 1, 1], [], []>} : vector<8x128xf32>, vector<128x384xf32>, vector<8x384xf32> -> vector<8x384xf32>
    %652 = vector.extract_strided_slice %646 {offsets = [0, 0], sizes = [8, 128], strides = [1, 1]} : vector<8x384xf32> to vector<8x128xf32>
    %653 = vector.extract_strided_slice %650 {offsets = [0, 0], sizes = [8, 128], strides = [1, 1]} : vector<8x384xf32> to vector<8x128xf32>
    %654 = arith.addf %652, %653 : vector<8x128xf32>
    %655 = arith.negf %654 : vector<8x128xf32>
    %656 = math.exp %655 : vector<8x128xf32>
    %cst_149 = arith.constant 1.000000e+00 : f32
    %657 = vector.broadcast %cst_149 : f32 to vector<8x128xf32>
    %658 = arith.addf %657, %656 : vector<8x128xf32>
    %659 = arith.divf %657, %658 : vector<8x128xf32>
    %660 = vector.extract_strided_slice %646 {offsets = [0, 128], sizes = [8, 128], strides = [1, 1]} : vector<8x384xf32> to vector<8x128xf32>
    %661 = vector.extract_strided_slice %650 {offsets = [0, 128], sizes = [8, 128], strides = [1, 1]} : vector<8x384xf32> to vector<8x128xf32>
    %662 = arith.addf %660, %661 : vector<8x128xf32>
    %663 = arith.negf %662 : vector<8x128xf32>
    %664 = math.exp %663 : vector<8x128xf32>
    %cst_150 = arith.constant 1.000000e+00 : f32
    %665 = vector.broadcast %cst_150 : f32 to vector<8x128xf32>
    %666 = arith.addf %665, %664 : vector<8x128xf32>
    %667 = arith.divf %665, %666 : vector<8x128xf32>
    %668 = vector.extract_strided_slice %646 {offsets = [0, 256], sizes = [8, 128], strides = [1, 1]} : vector<8x384xf32> to vector<8x128xf32>
    %669 = vector.extract_strided_slice %650 {offsets = [0, 256], sizes = [8, 128], strides = [1, 1]} : vector<8x384xf32> to vector<8x128xf32>
    %670 = vector.broadcast %3 : vector<1x128xf32> to vector<8x128xf32>
    %671 = arith.addf %669, %670 : vector<8x128xf32>
    %672 = arith.mulf %659, %671 : vector<8x128xf32>
    %673 = arith.addf %668, %672 : vector<8x128xf32>
    %674 = math.tanh %673 : vector<8x128xf32>
    %cst_151 = arith.constant 1.000000e+00 : f32
    %675 = vector.broadcast %cst_151 : f32 to vector<8x128xf32>
    %676 = arith.subf %675, %667 : vector<8x128xf32>
    %677 = arith.mulf %676, %674 : vector<8x128xf32>
    %678 = arith.mulf %667, %639 : vector<8x128xf32>
    %679 = arith.addf %677, %678 : vector<8x128xf32>
    %680 = vector.extract_strided_slice %649 {offsets = [0, 0], sizes = [8, 128], strides = [1, 1]} : vector<8x384xf32> to vector<8x128xf32>
    %681 = vector.extract_strided_slice %651 {offsets = [0, 0], sizes = [8, 128], strides = [1, 1]} : vector<8x384xf32> to vector<8x128xf32>
    %682 = arith.addf %680, %681 : vector<8x128xf32>
    %683 = arith.negf %682 : vector<8x128xf32>
    %684 = math.exp %683 : vector<8x128xf32>
    %cst_152 = arith.constant 1.000000e+00 : f32
    %685 = vector.broadcast %cst_152 : f32 to vector<8x128xf32>
    %686 = arith.addf %685, %684 : vector<8x128xf32>
    %687 = arith.divf %685, %686 : vector<8x128xf32>
    %688 = vector.extract_strided_slice %649 {offsets = [0, 128], sizes = [8, 128], strides = [1, 1]} : vector<8x384xf32> to vector<8x128xf32>
    %689 = vector.extract_strided_slice %651 {offsets = [0, 128], sizes = [8, 128], strides = [1, 1]} : vector<8x384xf32> to vector<8x128xf32>
    %690 = arith.addf %688, %689 : vector<8x128xf32>
    %691 = arith.negf %690 : vector<8x128xf32>
    %692 = math.exp %691 : vector<8x128xf32>
    %cst_153 = arith.constant 1.000000e+00 : f32
    %693 = vector.broadcast %cst_153 : f32 to vector<8x128xf32>
    %694 = arith.addf %693, %692 : vector<8x128xf32>
    %695 = arith.divf %693, %694 : vector<8x128xf32>
    %696 = vector.extract_strided_slice %649 {offsets = [0, 256], sizes = [8, 128], strides = [1, 1]} : vector<8x384xf32> to vector<8x128xf32>
    %697 = vector.extract_strided_slice %651 {offsets = [0, 256], sizes = [8, 128], strides = [1, 1]} : vector<8x384xf32> to vector<8x128xf32>
    %698 = vector.broadcast %4 : vector<1x128xf32> to vector<8x128xf32>
    %699 = arith.addf %697, %698 : vector<8x128xf32>
    %700 = arith.mulf %687, %699 : vector<8x128xf32>
    %701 = arith.addf %696, %700 : vector<8x128xf32>
    %702 = math.tanh %701 : vector<8x128xf32>
    %cst_154 = arith.constant 1.000000e+00 : f32
    %703 = vector.broadcast %cst_154 : f32 to vector<8x128xf32>
    %704 = arith.subf %703, %695 : vector<8x128xf32>
    %705 = arith.mulf %704, %702 : vector<8x128xf32>
    %706 = arith.mulf %695, %642 : vector<8x128xf32>
    %707 = arith.addf %705, %706 : vector<8x128xf32>
    %708 = vector.broadcast %c7_i32_141 : i32 to vector<8x1xi32>
    %709 = arith.cmpi slt, %708, %0 : vector<8x1xi32>
    %710 = vector.broadcast %643 : i32 to vector<8x1xi32>
    %711 = arith.cmpi slt, %710, %0 : vector<8x1xi32>
    %cst_155 = arith.constant 0.000000e+00 : f32
    %712 = vector.shape_cast %709 : vector<8x1xi1> to vector<8x1xi1>
    %713 = vector.broadcast %712 : vector<8x1xi1> to vector<8x128xi1>
    %714 = vector.broadcast %cst_155 : f32 to vector<8x128xf32>
    %715 = arith.select %713, %679, %714 : vector<8x128xi1>, vector<8x128xf32>
    %716 = arith.index_cast %c7_i32_141 : i32 to index
    %c0_156 = arith.constant 0 : index
    %c0_157 = arith.constant 0 : index
    %717 = vector.load %arg8[%716, %c0_156, %c0_157] : memref<8x8x128xf32, #tpu.memory_space<vmem>>, vector<1x8x128xf32>
    %718 = vector.shape_cast %717 : vector<1x8x128xf32> to vector<8x128xf32>
    %719 = vector.shape_cast %715 : vector<8x128xf32> to vector<1x8x128xf32>
    tpu.vector_store %arg8[%716, %c0_156, %c0_157], %719 {strides = array<i32>} : memref<8x8x128xf32, #tpu.memory_space<vmem>>, vector<1x8x128xf32>,
    %cst_158 = arith.constant 0.000000e+00 : f32
    %720 = vector.shape_cast %711 : vector<8x1xi1> to vector<8x1xi1>
    %721 = vector.broadcast %720 : vector<8x1xi1> to vector<8x128xi1>
    %722 = vector.broadcast %cst_158 : f32 to vector<8x128xf32>
    %723 = arith.select %721, %707, %722 : vector<8x128xi1>, vector<8x128xf32>
    %724 = arith.index_cast %643 : i32 to index
    %c0_159 = arith.constant 0 : index
    %c0_160 = arith.constant 0 : index
    %725 = vector.load %arg9[%724, %c0_159, %c0_160] : memref<8x8x128xf32, #tpu.memory_space<vmem>>, vector<1x8x128xf32>
    %726 = vector.shape_cast %725 : vector<1x8x128xf32> to vector<8x128xf32>
    %727 = vector.shape_cast %723 : vector<8x128xf32> to vector<1x8x128xf32>
    tpu.vector_store %arg9[%724, %c0_159, %c0_160], %727 {strides = array<i32>} : memref<8x8x128xf32, #tpu.memory_space<vmem>>, vector<1x8x128xf32>,
    %728 = vector.shape_cast %709 : vector<8x1xi1> to vector<8x1xi1>
    %729 = vector.broadcast %728 : vector<8x1xi1> to vector<8x128xi1>
    %730 = arith.select %729, %679, %639 : vector<8x128xi1>, vector<8x128xf32>
    %731 = vector.shape_cast %711 : vector<8x1xi1> to vector<8x1xi1>
    %732 = vector.broadcast %731 : vector<8x1xi1> to vector<8x128xi1>
    %733 = arith.select %732, %707, %642 : vector<8x128xi1>, vector<8x128xf32>
    %c8_i32 = arith.constant 8 : i32
    %c0_161 = arith.constant 0 : index
    %c0_162 = arith.constant 0 : index
    %c0_163 = arith.constant 0 : index
    %734 = vector.load %arg10[%c0_161, %c0_162, %c0_163] : memref<2x8x128xf32, #tpu.memory_space<vmem>>, vector<1x8x128xf32>
    %735 = vector.shape_cast %734 : vector<1x8x128xf32> to vector<8x128xf32>
    %736 = vector.shape_cast %730 : vector<8x128xf32> to vector<1x8x128xf32>
    tpu.vector_store %arg10[%c0_161, %c0_162, %c0_163], %736 {strides = array<i32>} : memref<2x8x128xf32, #tpu.memory_space<vmem>>, vector<1x8x128xf32>,
    %c1 = arith.constant 1 : index
    %c0_164 = arith.constant 0 : index
    %c0_165 = arith.constant 0 : index
    %737 = vector.load %arg10[%c1, %c0_164, %c0_165] : memref<2x8x128xf32, #tpu.memory_space<vmem>>, vector<1x8x128xf32>
    %738 = vector.shape_cast %737 : vector<1x8x128xf32> to vector<8x128xf32>
    %739 = vector.shape_cast %733 : vector<8x128xf32> to vector<1x8x128xf32>
    tpu.vector_store %arg10[%c1, %c0_164, %c0_165], %739 {strides = array<i32>} : memref<2x8x128xf32, #tpu.memory_space<vmem>>, vector<1x8x128xf32>,
    return
  }
  func.func @transform_0(%arg0: i32) -> (i32, i32) {
    %c0_i32 = arith.constant 0 : i32
    %c0_i32_0 = arith.constant 0 : i32
    return %arg0, %c0_i32 : i32, i32
  }
  func.func @transform_1(%arg0: i32) -> (i32, i32, i32) {
    %c0_i32 = arith.constant 0 : i32
    %c0_i32_0 = arith.constant 0 : i32
    %c0_i32_1 = arith.constant 0 : i32
    return %c0_i32, %arg0, %c0_i32_0 : i32, i32, i32
  }
  func.func @transform_2(%arg0: i32) -> (i32, i32, i32) {
    %c0_i32 = arith.constant 0 : i32
    %c0_i32_0 = arith.constant 0 : i32
    %c0_i32_1 = arith.constant 0 : i32
    return %c0_i32, %arg0, %c0_i32_0 : i32, i32, i32
  }
  func.func @transform_3(%arg0: i32) -> (i32, i32) {
    %c0_i32 = arith.constant 0 : i32
    %c0_i32_0 = arith.constant 0 : i32
    %c0_i32_1 = arith.constant 0 : i32
    return %c0_i32, %c0_i32_0 : i32, i32
  }
  func.func @transform_4(%arg0: i32) -> (i32, i32) {
    %c0_i32 = arith.constant 0 : i32
    %c0_i32_0 = arith.constant 0 : i32
    %c0_i32_1 = arith.constant 0 : i32
    return %c0_i32, %c0_i32_0 : i32, i32
  }
  func.func @transform_5(%arg0: i32) -> (i32, i32) {
    %c0_i32 = arith.constant 0 : i32
    %c0_i32_0 = arith.constant 0 : i32
    %c0_i32_1 = arith.constant 0 : i32
    return %c0_i32, %c0_i32_0 : i32, i32
  }
  func.func @transform_6(%arg0: i32) -> (i32, i32) {
    %c0_i32 = arith.constant 0 : i32
    %c0_i32_0 = arith.constant 0 : i32
    %c0_i32_1 = arith.constant 0 : i32
    return %c0_i32, %c0_i32_0 : i32, i32
  }
  func.func @transform_7(%arg0: i32) -> (i32, i32, i32) {
    %c0_i32 = arith.constant 0 : i32
    %c0_i32_0 = arith.constant 0 : i32
    %c0_i32_1 = arith.constant 0 : i32
    return %c0_i32, %arg0, %c0_i32_0 : i32, i32, i32
  }
  func.func @transform_8(%arg0: i32) -> (i32, i32, i32) {
    %c0_i32 = arith.constant 0 : i32
    %c0_i32_0 = arith.constant 0 : i32
    %c0_i32_1 = arith.constant 0 : i32
    return %c0_i32, %arg0, %c0_i32_0 : i32, i32, i32
  }
  func.func @transform_9(%arg0: i32) -> (i32, i32, i32) {
    %c0_i32 = arith.constant 0 : i32
    %c0_i32_0 = arith.constant 0 : i32
    %c0_i32_1 = arith.constant 0 : i32
    return %c0_i32, %arg0, %c0_i32_0 : i32, i32, i32
  }
}

</mosaic_0001>

<llo_original>
// kernel: tpu_custom_call.1
$region0: #{tpu_custom_call.1}
  #allocation0 [shape = 'u32[]', space=smem, size = 0x4, offset = 0x4, fixed_abs, tag = 'smem constant byte address 0x4 - core index']
  #allocation1 [shape = 'u32[144,128]{1,0:T(1,128)}', space=vmem, size = 0x12000, scoped, tag = 'internal scratch']
  %s0 = inlined_call_operand.vmem [shape: s32[8,1], index: 0, kind: input, shape index: {}]
  %s1 = inlined_call_operand.hbm [shape: f32[8,8,384], index: 1, kind: input, shape index: {}]
  %s2 = inlined_call_operand.hbm [shape: f32[8,8,384], index: 2, kind: input, shape index: {}]
  %s3 = inlined_call_operand.hbm [shape: f32[128,384], index: 3, kind: input, shape index: {}]
  %s4 = inlined_call_operand.hbm [shape: f32[128,384], index: 4, kind: input, shape index: {}]
  %s5 = inlined_call_operand.vmem [shape: f32[1,128], index: 5, kind: input, shape index: {}]
  %s6 = inlined_call_operand.vmem [shape: f32[1,128], index: 6, kind: input, shape index: {}]
  %s7 = inlined_call_operand.hbm [shape: f32[8,8,128], index: 7, kind: output, shape index: {0}]
  %s8 = inlined_call_operand.hbm [shape: f32[8,8,128], index: 8, kind: output, shape index: {1}]
  %s9 = inlined_call_operand.hbm [shape: f32[2,8,128], index: 9, kind: output, shape index: {2}]
  %10 = xla_tuple %s7, %s8, %s9
  %s11 = sld [smem:[#allocation0]]
  $region70: #{tpu_custom_call.1} parent=0
    _
  %s13 = ssub.s32 1, %s11
  %s14 = scalar_select 0, %s13, %s11
  $region1: #{tpu_custom_call.1} parent=0
    #allocation2 [shape = 'u8[98304]{0}', space=vmem, size = 0x18000, scoped, tag = 'input window, operand 1, single buffered']
    #allocation3 [shape = 's32[1]{0}', space=sflag, size = 0x4, scoped, tag = 'scoped memory for tpu_custom_call.1']
    #allocation4 [shape = 's32[1]{0}', space=sflag, size = 0x4, scoped, tag = 'scoped memory for tpu_custom_call.1']
    #allocation5 [shape = 'u8[98304]{0}', space=vmem, size = 0x18000, scoped, tag = 'input window, operand 2, single buffered']
    #allocation6 [shape = 's32[1]{0}', space=sflag, size = 0x4, scoped, tag = 'scoped memory for tpu_custom_call.1']
    #allocation7 [shape = 'u8[196608]{0}', space=vmem, size = 0x30000, scoped, tag = 'input window, operand 3, single buffered']
    #allocation8 [shape = 'u8[196608]{0}', space=vmem, size = 0x30000, scoped, tag = 'input window, operand 4, single buffered']
    #allocation9 [shape = 's32[1]{0}', space=sflag, size = 0x4, scoped, tag = 'scoped memory for tpu_custom_call.1']
    #allocation10 [shape = 'u8[32768]{0}', space=vmem, size = 0x8000, scoped, tag = 'output window, operand 0, single buffered']
    #allocation11 [shape = 'u8[32768]{0}', space=vmem, size = 0x8000, scoped, tag = 'output window, operand 1, single buffered']
    #allocation12 [shape = 's32[1]{0}', space=sflag, size = 0x4, scoped, tag = 'scoped memory for tpu_custom_call.1']
    #allocation13 [shape = 'u8[8192]{0}', space=vmem, size = 0x2000, scoped, tag = 'output window, operand 2, single buffered']
    %15 = vsyncpa [#allocation3], 0
    %16 = vsyncpa [#allocation6], 0
    %17 = vsyncpa [#allocation9], 0
    %18 = vsyncpa [#allocation4], 0
    %19 = vsyncpa [#allocation12], 0
    // Predicated region
    $region2: #{tpu_custom_call.1} parent=1 // pred_check
      _
    $region3: #{tpu_custom_call.1} parent=1 // pred_check_branch
      %21 = sbr.rel (0) target = $region5
    $region4: #{tpu_custom_call.1} parent=1 // pred_region
      _
    $region5: #{tpu_custom_call.1} parent=1 // pred_fallthru
      _
    // Predicated region
    $region6: #{tpu_custom_call.1} parent=1 // pred_check
      _
    $region7: #{tpu_custom_call.1} parent=1 // pred_check_branch
      %23 = sbr.rel (0) target = $region9
    $region8: #{tpu_custom_call.1} parent=1 // pred_region
      %s25 = ssub.s32 3072, 3072
      %26 = vsyncadd [#allocation3], %s25
      %s27 = sshll.u32 [#allocation2], 4
      %s28 = int_to_ptr.vmem [resolvable:$true] %s27
      %33 = dma.hbm_to_vmem [thread:$0]  %s1, 3072, %s28, [#allocation3], 384, 384, 24
    $region9: #{tpu_custom_call.1} parent=1 // pred_fallthru
      _
    // Predicated region
    $region10: #{tpu_custom_call.1} parent=1 // pred_check
      _
    $region11: #{tpu_custom_call.1} parent=1 // pred_check_branch
      %35 = sbr.rel (0) target = $region13
    $region12: #{tpu_custom_call.1} parent=1 // pred_region
      %s37 = ssub.s32 3072, 3072
      %38 = vsyncadd [#allocation6], %s37
      %s39 = sshll.u32 [#allocation5], 4
      %s40 = int_to_ptr.vmem [resolvable:$true] %s39
      %45 = dma.hbm_to_vmem [thread:$0]  %s2, 3072, %s40, [#allocation6], 384, 384, 24
    $region13: #{tpu_custom_call.1} parent=1 // pred_fallthru
      _
    // Predicated region
    $region14: #{tpu_custom_call.1} parent=1 // pred_check
      _
    $region15: #{tpu_custom_call.1} parent=1 // pred_check_branch
      %47 = sbr.rel (0) target = $region17
    $region16: #{tpu_custom_call.1} parent=1 // pred_region
      %s49 = ssub.s32 6144, 6144
      %50 = vsyncadd [#allocation6], %s49
      %s51 = sshll.u32 [#allocation7], 4
      %s52 = int_to_ptr.vmem [resolvable:$true] %s51
      %57 = dma.hbm_to_vmem [thread:$0]  %s3, 6144, %s52, [#allocation6], 384, 384, 24
    $region17: #{tpu_custom_call.1} parent=1 // pred_fallthru
      _
    // Predicated region
    $region18: #{tpu_custom_call.1} parent=1 // pred_check
      _
    $region19: #{tpu_custom_call.1} parent=1 // pred_check_branch
      %59 = sbr.rel (0) target = $region21
    $region20: #{tpu_custom_call.1} parent=1 // pred_region
      %s61 = ssub.s32 6144, 6144
      %62 = vsyncadd [#allocation9], %s61
      %s63 = sshll.u32 [#allocation8], 4
      %s64 = int_to_ptr.vmem [resolvable:$true] %s63
      %69 = dma.hbm_to_vmem [thread:$0]  %s4, 6144, %s64, [#allocation9], 384, 384, 24
    $region21: #{tpu_custom_call.1} parent=1 // pred_fallthru
      _
    // Predicated region
    $region22: #{tpu_custom_call.1} parent=1 // pred_check
      _
    $region23: #{tpu_custom_call.1} parent=1 // pred_check_branch
      %71 = sbr.rel (0) target = $region25
    $region24: #{tpu_custom_call.1} parent=1 // pred_region
      _
    $region25: #{tpu_custom_call.1} parent=1 // pred_fallthru
      _
    // Predicated region
    $region26: #{tpu_custom_call.1} parent=1 // pred_check
      _
    $region27: #{tpu_custom_call.1} parent=1 // pred_check_branch
      %73 = sbr.rel (0) target = $region29
    $region28: #{tpu_custom_call.1} parent=1 // pred_region
      _
    $region29: #{tpu_custom_call.1} parent=1 // pred_fallthru
      _
    // Predicated region
    $region30: #{tpu_custom_call.1} parent=1 // pred_check
      _
    $region31: #{tpu_custom_call.1} parent=1 // pred_check_branch
      %75 = sbr.rel (0) target = $region33
    $region32: #{tpu_custom_call.1} parent=1 // pred_region
      %76 = dma.done [#allocation3], 3072
    $region33: #{tpu_custom_call.1} parent=1 // pred_fallthru
      _
    // Predicated region
    $region34: #{tpu_custom_call.1} parent=1 // pred_check
      _
    $region35: #{tpu_custom_call.1} parent=1 // pred_check_branch
      %78 = sbr.rel (0) target = $region37
    $region36: #{tpu_custom_call.1} parent=1 // pred_region
      %79 = dma.done [#allocation6], 3072
    $region37: #{tpu_custom_call.1} parent=1 // pred_fallthru
      _
    // Predicated region
    $region38: #{tpu_custom_call.1} parent=1 // pred_check
      _
    $region39: #{tpu_custom_call.1} parent=1 // pred_check_branch
      %81 = sbr.rel (0) target = $region41
    $region40: #{tpu_custom_call.1} parent=1 // pred_region
      %82 = dma.done [#allocation6], 6144
    $region41: #{tpu_custom_call.1} parent=1 // pred_fallthru
      _
    // Predicated region
    $region42: #{tpu_custom_call.1} parent=1 // pred_check
      _
    $region43: #{tpu_custom_call.1} parent=1 // pred_check_branch
      %84 = sbr.rel (0) target = $region45
    $region44: #{tpu_custom_call.1} parent=1 // pred_region
      %85 = dma.done [#allocation9], 6144
    $region45: #{tpu_custom_call.1} parent=1 // pred_fallthru
      _
    %v86 = vld [vmem:[%s0] sm:$0xff]
    %v87 = vld [vmem:[#allocation7] sm:$0xff]
    %v88 = vld [vmem:[#allocation7 + $0x8] sm:$0xff]
    %v89 = vld [vmem:[#allocation7 + $0x10] sm:$0xff]
    %v90 = vld [vmem:[#allocation7 + $0x18] sm:$0xff]
    %v91 = vld [vmem:[#allocation7 + $0x20] sm:$0xff]
    %v92 = vld [vmem:[#allocation7 + $0x28] sm:$0xff]
    %v93 = vld [vmem:[#allocation7 + $0x30] sm:$0xff]
    %v94 = vld [vmem:[#allocation7 + $0x38] sm:$0xff]
    %v95 = vld [vmem:[#allocation7 + $0x40] sm:$0xff]
    %v96 = vld [vmem:[#allocation7 + $0x48] sm:$0xff]
    %v97 = vld [vmem:[#allocation7 + $0x50] sm:$0xff]
    %v98 = vld [vmem:[#allocation7 + $0x58] sm:$0xff]
    %v99 = vld [vmem:[#allocation7 + $0x60] sm:$0xff]
    %v100 = vld [vmem:[#allocation7 + $0x68] sm:$0xff]
    %v101 = vld [vmem:[#allocation7 + $0x70] sm:$0xff]
    %v102 = vld [vmem:[#allocation7 + $0x78] sm:$0xff]
    %v103 = vld [vmem:[#allocation7 + $0x80] sm:$0xff]
    %v104 = vld [vmem:[#allocation7 + $0x88] sm:$0xff]
    %v105 = vld [vmem:[#allocation7 + $0x90] sm:$0xff]
    %v106 = vld [vmem:[#allocation7 + $0x98] sm:$0xff]
    %v107 = vld [vmem:[#allocation7 + $0xa0] sm:$0xff]
    %v108 = vld [vmem:[#allocation7 + $0xa8] sm:$0xff]
    %v109 = vld [vmem:[#allocation7 + $0xb0] sm:$0xff]
    %v110 = vld [vmem:[#allocation7 + $0xb8] sm:$0xff]
    %v111 = vld [vmem:[#allocation7 + $0xc0] sm:$0xff]
    %v112 = vld [vmem:[#allocation7 + $0xc8] sm:$0xff]
    %v113 = vld [vmem:[#allocation7 + $0xd0] sm:$0xff]
    %v114 = vld [vmem:[#allocation7 + $0xd8] sm:$0xff]
    %v115 = vld [vmem:[#allocation7 + $0xe0] sm:$0xff]
    %v116 = vld [vmem:[#allocation7 + $0xe8] sm:$0xff]
    %v117 = vld [vmem:[#allocation7 + $0xf0] sm:$0xff]
    %v118 = vld [vmem:[#allocation7 + $0xf8] sm:$0xff]
    %v119 = vld [vmem:[#allocation7 + $0x100] sm:$0xff]
    %v120 = vld [vmem:[#allocation7 + $0x108] sm:$0xff]
    %v121 = vld [vmem:[#allocation7 + $0x110] sm:$0xff]
    %v122 = vld [vmem:[#allocation7 + $0x118] sm:$0xff]
    %v123 = vld [vmem:[#allocation7 + $0x120] sm:$0xff]
    %v124 = vld [vmem:[#allocation7 + $0x128] sm:$0xff]
    %v125 = vld [vmem:[#allocation7 + $0x130] sm:$0xff]
    %v126 = vld [vmem:[#allocation7 + $0x138] sm:$0xff]
    %v127 = vld [vmem:[#allocation7 + $0x140] sm:$0xff]
    %v128 = vld [vmem:[#allocation7 + $0x148] sm:$0xff]
    %v129 = vld [vmem:[#allocation7 + $0x150] sm:$0xff]
    %v130 = vld [vmem:[#allocation7 + $0x158] sm:$0xff]
    %v131 = vld [vmem:[#allocation7 + $0x160] sm:$0xff]
    %v132 = vld [vmem:[#allocation7 + $0x168] sm:$0xff]
    %v133 = vld [vmem:[#allocation7 + $0x170] sm:$0xff]
    %v134 = vld [vmem:[#allocation7 + $0x178] sm:$0xff]
    %v135 = vld [vmem:[#allocation8] sm:$0xff]
    %v136 = vld [vmem:[#allocation8 + $0x8] sm:$0xff]
    %v137 = vld [vmem:[#allocation8 + $0x10] sm:$0xff]
    %v138 = vld [vmem:[#allocation8 + $0x18] sm:$0xff]
    %v139 = vld [vmem:[#allocation8 + $0x20] sm:$0xff]
    %v140 = vld [vmem:[#allocation8 + $0x28] sm:$0xff]
    %v141 = vld [vmem:[#allocation8 + $0x30] sm:$0xff]
    %v142 = vld [vmem:[#allocation8 + $0x38] sm:$0xff]
    %v143 = vld [vmem:[#allocation8 + $0x40] sm:$0xff]
    %v144 = vld [vmem:[#allocation8 + $0x48] sm:$0xff]
    %v145 = vld [vmem:[#allocation8 + $0x50] sm:$0xff]
    %v146 = vld [vmem:[#allocation8 + $0x58] sm:$0xff]
    %v147 = vld [vmem:[#allocation8 + $0x60] sm:$0xff]
    %v148 = vld [vmem:[#allocation8 + $0x68] sm:$0xff]
    %v149 = vld [vmem:[#allocation8 + $0x70] sm:$0xff]
    %v150 = vld [vmem:[#allocation8 + $0x78] sm:$0xff]
    %v151 = vld [vmem:[#allocation8 + $0x80] sm:$0xff]
    %v152 = vld [vmem:[#allocation8 + $0x88] sm:$0xff]
    %v153 = vld [vmem:[#allocation8 + $0x90] sm:$0xff]
    %v154 = vld [vmem:[#allocation8 + $0x98] sm:$0xff]
    %v155 = vld [vmem:[#allocation8 + $0xa0] sm:$0xff]
    %v156 = vld [vmem:[#allocation8 + $0xa8] sm:$0xff]
    %v157 = vld [vmem:[#allocation8 + $0xb0] sm:$0xff]
    %v158 = vld [vmem:[#allocation8 + $0xb8] sm:$0xff]
    %v159 = vld [vmem:[#allocation8 + $0xc0] sm:$0xff]
    %v160 = vld [vmem:[#allocation8 + $0xc8] sm:$0xff]
    %v161 = vld [vmem:[#allocation8 + $0xd0] sm:$0xff]
    %v162 = vld [vmem:[#allocation8 + $0xd8] sm:$0xff]
    %v163 = vld [vmem:[#allocation8 + $0xe0] sm:$0xff]
    %v164 = vld [vmem:[#allocation8 + $0xe8] sm:$0xff]
    %v165 = vld [vmem:[#allocation8 + $0xf0] sm:$0xff]
    %v166 = vld [vmem:[#allocation8 + $0xf8] sm:$0xff]
    %v167 = vld [vmem:[#allocation8 + $0x100] sm:$0xff]
    %v168 = vld [vmem:[#allocation8 + $0x108] sm:$0xff]
    %v169 = vld [vmem:[#allocation8 + $0x110] sm:$0xff]
    %v170 = vld [vmem:[#allocation8 + $0x118] sm:$0xff]
    %v171 = vld [vmem:[#allocation8 + $0x120] sm:$0xff]
    %v172 = vld [vmem:[#allocation8 + $0x128] sm:$0xff]
    %v173 = vld [vmem:[#allocation8 + $0x130] sm:$0xff]
    %v174 = vld [vmem:[#allocation8 + $0x138] sm:$0xff]
    %v175 = vld [vmem:[#allocation8 + $0x140] sm:$0xff]
    %v176 = vld [vmem:[#allocation8 + $0x148] sm:$0xff]
    %v177 = vld [vmem:[#allocation8 + $0x150] sm:$0xff]
    %v178 = vld [vmem:[#allocation8 + $0x158] sm:$0xff]
    %v179 = vld [vmem:[#allocation8 + $0x160] sm:$0xff]
    %v180 = vld [vmem:[#allocation8 + $0x168] sm:$0xff]
    %v181 = vld [vmem:[#allocation8 + $0x170] sm:$0xff]
    %v182 = vld [vmem:[#allocation8 + $0x178] sm:$0xff]
    %v183 = vld [vmem:[%s5] sm:$0x1]
    %v184 = vld [vmem:[%s6] sm:$0x1]
    %v185 = vld [vmem:[#allocation2] sm:$0xff]
    %v186 = vld [vmem:[#allocation2 + $0x8] sm:$0xff]
    %v187 = vld [vmem:[#allocation2 + $0x10] sm:$0xff]
    %s188 = scalar_lea.vmem [#allocation5], 168
    %v189 = vld [vmem:[%s188] sm:$0xff]
    %v190 = vld [vmem:[%s188 + $0x8] sm:$0xff]
    %v191 = vld [vmem:[%s188 + $0x10] sm:$0xff]
    %192 = vmatprep.subr.mxu0 %v133
    %193 = vmatpush1.msra.mxu0 %v132
    %194 = vmatprep.subr.mxu0 %v130
    %195 = vmatpush1.msra.mxu0 %v129
    %196 = vmatprep.subr.mxu0 %v127
    %197 = vmatpush1.msra.mxu0 %v126
    %198 = vmatprep.subr.mxu0 %v124
    %199 = vmatpush1.msra.mxu0 %v123
    %200 = vmatprep.subr.mxu0 %v121
    %201 = vmatpush1.msra.mxu0 %v120
    %202 = vmatprep.subr.mxu0 %v118
    %203 = vmatpush1.msra.mxu0 %v117
    %204 = vmatprep.subr.mxu0 %v115
    %205 = vmatpush1.msra.mxu0 %v114
    %206 = vmatprep.subr.mxu0 %v112
    %207 = vmatpush1.msra.mxu0 %v111
    %208 = vmatprep.subr.mxu0 %v109
    %209 = vmatpush1.msra.mxu0 %v108
    %210 = vmatprep.subr.mxu0 %v106
    %211 = vmatpush1.msra.mxu0 %v105
    %212 = vmatprep.subr.mxu0 %v103
    %213 = vmatpush1.msra.mxu0 %v102
    %214 = vmatprep.subr.mxu0 %v100
    %215 = vmatpush1.msra.mxu0 %v99
    %216 = vmatprep.subr.mxu0 %v97
    %217 = vmatpush1.msra.mxu0 %v96
    %218 = vmatprep.subr.mxu0 %v94
    %219 = vmatpush1.msra.mxu0 %v93
    %220 = vmatprep.subr.mxu0 %v91
    %221 = vmatpush1.msra.mxu0 %v90
    %222 = vmatprep.subr.mxu0 %v88
    %223 = vmatpush1.msra.mxu0 %v87
    %224 = vmatprep.subr.mxu0 0.0
    %225 = vmatpush2.msra.mxu0 0.0
    %226 = vmatprep.subr.mxu0 0.0
    %227 = vmatpush2.msra.mxu0 0.0
    %228 = vmatprep.subr.mxu0 0.0
    %229 = vmatpush2.msra.mxu0 0.0
    %230 = vmatprep.subr.mxu0 0.0
    %231 = vmatpush2.msra.mxu0 0.0
    %232 = vmatprep.subr.mxu0 0.0
    %233 = vmatpush2.msra.mxu0 0.0
    %234 = vmatprep.subr.mxu0 0.0
    %235 = vmatpush2.msra.mxu0 0.0
    %236 = vmatprep.subr.mxu0 0.0
    %237 = vmatpush2.msra.mxu0 0.0
    %238 = vmatprep.subr.mxu0 0.0
    %239 = vmatpush2.msra.mxu0 0.0
    %240 = vmatprep.subr.mxu0 0.0
    %241 = vmatpush2.msra.mxu0 0.0
    %242 = vmatprep.subr.mxu0 0.0
    %243 = vmatpush2.msra.mxu0 0.0
    %244 = vmatprep.subr.mxu0 0.0
    %245 = vmatpush2.msra.mxu0 0.0
    %246 = vmatprep.subr.mxu0 0.0
    %247 = vmatpush2.msra.mxu0 0.0
    %248 = vmatprep.subr.mxu0 0.0
    %249 = vmatpush2.msra.mxu0 0.0
    %250 = vmatprep.subr.mxu0 0.0
    %251 = vmatpush2.msra.mxu0 0.0
    %252 = vmatprep.subr.mxu0 0.0
    %253 = vmatpush2.msra.mxu0 0.0
    %254 = vmatprep.subr.mxu0 0.0
    %255 = vmatpush2.msra.mxu0 0.0
    %256 = vmatprep.mubr.f32.mxu0 0.0
    %257 = vmatmul.mubr.f32.gmra.mxu0 0.0
    %v258 = vpop.f32.mrf.mxu0
    %v259 = vadd.f32 0.0, %v258
    %v260 = vpop.f32.mrf.mxu0
    %v261 = vadd.f32 0.0, %v260
    %262 = vdwg.mxu0
    %263 = vmatprep.subr.mxu0 0.0
    %264 = vmatpush1.msra.mxu0 %v134
    %265 = vmatprep.subr.mxu0 0.0
    %266 = vmatpush1.msra.mxu0 %v131
    %267 = vmatprep.subr.mxu0 0.0
    %268 = vmatpush1.msra.mxu0 %v128
    %269 = vmatprep.subr.mxu0 0.0
    %270 = vmatpush1.msra.mxu0 %v125
    %271 = vmatprep.subr.mxu0 0.0
    %272 = vmatpush1.msra.mxu0 %v122
    %273 = vmatprep.subr.mxu0 0.0
    %274 = vmatpush1.msra.mxu0 %v119
    %275 = vmatprep.subr.mxu0 0.0
    %276 = vmatpush1.msra.mxu0 %v116
    %277 = vmatprep.subr.mxu0 0.0
    %278 = vmatpush1.msra.mxu0 %v113
    %279 = vmatprep.subr.mxu0 0.0
    %280 = vmatpush1.msra.mxu0 %v110
    %281 = vmatprep.subr.mxu0 0.0
    %282 = vmatpush1.msra.mxu0 %v107
    %283 = vmatprep.subr.mxu0 0.0
    %284 = vmatpush1.msra.mxu0 %v104
    %285 = vmatprep.subr.mxu0 0.0
    %286 = vmatpush1.msra.mxu0 %v101
    %287 = vmatprep.subr.mxu0 0.0
    %288 = vmatpush1.msra.mxu0 %v98
    %289 = vmatprep.subr.mxu0 0.0
    %290 = vmatpush1.msra.mxu0 %v95
    %291 = vmatprep.subr.mxu0 0.0
    %292 = vmatpush1.msra.mxu0 %v92
    %293 = vmatprep.subr.mxu0 0.0
    %294 = vmatpush1.msra.mxu0 %v89
    %295 = vmatprep.subr.mxu0 0.0
    %296 = vmatpush2.msra.mxu0 0.0
    %297 = vmatprep.subr.mxu0 0.0
    %298 = vmatpush2.msra.mxu0 0.0
    %299 = vmatprep.subr.mxu0 0.0
    %300 = vmatpush2.msra.mxu0 0.0
    %301 = vmatprep.subr.mxu0 0.0
    %302 = vmatpush2.msra.mxu0 0.0
    %303 = vmatprep.subr.mxu0 0.0
    %304 = vmatpush2.msra.mxu0 0.0
    %305 = vmatprep.subr.mxu0 0.0
    %306 = vmatpush2.msra.mxu0 0.0
    %307 = vmatprep.subr.mxu0 0.0
    %308 = vmatpush2.msra.mxu0 0.0
    %309 = vmatprep.subr.mxu0 0.0
    %310 = vmatpush2.msra.mxu0 0.0
    %311 = vmatprep.subr.mxu0 0.0
    %312 = vmatpush2.msra.mxu0 0.0
    %313 = vmatprep.subr.mxu0 0.0
    %314 = vmatpush2.msra.mxu0 0.0
    %315 = vmatprep.subr.mxu0 0.0
    %316 = vmatpush2.msra.mxu0 0.0
    %317 = vmatprep.subr.mxu0 0.0
    %318 = vmatpush2.msra.mxu0 0.0
    %319 = vmatprep.subr.mxu0 0.0
    %320 = vmatpush2.msra.mxu0 0.0
    %321 = vmatprep.subr.mxu0 0.0
    %322 = vmatpush2.msra.mxu0 0.0
    %323 = vmatprep.subr.mxu0 0.0
    %324 = vmatpush2.msra.mxu0 0.0
    %325 = vmatprep.subr.mxu0 0.0
    %326 = vmatpush2.msra.mxu0 0.0
    %327 = vmatprep.mubr.f32.mxu0 0.0
    %328 = vmatmul.mubr.f32.gmra.mxu0 0.0
    %v329 = vpop.f32.mrf.mxu0
    %v330 = vadd.f32 0.0, %v329
    %v331 = vpop.f32.mrf.mxu0
    %332 = vdwg.mxu0
    %333 = vmatprep.subr.mxu0 %v181
    %334 = vmatpush1.msra.mxu0 %v180
    %335 = vmatprep.subr.mxu0 %v178
    %336 = vmatpush1.msra.mxu0 %v177
    %337 = vmatprep.subr.mxu0 %v175
    %338 = vmatpush1.msra.mxu0 %v174
    %339 = vmatprep.subr.mxu0 %v172
    %340 = vmatpush1.msra.mxu0 %v171
    %341 = vmatprep.subr.mxu0 %v169
    %342 = vmatpush1.msra.mxu0 %v168
    %343 = vmatprep.subr.mxu0 %v166
    %344 = vmatpush1.msra.mxu0 %v165
    %345 = vmatprep.subr.mxu0 %v163
    %346 = vmatpush1.msra.mxu0 %v162
    %347 = vmatprep.subr.mxu0 %v160
    %348 = vmatpush1.msra.mxu0 %v159
    %349 = vmatprep.subr.mxu0 %v157
    %350 = vmatpush1.msra.mxu0 %v156
    %351 = vmatprep.subr.mxu0 %v154
    %352 = vmatpush1.msra.mxu0 %v153
    %353 = vmatprep.subr.mxu0 %v151
    %354 = vmatpush1.msra.mxu0 %v150
    %355 = vmatprep.subr.mxu0 %v148
    %356 = vmatpush1.msra.mxu0 %v147
    %357 = vmatprep.subr.mxu0 %v145
    %358 = vmatpush1.msra.mxu0 %v144
    %359 = vmatprep.subr.mxu0 %v142
    %360 = vmatpush1.msra.mxu0 %v141
    %361 = vmatprep.subr.mxu0 %v139
    %362 = vmatpush1.msra.mxu0 %v138
    %363 = vmatprep.subr.mxu0 %v136
    %364 = vmatpush1.msra.mxu0 %v135
    %365 = vmatprep.subr.mxu0 0.0
    %366 = vmatpush2.msra.mxu0 0.0
    %367 = vmatprep.subr.mxu0 0.0
    %368 = vmatpush2.msra.mxu0 0.0
    %369 = vmatprep.subr.mxu0 0.0
    %370 = vmatpush2.msra.mxu0 0.0
    %371 = vmatprep.subr.mxu0 0.0
    %372 = vmatpush2.msra.mxu0 0.0
    %373 = vmatprep.subr.mxu0 0.0
    %374 = vmatpush2.msra.mxu0 0.0
    %375 = vmatprep.subr.mxu0 0.0
    %376 = vmatpush2.msra.mxu0 0.0
    %377 = vmatprep.subr.mxu0 0.0
    %378 = vmatpush2.msra.mxu0 0.0
    %379 = vmatprep.subr.mxu0 0.0
    %380 = vmatpush2.msra.mxu0 0.0
    %381 = vmatprep.subr.mxu0 0.0
    %382 = vmatpush2.msra.mxu0 0.0
    %383 = vmatprep.subr.mxu0 0.0
    %384 = vmatpush2.msra.mxu0 0.0
    %385 = vmatprep.subr.mxu0 0.0
    %386 = vmatpush2.msra.mxu0 0.0
    %387 = vmatprep.subr.mxu0 0.0
    %388 = vmatpush2.msra.mxu0 0.0
    %389 = vmatprep.subr.mxu0 0.0
    %390 = vmatpush2.msra.mxu0 0.0
    %391 = vmatprep.subr.mxu0 0.0
    %392 = vmatpush2.msra.mxu0 0.0
    %393 = vmatprep.subr.mxu0 0.0
    %394 = vmatpush2.msra.mxu0 0.0
    %395 = vmatprep.subr.mxu0 0.0
    %396 = vmatpush2.msra.mxu0 0.0
    %397 = vmatprep.mubr.f32.mxu0 0.0
    %398 = vmatmul.mubr.f32.gmra.mxu0 0.0
    %v399 = vpop.f32.mrf.mxu0
    %v400 = vadd.f32 0.0, %v399
    %v401 = vpop.f32.mrf.mxu0
    %v402 = vadd.f32 0.0, %v401
    %403 = vdwg.mxu0
    %404 = vmatprep.subr.mxu0 0.0
    %405 = vmatpush1.msra.mxu0 %v182
    %406 = vmatprep.subr.mxu0 0.0
    %407 = vmatpush1.msra.mxu0 %v179
    %408 = vmatprep.subr.mxu0 0.0
    %409 = vmatpush1.msra.mxu0 %v176
    %410 = vmatprep.subr.mxu0 0.0
    %411 = vmatpush1.msra.mxu0 %v173
    %412 = vmatprep.subr.mxu0 0.0
    %413 = vmatpush1.msra.mxu0 %v170
    %414 = vmatprep.subr.mxu0 0.0
    %415 = vmatpush1.msra.mxu0 %v167
    %416 = vmatprep.subr.mxu0 0.0
    %417 = vmatpush1.msra.mxu0 %v164
    %418 = vmatprep.subr.mxu0 0.0
    %419 = vmatpush1.msra.mxu0 %v161
    %420 = vmatprep.subr.mxu0 0.0
    %421 = vmatpush1.msra.mxu0 %v158
    %422 = vmatprep.subr.mxu0 0.0
    %423 = vmatpush1.msra.mxu0 %v155
    %424 = vmatprep.subr.mxu0 0.0
    %425 = vmatpush1.msra.mxu0 %v152
    %426 = vmatprep.subr.mxu0 0.0
    %427 = vmatpush1.msra.mxu0 %v149
    %428 = vmatprep.subr.mxu0 0.0
    %429 = vmatpush1.msra.mxu0 %v146
    %430 = vmatprep.subr.mxu0 0.0
    %431 = vmatpush1.msra.mxu0 %v143
    %432 = vmatprep.subr.mxu0 0.0
    %433 = vmatpush1.msra.mxu0 %v140
    %434 = vmatprep.subr.mxu0 0.0
    %435 = vmatpush1.msra.mxu0 %v137
    %436 = vmatprep.subr.mxu0 0.0
    %437 = vmatpush2.msra.mxu0 0.0
    %438 = vmatprep.subr.mxu0 0.0
    %439 = vmatpush2.msra.mxu0 0.0
    %440 = vmatprep.subr.mxu0 0.0
    %441 = vmatpush2.msra.mxu0 0.0
    %442 = vmatprep.subr.mxu0 0.0
    %443 = vmatpush2.msra.mxu0 0.0
    %444 = vmatprep.subr.mxu0 0.0
    %445 = vmatpush2.msra.mxu0 0.0
    %446 = vmatprep.subr.mxu0 0.0
    %447 = vmatpush2.msra.mxu0 0.0
    %448 = vmatprep.subr.mxu0 0.0
    %449 = vmatpush2.msra.mxu0 0.0
    %450 = vmatprep.subr.mxu0 0.0
    %451 = vmatpush2.msra.mxu0 0.0
    %452 = vmatprep.subr.mxu0 0.0
    %453 = vmatpush2.msra.mxu0 0.0
    %454 = vmatprep.subr.mxu0 0.0
    %455 = vmatpush2.msra.mxu0 0.0
    %456 = vmatprep.subr.mxu0 0.0
    %457 = vmatpush2.msra.mxu0 0.0
    %458 = vmatprep.subr.mxu0 0.0
    %459 = vmatpush2.msra.mxu0 0.0
    %460 = vmatprep.subr.mxu0 0.0
    %461 = vmatpush2.msra.mxu0 0.0
    %462 = vmatprep.subr.mxu0 0.0
    %463 = vmatpush2.msra.mxu0 0.0
    %464 = vmatprep.subr.mxu0 0.0
    %465 = vmatpush2.msra.mxu0 0.0
    %466 = vmatprep.subr.mxu0 0.0
    %467 = vmatpush2.msra.mxu0 0.0
    %468 = vmatprep.mubr.f32.mxu0 0.0
    %469 = vmatmul.mubr.f32.gmra.mxu0 0.0
    %v470 = vpop.f32.mrf.mxu0
    %v471 = vadd.f32 0.0, %v470
    %v472 = vpop.f32.mrf.mxu0
    %473 = vdwg.mxu0
    %v474 = vadd.f32 %v185, %v259
    %v475 = vxor.u32 %v474, 2147483648
    %v476 = vmul.f32 %v475, 1.442695
    %v477 = vpow.pop %v476
    %v478 = vadd.f32 %v477, 1.0
    %v479 = vrcp.pop %v478
    %v480 = vmul.f32 1.0, %v479
    %v481 = vadd.f32 %v186, %v261
    %v482 = vxor.u32 %v481, 2147483648
    %v483 = vmul.f32 %v482, 1.442695
    %v484 = vpow.pop %v483
    %v485 = vadd.f32 %v484, 1.0
    %v486 = vrcp.pop %v485
    %v487 = vmul.f32 1.0, %v486
    %v489 = vlaneseq
    %v490 = vshrl.u32 %v489, 7
    %v491 = vsub.s32 0, %v490
    %v492 = vrot.slane %v183, %v491
    %v494 = vadd.f32 %v330, %v492
    %v495 = vmul.f32 %v480, %v494
    %v496 = vadd.f32 %v187, %v495
    %v497 = vtanh.pop %v496
    %v498 = vsub.f32 1.0, %v487
    %v499 = vmul.f32 %v498, %v497
    %v500 = vmul.f32 %v487, 0.0
    %v501 = vadd.f32 %v499, %v500
    %v502 = vadd.f32 %v189, %v400
    %v503 = vxor.u32 %v502, 2147483648
    %v504 = vmul.f32 %v503, 1.442695
    %v505 = vpow.pop %v504
    %v506 = vadd.f32 %v505, 1.0
    %v507 = vrcp.pop %v506
    %v508 = vmul.f32 1.0, %v507
    %v509 = vadd.f32 %v190, %v402
    %v510 = vxor.u32 %v509, 2147483648
    %v511 = vmul.f32 %v510, 1.442695
    %v512 = vpow.pop %v511
    %v513 = vadd.f32 %v512, 1.0
    %v514 = vrcp.pop %v513
    %v515 = vmul.f32 1.0, %v514
    %v517 = vlaneseq
    %v518 = vshrl.u32 %v517, 7
    %v519 = vsub.s32 0, %v518
    %v520 = vrot.slane %v184, %v519
    %v522 = vadd.f32 %v471, %v520
    %v523 = vmul.f32 %v508, %v522
    %v524 = vadd.f32 %v191, %v523
    %v525 = vtanh.pop %v524
    %v526 = vsub.f32 1.0, %v515
    %v527 = vmul.f32 %v526, %v525
    %v528 = vmul.f32 %v515, 0.0
    %v529 = vadd.f32 %v527, %v528
    %vm530 = vcmp.gt.s32.totalorder %v86, 0
    %vm531 = vcmp.gt.s32.totalorder %v86, 7
    %v532 = vsel %vm530, 1, 0
    %533 = vset.pattern.permute.xlu0 0
    %534 = vperm.xlu0 %533, %v532
    %v535 = vpop.permute.xlu0 %534
    %vm536 = vcmp.eq.s32.totalorder %v535, 1
    %v537 = vsel %vm536, %v501, 0.0
    %538 = vst [vmem:[#allocation10] sm:$0xff] %v537
    %v539 = vsel %vm531, 1, 0
    %540 = vset.pattern.permute.xlu0 0
    %541 = vperm.xlu0 %540, %v539
    %v542 = vpop.permute.xlu0 %541
    %vm543 = vcmp.eq.s32.totalorder %v542, 1
    %v544 = vsel %vm543, %v529, 0.0
    %s545 = scalar_lea.vmem [#allocation11], 56
    %546 = vst [vmem:[%s545] sm:$0xff] %v544
    %s547 = scalar_lea.vmem [#allocation2], 24
    %v548 = vld [vmem:[%s547] sm:$0xff]
    %v549 = vld [vmem:[%s547 + $0x8] sm:$0xff]
    %v550 = vld [vmem:[%s547 + $0x10] sm:$0xff]
    %s551 = scalar_lea.vmem [#allocation5], 144
    %v552 = vld [vmem:[%s551] sm:$0xff]
    %v553 = vld [vmem:[%s551 + $0x8] sm:$0xff]
    %v554 = vld [vmem:[%s551 + $0x10] sm:$0xff]
    %555 = vmatprep.subr.mxu0 %v133
    %556 = vmatpush1.msra.mxu0 %v132
    %557 = vmatprep.subr.mxu0 %v130
    %558 = vmatpush1.msra.mxu0 %v129
    %559 = vmatprep.subr.mxu0 %v127
    %560 = vmatpush1.msra.mxu0 %v126
    %561 = vmatprep.subr.mxu0 %v124
    %562 = vmatpush1.msra.mxu0 %v123
    %563 = vmatprep.subr.mxu0 %v121
    %564 = vmatpush1.msra.mxu0 %v120
    %565 = vmatprep.subr.mxu0 %v118
    %566 = vmatpush1.msra.mxu0 %v117
    %567 = vmatprep.subr.mxu0 %v115
    %568 = vmatpush1.msra.mxu0 %v114
    %569 = vmatprep.subr.mxu0 %v112
    %570 = vmatpush1.msra.mxu0 %v111
    %571 = vmatprep.subr.mxu0 %v109
    %572 = vmatpush1.msra.mxu0 %v108
    %573 = vmatprep.subr.mxu0 %v106
    %574 = vmatpush1.msra.mxu0 %v105
    %575 = vmatprep.subr.mxu0 %v103
    %576 = vmatpush1.msra.mxu0 %v102
    %577 = vmatprep.subr.mxu0 %v100
    %578 = vmatpush1.msra.mxu0 %v99
    %579 = vmatprep.subr.mxu0 %v97
    %580 = vmatpush1.msra.mxu0 %v96
    %581 = vmatprep.subr.mxu0 %v94
    %582 = vmatpush1.msra.mxu0 %v93
    %583 = vmatprep.subr.mxu0 %v91
    %584 = vmatpush1.msra.mxu0 %v90
    %585 = vmatprep.subr.mxu0 %v88
    %586 = vmatpush1.msra.mxu0 %v87
    %587 = vmatprep.subr.mxu0 0.0
    %588 = vmatpush2.msra.mxu0 0.0
    %589 = vmatprep.subr.mxu0 0.0
    %590 = vmatpush2.msra.mxu0 0.0
    %591 = vmatprep.subr.mxu0 0.0
    %592 = vmatpush2.msra.mxu0 0.0
    %593 = vmatprep.subr.mxu0 0.0
    %594 = vmatpush2.msra.mxu0 0.0
    %595 = vmatprep.subr.mxu0 0.0
    %596 = vmatpush2.msra.mxu0 0.0
    %597 = vmatprep.subr.mxu0 0.0
    %598 = vmatpush2.msra.mxu0 0.0
    %599 = vmatprep.subr.mxu0 0.0
    %600 = vmatpush2.msra.mxu0 0.0
    %601 = vmatprep.subr.mxu0 0.0
    %602 = vmatpush2.msra.mxu0 0.0
    %603 = vmatprep.subr.mxu0 0.0
    %604 = vmatpush2.msra.mxu0 0.0
    %605 = vmatprep.subr.mxu0 0.0
    %606 = vmatpush2.msra.mxu0 0.0
    %607 = vmatprep.subr.mxu0 0.0
    %608 = vmatpush2.msra.mxu0 0.0
    %609 = vmatprep.subr.mxu0 0.0
    %610 = vmatpush2.msra.mxu0 0.0
    %611 = vmatprep.subr.mxu0 0.0
    %612 = vmatpush2.msra.mxu0 0.0
    %613 = vmatprep.subr.mxu0 0.0
    %614 = vmatpush2.msra.mxu0 0.0
    %615 = vmatprep.subr.mxu0 0.0
    %616 = vmatpush2.msra.mxu0 0.0
    %617 = vmatprep.subr.mxu0 0.0
    %618 = vmatpush2.msra.mxu0 0.0
    %619 = vmatprep.mubr.f32.mxu0 0.0
    %620 = vmatmul.mubr.f32.gmra.mxu0 %v537
    %v621 = vpop.f32.mrf.mxu0
    %v622 = vadd.f32 0.0, %v621
    %v623 = vpop.f32.mrf.mxu0
    %v624 = vadd.f32 0.0, %v623
    %625 = vdwg.mxu0
    %626 = vmatprep.subr.mxu0 0.0
    %627 = vmatpush1.msra.mxu0 %v134
    %628 = vmatprep.subr.mxu0 0.0
    %629 = vmatpush1.msra.mxu0 %v131
    %630 = vmatprep.subr.mxu0 0.0
    %631 = vmatpush1.msra.mxu0 %v128
    %632 = vmatprep.subr.mxu0 0.0
    %633 = vmatpush1.msra.mxu0 %v125
    %634 = vmatprep.subr.mxu0 0.0
    %635 = vmatpush1.msra.mxu0 %v122
    %636 = vmatprep.subr.mxu0 0.0
    %637 = vmatpush1.msra.mxu0 %v119
    %638 = vmatprep.subr.mxu0 0.0
    %639 = vmatpush1.msra.mxu0 %v116
    %640 = vmatprep.subr.mxu0 0.0
    %641 = vmatpush1.msra.mxu0 %v113
    %642 = vmatprep.subr.mxu0 0.0
    %643 = vmatpush1.msra.mxu0 %v110
    %644 = vmatprep.subr.mxu0 0.0
    %645 = vmatpush1.msra.mxu0 %v107
    %646 = vmatprep.subr.mxu0 0.0
    %647 = vmatpush1.msra.mxu0 %v104
    %648 = vmatprep.subr.mxu0 0.0
    %649 = vmatpush1.msra.mxu0 %v101
    %650 = vmatprep.subr.mxu0 0.0
    %651 = vmatpush1.msra.mxu0 %v98
    %652 = vmatprep.subr.mxu0 0.0
    %653 = vmatpush1.msra.mxu0 %v95
    %654 = vmatprep.subr.mxu0 0.0
    %655 = vmatpush1.msra.mxu0 %v92
    %656 = vmatprep.subr.mxu0 0.0
    %657 = vmatpush1.msra.mxu0 %v89
    %658 = vmatprep.subr.mxu0 0.0
    %659 = vmatpush2.msra.mxu0 0.0
    %660 = vmatprep.subr.mxu0 0.0
    %661 = vmatpush2.msra.mxu0 0.0
    %662 = vmatprep.subr.mxu0 0.0
    %663 = vmatpush2.msra.mxu0 0.0
    %664 = vmatprep.subr.mxu0 0.0
    %665 = vmatpush2.msra.mxu0 0.0
    %666 = vmatprep.subr.mxu0 0.0
    %667 = vmatpush2.msra.mxu0 0.0
    %668 = vmatprep.subr.mxu0 0.0
    %669 = vmatpush2.msra.mxu0 0.0
    %670 = vmatprep.subr.mxu0 0.0
    %671 = vmatpush2.msra.mxu0 0.0
    %672 = vmatprep.subr.mxu0 0.0
    %673 = vmatpush2.msra.mxu0 0.0
    %674 = vmatprep.subr.mxu0 0.0
    %675 = vmatpush2.msra.mxu0 0.0
    %676 = vmatprep.subr.mxu0 0.0
    %677 = vmatpush2.msra.mxu0 0.0
    %678 = vmatprep.subr.mxu0 0.0
    %679 = vmatpush2.msra.mxu0 0.0
    %680 = vmatprep.subr.mxu0 0.0
    %681 = vmatpush2.msra.mxu0 0.0
    %682 = vmatprep.subr.mxu0 0.0
    %683 = vmatpush2.msra.mxu0 0.0
    %684 = vmatprep.subr.mxu0 0.0
    %685 = vmatpush2.msra.mxu0 0.0
    %686 = vmatprep.subr.mxu0 0.0
    %687 = vmatpush2.msra.mxu0 0.0
    %688 = vmatprep.subr.mxu0 0.0
    %689 = vmatpush2.msra.mxu0 0.0
    %690 = vmatprep.mubr.f32.mxu0 0.0
    %691 = vmatmul.mubr.f32.gmra.mxu0 %v537
    %v692 = vpop.f32.mrf.mxu0
    %v693 = vadd.f32 0.0, %v692
    %v694 = vpop.f32.mrf.mxu0
    %695 = vdwg.mxu0
    %696 = vmatprep.subr.mxu0 %v181
    %697 = vmatpush1.msra.mxu0 %v180
    %698 = vmatprep.subr.mxu0 %v178
    %699 = vmatpush1.msra.mxu0 %v177
    %700 = vmatprep.subr.mxu0 %v175
    %701 = vmatpush1.msra.mxu0 %v174
    %702 = vmatprep.subr.mxu0 %v172
    %703 = vmatpush1.msra.mxu0 %v171
    %704 = vmatprep.subr.mxu0 %v169
    %705 = vmatpush1.msra.mxu0 %v168
    %706 = vmatprep.subr.mxu0 %v166
    %707 = vmatpush1.msra.mxu0 %v165
    %708 = vmatprep.subr.mxu0 %v163
    %709 = vmatpush1.msra.mxu0 %v162
    %710 = vmatprep.subr.mxu0 %v160
    %711 = vmatpush1.msra.mxu0 %v159
    %712 = vmatprep.subr.mxu0 %v157
    %713 = vmatpush1.msra.mxu0 %v156
    %714 = vmatprep.subr.mxu0 %v154
    %715 = vmatpush1.msra.mxu0 %v153
    %716 = vmatprep.subr.mxu0 %v151
    %717 = vmatpush1.msra.mxu0 %v150
    %718 = vmatprep.subr.mxu0 %v148
    %719 = vmatpush1.msra.mxu0 %v147
    %720 = vmatprep.subr.mxu0 %v145
    %721 = vmatpush1.msra.mxu0 %v144
    %722 = vmatprep.subr.mxu0 %v142
    %723 = vmatpush1.msra.mxu0 %v141
    %724 = vmatprep.subr.mxu0 %v139
    %725 = vmatpush1.msra.mxu0 %v138
    %726 = vmatprep.subr.mxu0 %v136
    %727 = vmatpush1.msra.mxu0 %v135
    %728 = vmatprep.subr.mxu0 0.0
    %729 = vmatpush2.msra.mxu0 0.0
    %730 = vmatprep.subr.mxu0 0.0
    %731 = vmatpush2.msra.mxu0 0.0
    %732 = vmatprep.subr.mxu0 0.0
    %733 = vmatpush2.msra.mxu0 0.0
    %734 = vmatprep.subr.mxu0 0.0
    %735 = vmatpush2.msra.mxu0 0.0
    %736 = vmatprep.subr.mxu0 0.0
    %737 = vmatpush2.msra.mxu0 0.0
    %738 = vmatprep.subr.mxu0 0.0
    %739 = vmatpush2.msra.mxu0 0.0
    %740 = vmatprep.subr.mxu0 0.0
    %741 = vmatpush2.msra.mxu0 0.0
    %742 = vmatprep.subr.mxu0 0.0
    %743 = vmatpush2.msra.mxu0 0.0
    %744 = vmatprep.subr.mxu0 0.0
    %745 = vmatpush2.msra.mxu0 0.0
    %746 = vmatprep.subr.mxu0 0.0
    %747 = vmatpush2.msra.mxu0 0.0
    %748 = vmatprep.subr.mxu0 0.0
    %749 = vmatpush2.msra.mxu0 0.0
    %750 = vmatprep.subr.mxu0 0.0
    %751 = vmatpush2.msra.mxu0 0.0
    %752 = vmatprep.subr.mxu0 0.0
    %753 = vmatpush2.msra.mxu0 0.0
    %754 = vmatprep.subr.mxu0 0.0
    %755 = vmatpush2.msra.mxu0 0.0
    %756 = vmatprep.subr.mxu0 0.0
    %757 = vmatpush2.msra.mxu0 0.0
    %758 = vmatprep.subr.mxu0 0.0
    %759 = vmatpush2.msra.mxu0 0.0
    %760 = vmatprep.mubr.f32.mxu0 0.0
    %761 = vmatmul.mubr.f32.gmra.mxu0 %v544
    %v762 = vpop.f32.mrf.mxu0
    %v763 = vadd.f32 0.0, %v762
    %v764 = vpop.f32.mrf.mxu0
    %v765 = vadd.f32 0.0, %v764
    %766 = vdwg.mxu0
    %767 = vmatprep.subr.mxu0 0.0
    %768 = vmatpush1.msra.mxu0 %v182
    %769 = vmatprep.subr.mxu0 0.0
    %770 = vmatpush1.msra.mxu0 %v179
    %771 = vmatprep.subr.mxu0 0.0
    %772 = vmatpush1.msra.mxu0 %v176
    %773 = vmatprep.subr.mxu0 0.0
    %774 = vmatpush1.msra.mxu0 %v173
    %775 = vmatprep.subr.mxu0 0.0
    %776 = vmatpush1.msra.mxu0 %v170
    %777 = vmatprep.subr.mxu0 0.0
    %778 = vmatpush1.msra.mxu0 %v167
    %779 = vmatprep.subr.mxu0 0.0
    %780 = vmatpush1.msra.mxu0 %v164
    %781 = vmatprep.subr.mxu0 0.0
    %782 = vmatpush1.msra.mxu0 %v161
    %783 = vmatprep.subr.mxu0 0.0
    %784 = vmatpush1.msra.mxu0 %v158
    %785 = vmatprep.subr.mxu0 0.0
    %786 = vmatpush1.msra.mxu0 %v155
    %787 = vmatprep.subr.mxu0 0.0
    %788 = vmatpush1.msra.mxu0 %v152
    %789 = vmatprep.subr.mxu0 0.0
    %790 = vmatpush1.msra.mxu0 %v149
    %791 = vmatprep.subr.mxu0 0.0
    %792 = vmatpush1.msra.mxu0 %v146
    %793 = vmatprep.subr.mxu0 0.0
    %794 = vmatpush1.msra.mxu0 %v143
    %795 = vmatprep.subr.mxu0 0.0
    %796 = vmatpush1.msra.mxu0 %v140
    %797 = vmatprep.subr.mxu0 0.0
    %798 = vmatpush1.msra.mxu0 %v137
    %799 = vmatprep.subr.mxu0 0.0
    %800 = vmatpush2.msra.mxu0 0.0
    %801 = vmatprep.subr.mxu0 0.0
    %802 = vmatpush2.msra.mxu0 0.0
    %803 = vmatprep.subr.mxu0 0.0
    %804 = vmatpush2.msra.mxu0 0.0
    %805 = vmatprep.subr.mxu0 0.0
    %806 = vmatpush2.msra.mxu0 0.0
    %807 = vmatprep.subr.mxu0 0.0
    %808 = vmatpush2.msra.mxu0 0.0
    %809 = vmatprep.subr.mxu0 0.0
    %810 = vmatpush2.msra.mxu0 0.0
    %811 = vmatprep.subr.mxu0 0.0
    %812 = vmatpush2.msra.mxu0 0.0
    %813 = vmatprep.subr.mxu0 0.0
    %814 = vmatpush2.msra.mxu0 0.0
    %815 = vmatprep.subr.mxu0 0.0
    %816 = vmatpush2.msra.mxu0 0.0
    %817 = vmatprep.subr.mxu0 0.0
    %818 = vmatpush2.msra.mxu0 0.0
    %819 = vmatprep.subr.mxu0 0.0
    %820 = vmatpush2.msra.mxu0 0.0
    %821 = vmatprep.subr.mxu0 0.0
    %822 = vmatpush2.msra.mxu0 0.0
    %823 = vmatprep.subr.mxu0 0.0
    %824 = vmatpush2.msra.mxu0 0.0
    %825 = vmatprep.subr.mxu0 0.0
    %826 = vmatpush2.msra.mxu0 0.0
    %827 = vmatprep.subr.mxu0 0.0
    %828 = vmatpush2.msra.mxu0 0.0
    %829 = vmatprep.subr.mxu0 0.0
    %830 = vmatpush2.msra.mxu0 0.0
    %831 = vmatprep.mubr.f32.mxu0 0.0
    %832 = vmatmul.mubr.f32.gmra.mxu0 %v544
    %v833 = vpop.f32.mrf.mxu0
    %v834 = vadd.f32 0.0, %v833
    %v835 = vpop.f32.mrf.mxu0
    %836 = vdwg.mxu0
    %v837 = vadd.f32 %v548, %v622
    %v838 = vxor.u32 %v837, 2147483648
    %v839 = vmul.f32 %v838, 1.442695
    %v840 = vpow.pop %v839
    %v841 = vadd.f32 %v840, 1.0
    %v842 = vrcp.pop %v841
    %v843 = vmul.f32 1.0, %v842
    %v844 = vadd.f32 %v549, %v624
    %v845 = vxor.u32 %v844, 2147483648
    %v846 = vmul.f32 %v845, 1.442695
    %v847 = vpow.pop %v846
    %v848 = vadd.f32 %v847, 1.0
    %v849 = vrcp.pop %v848
    %v850 = vmul.f32 1.0, %v849
    %v851 = vadd.f32 %v693, %v492
    %v852 = vmul.f32 %v843, %v851
    %v853 = vadd.f32 %v550, %v852
    %v854 = vtanh.pop %v853
    %v855 = vsub.f32 1.0, %v850
    %v856 = vmul.f32 %v855, %v854
    %v857 = vmul.f32 %v850, %v537
    %v858 = vadd.f32 %v856, %v857
    %v859 = vadd.f32 %v552, %v763
    %v860 = vxor.u32 %v859, 2147483648
    %v861 = vmul.f32 %v860, 1.442695
    %v862 = vpow.pop %v861
    %v863 = vadd.f32 %v862, 1.0
    %v864 = vrcp.pop %v863
    %v865 = vmul.f32 1.0, %v864
    %v866 = vadd.f32 %v553, %v765
    %v867 = vxor.u32 %v866, 2147483648
    %v868 = vmul.f32 %v867, 1.442695
    %v869 = vpow.pop %v868
    %v870 = vadd.f32 %v869, 1.0
    %v871 = vrcp.pop %v870
    %v872 = vmul.f32 1.0, %v871
    %v873 = vadd.f32 %v834, %v520
    %v874 = vmul.f32 %v865, %v873
    %v875 = vadd.f32 %v554, %v874
    %v876 = vtanh.pop %v875
    %v877 = vsub.f32 1.0, %v872
    %v878 = vmul.f32 %v877, %v876
    %v879 = vmul.f32 %v872, %v544
    %v880 = vadd.f32 %v878, %v879
    %vm881 = vcmp.gt.s32.totalorder %v86, 1
    %vm882 = vcmp.gt.s32.totalorder %v86, 6
    %v883 = vsel %vm881, 1, 0
    %884 = vset.pattern.permute.xlu0 0
    %885 = vperm.xlu0 %884, %v883
    %v886 = vpop.permute.xlu0 %885
    %vm887 = vcmp.eq.s32.totalorder %v886, 1
    %v888 = vsel %vm887, %v858, 0.0
    %s889 = scalar_lea.vmem [#allocation10], 8
    %890 = vst [vmem:[%s889] sm:$0xff] %v888
    %v891 = vsel %vm882, 1, 0
    %892 = vset.pattern.permute.xlu0 0
    %893 = vperm.xlu0 %892, %v891
    %v894 = vpop.permute.xlu0 %893
    %vm895 = vcmp.eq.s32.totalorder %v894, 1
    %v896 = vsel %vm895, %v880, 0.0
    %s897 = scalar_lea.vmem [#allocation11], 48
    %898 = vst [vmem:[%s897] sm:$0xff] %v896
    %v899 = vsel %vm887, %v858, %v537
    %v900 = vsel %vm895, %v880, %v544
    %s901 = scalar_lea.vmem [#allocation2], 48
    %v902 = vld [vmem:[%s901] sm:$0xff]
    %v903 = vld [vmem:[%s901 + $0x8] sm:$0xff]
    %v904 = vld [vmem:[%s901 + $0x10] sm:$0xff]
    %s905 = scalar_lea.vmem [#allocation5], 120
    %v906 = vld [vmem:[%s905] sm:$0xff]
    %v907 = vld [vmem:[%s905 + $0x8] sm:$0xff]
    %v908 = vld [vmem:[%s905 + $0x10] sm:$0xff]
    %909 = vmatprep.subr.mxu0 %v133
    %910 = vmatpush1.msra.mxu0 %v132
    %911 = vmatprep.subr.mxu0 %v130
    %912 = vmatpush1.msra.mxu0 %v129
    %913 = vmatprep.subr.mxu0 %v127
    %914 = vmatpush1.msra.mxu0 %v126
    %915 = vmatprep.subr.mxu0 %v124
    %916 = vmatpush1.msra.mxu0 %v123
    %917 = vmatprep.subr.mxu0 %v121
    %918 = vmatpush1.msra.mxu0 %v120
    %919 = vmatprep.subr.mxu0 %v118
    %920 = vmatpush1.msra.mxu0 %v117
    %921 = vmatprep.subr.mxu0 %v115
    %922 = vmatpush1.msra.mxu0 %v114
    %923 = vmatprep.subr.mxu0 %v112
    %924 = vmatpush1.msra.mxu0 %v111
    %925 = vmatprep.subr.mxu0 %v109
    %926 = vmatpush1.msra.mxu0 %v108
    %927 = vmatprep.subr.mxu0 %v106
    %928 = vmatpush1.msra.mxu0 %v105
    %929 = vmatprep.subr.mxu0 %v103
    %930 = vmatpush1.msra.mxu0 %v102
    %931 = vmatprep.subr.mxu0 %v100
    %932 = vmatpush1.msra.mxu0 %v99
    %933 = vmatprep.subr.mxu0 %v97
    %934 = vmatpush1.msra.mxu0 %v96
    %935 = vmatprep.subr.mxu0 %v94
    %936 = vmatpush1.msra.mxu0 %v93
    %937 = vmatprep.subr.mxu0 %v91
    %938 = vmatpush1.msra.mxu0 %v90
    %939 = vmatprep.subr.mxu0 %v88
    %940 = vmatpush1.msra.mxu0 %v87
    %941 = vmatprep.subr.mxu0 0.0
    %942 = vmatpush2.msra.mxu0 0.0
    %943 = vmatprep.subr.mxu0 0.0
    %944 = vmatpush2.msra.mxu0 0.0
    %945 = vmatprep.subr.mxu0 0.0
    %946 = vmatpush2.msra.mxu0 0.0
    %947 = vmatprep.subr.mxu0 0.0
    %948 = vmatpush2.msra.mxu0 0.0
    %949 = vmatprep.subr.mxu0 0.0
    %950 = vmatpush2.msra.mxu0 0.0
    %951 = vmatprep.subr.mxu0 0.0
    %952 = vmatpush2.msra.mxu0 0.0
    %953 = vmatprep.subr.mxu0 0.0
    %954 = vmatpush2.msra.mxu0 0.0
    %955 = vmatprep.subr.mxu0 0.0
    %956 = vmatpush2.msra.mxu0 0.0
    %957 = vmatprep.subr.mxu0 0.0
    %958 = vmatpush2.msra.mxu0 0.0
    %959 = vmatprep.subr.mxu0 0.0
    %960 = vmatpush2.msra.mxu0 0.0
    %961 = vmatprep.subr.mxu0 0.0
    %962 = vmatpush2.msra.mxu0 0.0
    %963 = vmatprep.subr.mxu0 0.0
    %964 = vmatpush2.msra.mxu0 0.0
    %965 = vmatprep.subr.mxu0 0.0
    %966 = vmatpush2.msra.mxu0 0.0
    %967 = vmatprep.subr.mxu0 0.0
    %968 = vmatpush2.msra.mxu0 0.0
    %969 = vmatprep.subr.mxu0 0.0
    %970 = vmatpush2.msra.mxu0 0.0
    %971 = vmatprep.subr.mxu0 0.0
    %972 = vmatpush2.msra.mxu0 0.0
    %973 = vmatprep.mubr.f32.mxu0 0.0
    %974 = vmatmul.mubr.f32.gmra.mxu0 %v899
    %v975 = vpop.f32.mrf.mxu0
    %v976 = vadd.f32 0.0, %v975
    %v977 = vpop.f32.mrf.mxu0
    %v978 = vadd.f32 0.0, %v977
    %979 = vdwg.mxu0
    %980 = vmatprep.subr.mxu0 0.0
    %981 = vmatpush1.msra.mxu0 %v134
    %982 = vmatprep.subr.mxu0 0.0
    %983 = vmatpush1.msra.mxu0 %v131
    %984 = vmatprep.subr.mxu0 0.0
    %985 = vmatpush1.msra.mxu0 %v128
    %986 = vmatprep.subr.mxu0 0.0
    %987 = vmatpush1.msra.mxu0 %v125
    %988 = vmatprep.subr.mxu0 0.0
    %989 = vmatpush1.msra.mxu0 %v122
    %990 = vmatprep.subr.mxu0 0.0
    %991 = vmatpush1.msra.mxu0 %v119
    %992 = vmatprep.subr.mxu0 0.0
    %993 = vmatpush1.msra.mxu0 %v116
    %994 = vmatprep.subr.mxu0 0.0
    %995 = vmatpush1.msra.mxu0 %v113
    %996 = vmatprep.subr.mxu0 0.0
    %997 = vmatpush1.msra.mxu0 %v110
    %998 = vmatprep.subr.mxu0 0.0
    %999 = vmatpush1.msra.mxu0 %v107
    %1000 = vmatprep.subr.mxu0 0.0
    %1001 = vmatpush1.msra.mxu0 %v104
    %1002 = vmatprep.subr.mxu0 0.0
    %1003 = vmatpush1.msra.mxu0 %v101
    %1004 = vmatprep.subr.mxu0 0.0
    %1005 = vmatpush1.msra.mxu0 %v98
    %1006 = vmatprep.subr.mxu0 0.0
    %1007 = vmatpush1.msra.mxu0 %v95
    %1008 = vmatprep.subr.mxu0 0.0
    %1009 = vmatpush1.msra.mxu0 %v92
    %1010 = vmatprep.subr.mxu0 0.0
    %1011 = vmatpush1.msra.mxu0 %v89
    %1012 = vmatprep.subr.mxu0 0.0
    %1013 = vmatpush2.msra.mxu0 0.0
    %1014 = vmatprep.subr.mxu0 0.0
    %1015 = vmatpush2.msra.mxu0 0.0
    %1016 = vmatprep.subr.mxu0 0.0
    %1017 = vmatpush2.msra.mxu0 0.0
    %1018 = vmatprep.subr.mxu0 0.0
    %1019 = vmatpush2.msra.mxu0 0.0
    %1020 = vmatprep.subr.mxu0 0.0
    %1021 = vmatpush2.msra.mxu0 0.0
    %1022 = vmatprep.subr.mxu0 0.0
    %1023 = vmatpush2.msra.mxu0 0.0
    %1024 = vmatprep.subr.mxu0 0.0
    %1025 = vmatpush2.msra.mxu0 0.0
    %1026 = vmatprep.subr.mxu0 0.0
    %1027 = vmatpush2.msra.mxu0 0.0
    %1028 = vmatprep.subr.mxu0 0.0
    %1029 = vmatpush2.msra.mxu0 0.0
    %1030 = vmatprep.subr.mxu0 0.0
    %1031 = vmatpush2.msra.mxu0 0.0
    %1032 = vmatprep.subr.mxu0 0.0
    %1033 = vmatpush2.msra.mxu0 0.0
    %1034 = vmatprep.subr.mxu0 0.0
    %1035 = vmatpush2.msra.mxu0 0.0
    %1036 = vmatprep.subr.mxu0 0.0
    %1037 = vmatpush2.msra.mxu0 0.0
    %1038 = vmatprep.subr.mxu0 0.0
    %1039 = vmatpush2.msra.mxu0 0.0
    %1040 = vmatprep.subr.mxu0 0.0
    %1041 = vmatpush2.msra.mxu0 0.0
    %1042 = vmatprep.subr.mxu0 0.0
    %1043 = vmatpush2.msra.mxu0 0.0
    %1044 = vmatprep.mubr.f32.mxu0 0.0
    %1045 = vmatmul.mubr.f32.gmra.mxu0 %v899
    %v1046 = vpop.f32.mrf.mxu0
    %v1047 = vadd.f32 0.0, %v1046
    %v1048 = vpop.f32.mrf.mxu0
    %1049 = vdwg.mxu0
    %1050 = vmatprep.subr.mxu0 %v181
    %1051 = vmatpush1.msra.mxu0 %v180
    %1052 = vmatprep.subr.mxu0 %v178
    %1053 = vmatpush1.msra.mxu0 %v177
    %1054 = vmatprep.subr.mxu0 %v175
    %1055 = vmatpush1.msra.mxu0 %v174
    %1056 = vmatprep.subr.mxu0 %v172
    %1057 = vmatpush1.msra.mxu0 %v171
    %1058 = vmatprep.subr.mxu0 %v169
    %1059 = vmatpush1.msra.mxu0 %v168
    %1060 = vmatprep.subr.mxu0 %v166
    %1061 = vmatpush1.msra.mxu0 %v165
    %1062 = vmatprep.subr.mxu0 %v163
    %1063 = vmatpush1.msra.mxu0 %v162
    %1064 = vmatprep.subr.mxu0 %v160
    %1065 = vmatpush1.msra.mxu0 %v159
    %1066 = vmatprep.subr.mxu0 %v157
    %1067 = vmatpush1.msra.mxu0 %v156
    %1068 = vmatprep.subr.mxu0 %v154
    %1069 = vmatpush1.msra.mxu0 %v153
    %1070 = vmatprep.subr.mxu0 %v151
    %1071 = vmatpush1.msra.mxu0 %v150
    %1072 = vmatprep.subr.mxu0 %v148
    %1073 = vmatpush1.msra.mxu0 %v147
    %1074 = vmatprep.subr.mxu0 %v145
    %1075 = vmatpush1.msra.mxu0 %v144
    %1076 = vmatprep.subr.mxu0 %v142
    %1077 = vmatpush1.msra.mxu0 %v141
    %1078 = vmatprep.subr.mxu0 %v139
    %1079 = vmatpush1.msra.mxu0 %v138
    %1080 = vmatprep.subr.mxu0 %v136
    %1081 = vmatpush1.msra.mxu0 %v135
    %1082 = vmatprep.subr.mxu0 0.0
    %1083 = vmatpush2.msra.mxu0 0.0
    %1084 = vmatprep.subr.mxu0 0.0
    %1085 = vmatpush2.msra.mxu0 0.0
    %1086 = vmatprep.subr.mxu0 0.0
    %1087 = vmatpush2.msra.mxu0 0.0
    %1088 = vmatprep.subr.mxu0 0.0
    %1089 = vmatpush2.msra.mxu0 0.0
    %1090 = vmatprep.subr.mxu0 0.0
    %1091 = vmatpush2.msra.mxu0 0.0
    %1092 = vmatprep.subr.mxu0 0.0
    %1093 = vmatpush2.msra.mxu0 0.0
    %1094 = vmatprep.subr.mxu0 0.0
    %1095 = vmatpush2.msra.mxu0 0.0
    %1096 = vmatprep.subr.mxu0 0.0
    %1097 = vmatpush2.msra.mxu0 0.0
    %1098 = vmatprep.subr.mxu0 0.0
    %1099 = vmatpush2.msra.mxu0 0.0
    %1100 = vmatprep.subr.mxu0 0.0
    %1101 = vmatpush2.msra.mxu0 0.0
    %1102 = vmatprep.subr.mxu0 0.0
    %1103 = vmatpush2.msra.mxu0 0.0
    %1104 = vmatprep.subr.mxu0 0.0
    %1105 = vmatpush2.msra.mxu0 0.0
    %1106 = vmatprep.subr.mxu0 0.0
    %1107 = vmatpush2.msra.mxu0 0.0
    %1108 = vmatprep.subr.mxu0 0.0
    %1109 = vmatpush2.msra.mxu0 0.0
    %1110 = vmatprep.subr.mxu0 0.0
    %1111 = vmatpush2.msra.mxu0 0.0
    %1112 = vmatprep.subr.mxu0 0.0
    %1113 = vmatpush2.msra.mxu0 0.0
    %1114 = vmatprep.mubr.f32.mxu0 0.0
    %1115 = vmatmul.mubr.f32.gmra.mxu0 %v900
    %v1116 = vpop.f32.mrf.mxu0
    %v1117 = vadd.f32 0.0, %v1116
    %v1118 = vpop.f32.mrf.mxu0
    %v1119 = vadd.f32 0.0, %v1118
    %1120 = vdwg.mxu0
    %1121 = vmatprep.subr.mxu0 0.0
    %1122 = vmatpush1.msra.mxu0 %v182
    %1123 = vmatprep.subr.mxu0 0.0
    %1124 = vmatpush1.msra.mxu0 %v179
    %1125 = vmatprep.subr.mxu0 0.0
    %1126 = vmatpush1.msra.mxu0 %v176
    %1127 = vmatprep.subr.mxu0 0.0
    %1128 = vmatpush1.msra.mxu0 %v173
    %1129 = vmatprep.subr.mxu0 0.0
    %1130 = vmatpush1.msra.mxu0 %v170
    %1131 = vmatprep.subr.mxu0 0.0
    %1132 = vmatpush1.msra.mxu0 %v167
    %1133 = vmatprep.subr.mxu0 0.0
    %1134 = vmatpush1.msra.mxu0 %v164
    %1135 = vmatprep.subr.mxu0 0.0
    %1136 = vmatpush1.msra.mxu0 %v161
    %1137 = vmatprep.subr.mxu0 0.0
    %1138 = vmatpush1.msra.mxu0 %v158
    %1139 = vmatprep.subr.mxu0 0.0
    %1140 = vmatpush1.msra.mxu0 %v155
    %1141 = vmatprep.subr.mxu0 0.0
    %1142 = vmatpush1.msra.mxu0 %v152
    %1143 = vmatprep.subr.mxu0 0.0
    %1144 = vmatpush1.msra.mxu0 %v149
    %1145 = vmatprep.subr.mxu0 0.0
    %1146 = vmatpush1.msra.mxu0 %v146
    %1147 = vmatprep.subr.mxu0 0.0
    %1148 = vmatpush1.msra.mxu0 %v143
    %1149 = vmatprep.subr.mxu0 0.0
    %1150 = vmatpush1.msra.mxu0 %v140
    %1151 = vmatprep.subr.mxu0 0.0
    %1152 = vmatpush1.msra.mxu0 %v137
    %1153 = vmatprep.subr.mxu0 0.0
    %1154 = vmatpush2.msra.mxu0 0.0
    %1155 = vmatprep.subr.mxu0 0.0
    %1156 = vmatpush2.msra.mxu0 0.0
    %1157 = vmatprep.subr.mxu0 0.0
    %1158 = vmatpush2.msra.mxu0 0.0
    %1159 = vmatprep.subr.mxu0 0.0
    %1160 = vmatpush2.msra.mxu0 0.0
    %1161 = vmatprep.subr.mxu0 0.0
    %1162 = vmatpush2.msra.mxu0 0.0
    %1163 = vmatprep.subr.mxu0 0.0
    %1164 = vmatpush2.msra.mxu0 0.0
    %1165 = vmatprep.subr.mxu0 0.0
    %1166 = vmatpush2.msra.mxu0 0.0
    %1167 = vmatprep.subr.mxu0 0.0
    %1168 = vmatpush2.msra.mxu0 0.0
    %1169 = vmatprep.subr.mxu0 0.0
    %1170 = vmatpush2.msra.mxu0 0.0
    %1171 = vmatprep.subr.mxu0 0.0
    %1172 = vmatpush2.msra.mxu0 0.0
    %1173 = vmatprep.subr.mxu0 0.0
    %1174 = vmatpush2.msra.mxu0 0.0
    %1175 = vmatprep.subr.mxu0 0.0
    %1176 = vmatpush2.msra.mxu0 0.0
    %1177 = vmatprep.subr.mxu0 0.0
    %1178 = vmatpush2.msra.mxu0 0.0
    %1179 = vmatprep.subr.mxu0 0.0
    %1180 = vmatpush2.msra.mxu0 0.0
    %1181 = vmatprep.subr.mxu0 0.0
    %1182 = vmatpush2.msra.mxu0 0.0
    %1183 = vmatprep.subr.mxu0 0.0
    %1184 = vmatpush2.msra.mxu0 0.0
    %1185 = vmatprep.mubr.f32.mxu0 0.0
    %1186 = vmatmul.mubr.f32.gmra.mxu0 %v900
    %v1187 = vpop.f32.mrf.mxu0
    %v1188 = vadd.f32 0.0, %v1187
    %v1189 = vpop.f32.mrf.mxu0
    %1190 = vdwg.mxu0
    %v1191 = vadd.f32 %v902, %v976
    %v1192 = vxor.u32 %v1191, 2147483648
    %v1193 = vmul.f32 %v1192, 1.442695
    %v1194 = vpow.pop %v1193
    %v1195 = vadd.f32 %v1194, 1.0
    %v1196 = vrcp.pop %v1195
    %v1197 = vmul.f32 1.0, %v1196
    %v1198 = vadd.f32 %v903, %v978
    %v1199 = vxor.u32 %v1198, 2147483648
    %v1200 = vmul.f32 %v1199, 1.442695
    %v1201 = vpow.pop %v1200
    %v1202 = vadd.f32 %v1201, 1.0
    %v1203 = vrcp.pop %v1202
    %v1204 = vmul.f32 1.0, %v1203
    %v1205 = vadd.f32 %v1047, %v492
    %v1206 = vmul.f32 %v1197, %v1205
    %v1207 = vadd.f32 %v904, %v1206
    %v1208 = vtanh.pop %v1207
    %v1209 = vsub.f32 1.0, %v1204
    %v1210 = vmul.f32 %v1209, %v1208
    %v1211 = vmul.f32 %v1204, %v899
    %v1212 = vadd.f32 %v1210, %v1211
    %v1213 = vadd.f32 %v906, %v1117
    %v1214 = vxor.u32 %v1213, 2147483648
    %v1215 = vmul.f32 %v1214, 1.442695
    %v1216 = vpow.pop %v1215
    %v1217 = vadd.f32 %v1216, 1.0
    %v1218 = vrcp.pop %v1217
    %v1219 = vmul.f32 1.0, %v1218
    %v1220 = vadd.f32 %v907, %v1119
    %v1221 = vxor.u32 %v1220, 2147483648
    %v1222 = vmul.f32 %v1221, 1.442695
    %v1223 = vpow.pop %v1222
    %v1224 = vadd.f32 %v1223, 1.0
    %v1225 = vrcp.pop %v1224
    %v1226 = vmul.f32 1.0, %v1225
    %v1227 = vadd.f32 %v1188, %v520
    %v1228 = vmul.f32 %v1219, %v1227
    %v1229 = vadd.f32 %v908, %v1228
    %v1230 = vtanh.pop %v1229
    %v1231 = vsub.f32 1.0, %v1226
    %v1232 = vmul.f32 %v1231, %v1230
    %v1233 = vmul.f32 %v1226, %v900
    %v1234 = vadd.f32 %v1232, %v1233
    %vm1235 = vcmp.gt.s32.totalorder %v86, 2
    %vm1236 = vcmp.gt.s32.totalorder %v86, 5
    %v1237 = vsel %vm1235, 1, 0
    %1238 = vset.pattern.permute.xlu0 0
    %1239 = vperm.xlu0 %1238, %v1237
    %v1240 = vpop.permute.xlu0 %1239
    %vm1241 = vcmp.eq.s32.totalorder %v1240, 1
    %v1242 = vsel %vm1241, %v1212, 0.0
    %s1243 = scalar_lea.vmem [#allocation10], 16
    %1244 = vst [vmem:[%s1243] sm:$0xff] %v1242
    %v1245 = vsel %vm1236, 1, 0
    %1246 = vset.pattern.permute.xlu0 0
    %1247 = vperm.xlu0 %1246, %v1245
    %v1248 = vpop.permute.xlu0 %1247
    %vm1249 = vcmp.eq.s32.totalorder %v1248, 1
    %v1250 = vsel %vm1249, %v1234, 0.0
    %s1251 = scalar_lea.vmem [#allocation11], 40
    %1252 = vst [vmem:[%s1251] sm:$0xff] %v1250
    %v1253 = vsel %vm1241, %v1212, %v899
    %v1254 = vsel %vm1249, %v1234, %v900
    %s1255 = scalar_lea.vmem [#allocation2], 72
    %v1256 = vld [vmem:[%s1255] sm:$0xff]
    %v1257 = vld [vmem:[%s1255 + $0x8] sm:$0xff]
    %v1258 = vld [vmem:[%s1255 + $0x10] sm:$0xff]
    %s1259 = scalar_lea.vmem [#allocation5], 96
    %v1260 = vld [vmem:[%s1259] sm:$0xff]
    %v1261 = vld [vmem:[%s1259 + $0x8] sm:$0xff]
    %v1262 = vld [vmem:[%s1259 + $0x10] sm:$0xff]
    %1263 = vmatprep.subr.mxu0 %v133
    %1264 = vmatpush1.msra.mxu0 %v132
    %1265 = vmatprep.subr.mxu0 %v130
    %1266 = vmatpush1.msra.mxu0 %v129
    %1267 = vmatprep.subr.mxu0 %v127
    %1268 = vmatpush1.msra.mxu0 %v126
    %1269 = vmatprep.subr.mxu0 %v124
    %1270 = vmatpush1.msra.mxu0 %v123
    %1271 = vmatprep.subr.mxu0 %v121
    %1272 = vmatpush1.msra.mxu0 %v120
    %1273 = vmatprep.subr.mxu0 %v118
    %1274 = vmatpush1.msra.mxu0 %v117
    %1275 = vmatprep.subr.mxu0 %v115
    %1276 = vmatpush1.msra.mxu0 %v114
    %1277 = vmatprep.subr.mxu0 %v112
    %1278 = vmatpush1.msra.mxu0 %v111
    %1279 = vmatprep.subr.mxu0 %v109
    %1280 = vmatpush1.msra.mxu0 %v108
    %1281 = vmatprep.subr.mxu0 %v106
    %1282 = vmatpush1.msra.mxu0 %v105
    %1283 = vmatprep.subr.mxu0 %v103
    %1284 = vmatpush1.msra.mxu0 %v102
    %1285 = vmatprep.subr.mxu0 %v100
    %1286 = vmatpush1.msra.mxu0 %v99
    %1287 = vmatprep.subr.mxu0 %v97
    %1288 = vmatpush1.msra.mxu0 %v96
    %1289 = vmatprep.subr.mxu0 %v94
    %1290 = vmatpush1.msra.mxu0 %v93
    %1291 = vmatprep.subr.mxu0 %v91
    %1292 = vmatpush1.msra.mxu0 %v90
    %1293 = vmatprep.subr.mxu0 %v88
    %1294 = vmatpush1.msra.mxu0 %v87
    %1295 = vmatprep.subr.mxu0 0.0
    %1296 = vmatpush2.msra.mxu0 0.0
    %1297 = vmatprep.subr.mxu0 0.0
    %1298 = vmatpush2.msra.mxu0 0.0
    %1299 = vmatprep.subr.mxu0 0.0
    %1300 = vmatpush2.msra.mxu0 0.0
    %1301 = vmatprep.subr.mxu0 0.0
    %1302 = vmatpush2.msra.mxu0 0.0
    %1303 = vmatprep.subr.mxu0 0.0
    %1304 = vmatpush2.msra.mxu0 0.0
    %1305 = vmatprep.subr.mxu0 0.0
    %1306 = vmatpush2.msra.mxu0 0.0
    %1307 = vmatprep.subr.mxu0 0.0
    %1308 = vmatpush2.msra.mxu0 0.0
    %1309 = vmatprep.subr.mxu0 0.0
    %1310 = vmatpush2.msra.mxu0 0.0
    %1311 = vmatprep.subr.mxu0 0.0
    %1312 = vmatpush2.msra.mxu0 0.0
    %1313 = vmatprep.subr.mxu0 0.0
    %1314 = vmatpush2.msra.mxu0 0.0
    %1315 = vmatprep.subr.mxu0 0.0
    %1316 = vmatpush2.msra.mxu0 0.0
    %1317 = vmatprep.subr.mxu0 0.0
    %1318 = vmatpush2.msra.mxu0 0.0
    %1319 = vmatprep.subr.mxu0 0.0
    %1320 = vmatpush2.msra.mxu0 0.0
    %1321 = vmatprep.subr.mxu0 0.0
    %1322 = vmatpush2.msra.mxu0 0.0
    %1323 = vmatprep.subr.mxu0 0.0
    %1324 = vmatpush2.msra.mxu0 0.0
    %1325 = vmatprep.subr.mxu0 0.0
    %1326 = vmatpush2.msra.mxu0 0.0
    %1327 = vmatprep.mubr.f32.mxu0 0.0
    %1328 = vmatmul.mubr.f32.gmra.mxu0 %v1253
    %v1329 = vpop.f32.mrf.mxu0
    %v1330 = vadd.f32 0.0, %v1329
    %v1331 = vpop.f32.mrf.mxu0
    %v1332 = vadd.f32 0.0, %v1331
    %1333 = vdwg.mxu0
    %1334 = vmatprep.subr.mxu0 0.0
    %1335 = vmatpush1.msra.mxu0 %v134
    %1336 = vmatprep.subr.mxu0 0.0
    %1337 = vmatpush1.msra.mxu0 %v131
    %1338 = vmatprep.subr.mxu0 0.0
    %1339 = vmatpush1.msra.mxu0 %v128
    %1340 = vmatprep.subr.mxu0 0.0
    %1341 = vmatpush1.msra.mxu0 %v125
    %1342 = vmatprep.subr.mxu0 0.0
    %1343 = vmatpush1.msra.mxu0 %v122
    %1344 = vmatprep.subr.mxu0 0.0
    %1345 = vmatpush1.msra.mxu0 %v119
    %1346 = vmatprep.subr.mxu0 0.0
    %1347 = vmatpush1.msra.mxu0 %v116
    %1348 = vmatprep.subr.mxu0 0.0
    %1349 = vmatpush1.msra.mxu0 %v113
    %1350 = vmatprep.subr.mxu0 0.0
    %1351 = vmatpush1.msra.mxu0 %v110
    %1352 = vmatprep.subr.mxu0 0.0
    %1353 = vmatpush1.msra.mxu0 %v107
    %1354 = vmatprep.subr.mxu0 0.0
    %1355 = vmatpush1.msra.mxu0 %v104
    %1356 = vmatprep.subr.mxu0 0.0
    %1357 = vmatpush1.msra.mxu0 %v101
    %1358 = vmatprep.subr.mxu0 0.0
    %1359 = vmatpush1.msra.mxu0 %v98
    %1360 = vmatprep.subr.mxu0 0.0
    %1361 = vmatpush1.msra.mxu0 %v95
    %1362 = vmatprep.subr.mxu0 0.0
    %1363 = vmatpush1.msra.mxu0 %v92
    %1364 = vmatprep.subr.mxu0 0.0
    %1365 = vmatpush1.msra.mxu0 %v89
    %1366 = vmatprep.subr.mxu0 0.0
    %1367 = vmatpush2.msra.mxu0 0.0
    %1368 = vmatprep.subr.mxu0 0.0
    %1369 = vmatpush2.msra.mxu0 0.0
    %1370 = vmatprep.subr.mxu0 0.0
    %1371 = vmatpush2.msra.mxu0 0.0
    %1372 = vmatprep.subr.mxu0 0.0
    %1373 = vmatpush2.msra.mxu0 0.0
    %1374 = vmatprep.subr.mxu0 0.0
    %1375 = vmatpush2.msra.mxu0 0.0
    %1376 = vmatprep.subr.mxu0 0.0
    %1377 = vmatpush2.msra.mxu0 0.0
    %1378 = vmatprep.subr.mxu0 0.0
    %1379 = vmatpush2.msra.mxu0 0.0
    %1380 = vmatprep.subr.mxu0 0.0
    %1381 = vmatpush2.msra.mxu0 0.0
    %1382 = vmatprep.subr.mxu0 0.0
    %1383 = vmatpush2.msra.mxu0 0.0
    %1384 = vmatprep.subr.mxu0 0.0
    %1385 = vmatpush2.msra.mxu0 0.0
    %1386 = vmatprep.subr.mxu0 0.0
    %1387 = vmatpush2.msra.mxu0 0.0
    %1388 = vmatprep.subr.mxu0 0.0
    %1389 = vmatpush2.msra.mxu0 0.0
    %1390 = vmatprep.subr.mxu0 0.0
    %1391 = vmatpush2.msra.mxu0 0.0
    %1392 = vmatprep.subr.mxu0 0.0
    %1393 = vmatpush2.msra.mxu0 0.0
    %1394 = vmatprep.subr.mxu0 0.0
    %1395 = vmatpush2.msra.mxu0 0.0
    %1396 = vmatprep.subr.mxu0 0.0
    %1397 = vmatpush2.msra.mxu0 0.0
    %1398 = vmatprep.mubr.f32.mxu0 0.0
    %1399 = vmatmul.mubr.f32.gmra.mxu0 %v1253
    %v1400 = vpop.f32.mrf.mxu0
    %v1401 = vadd.f32 0.0, %v1400
    %v1402 = vpop.f32.mrf.mxu0
    %1403 = vdwg.mxu0
    %1404 = vmatprep.subr.mxu0 %v181
    %1405 = vmatpush1.msra.mxu0 %v180
    %1406 = vmatprep.subr.mxu0 %v178
    %1407 = vmatpush1.msra.mxu0 %v177
    %1408 = vmatprep.subr.mxu0 %v175
    %1409 = vmatpush1.msra.mxu0 %v174
    %1410 = vmatprep.subr.mxu0 %v172
    %1411 = vmatpush1.msra.mxu0 %v171
    %1412 = vmatprep.subr.mxu0 %v169
    %1413 = vmatpush1.msra.mxu0 %v168
    %1414 = vmatprep.subr.mxu0 %v166
    %1415 = vmatpush1.msra.mxu0 %v165
    %1416 = vmatprep.subr.mxu0 %v163
    %1417 = vmatpush1.msra.mxu0 %v162
    %1418 = vmatprep.subr.mxu0 %v160
    %1419 = vmatpush1.msra.mxu0 %v159
    %1420 = vmatprep.subr.mxu0 %v157
    %1421 = vmatpush1.msra.mxu0 %v156
    %1422 = vmatprep.subr.mxu0 %v154
    %1423 = vmatpush1.msra.mxu0 %v153
    %1424 = vmatprep.subr.mxu0 %v151
    %1425 = vmatpush1.msra.mxu0 %v150
    %1426 = vmatprep.subr.mxu0 %v148
    %1427 = vmatpush1.msra.mxu0 %v147
    %1428 = vmatprep.subr.mxu0 %v145
    %1429 = vmatpush1.msra.mxu0 %v144
    %1430 = vmatprep.subr.mxu0 %v142
    %1431 = vmatpush1.msra.mxu0 %v141
    %1432 = vmatprep.subr.mxu0 %v139
    %1433 = vmatpush1.msra.mxu0 %v138
    %1434 = vmatprep.subr.mxu0 %v136
    %1435 = vmatpush1.msra.mxu0 %v135
    %1436 = vmatprep.subr.mxu0 0.0
    %1437 = vmatpush2.msra.mxu0 0.0
    %1438 = vmatprep.subr.mxu0 0.0
    %1439 = vmatpush2.msra.mxu0 0.0
    %1440 = vmatprep.subr.mxu0 0.0
    %1441 = vmatpush2.msra.mxu0 0.0
    %1442 = vmatprep.subr.mxu0 0.0
    %1443 = vmatpush2.msra.mxu0 0.0
    %1444 = vmatprep.subr.mxu0 0.0
    %1445 = vmatpush2.msra.mxu0 0.0
    %1446 = vmatprep.subr.mxu0 0.0
    %1447 = vmatpush2.msra.mxu0 0.0
    %1448 = vmatprep.subr.mxu0 0.0
    %1449 = vmatpush2.msra.mxu0 0.0
    %1450 = vmatprep.subr.mxu0 0.0
    %1451 = vmatpush2.msra.mxu0 0.0
    %1452 = vmatprep.subr.mxu0 0.0
    %1453 = vmatpush2.msra.mxu0 0.0
    %1454 = vmatprep.subr.mxu0 0.0
    %1455 = vmatpush2.msra.mxu0 0.0
    %1456 = vmatprep.subr.mxu0 0.0
    %1457 = vmatpush2.msra.mxu0 0.0
    %1458 = vmatprep.subr.mxu0 0.0
    %1459 = vmatpush2.msra.mxu0 0.0
    %1460 = vmatprep.subr.mxu0 0.0
    %1461 = vmatpush2.msra.mxu0 0.0
    %1462 = vmatprep.subr.mxu0 0.0
    %1463 = vmatpush2.msra.mxu0 0.0
    %1464 = vmatprep.subr.mxu0 0.0
    %1465 = vmatpush2.msra.mxu0 0.0
    %1466 = vmatprep.subr.mxu0 0.0
    %1467 = vmatpush2.msra.mxu0 0.0
    %1468 = vmatprep.mubr.f32.mxu0 0.0
    %1469 = vmatmul.mubr.f32.gmra.mxu0 %v1254
    %v1470 = vpop.f32.mrf.mxu0
    %v1471 = vadd.f32 0.0, %v1470
    %v1472 = vpop.f32.mrf.mxu0
    %v1473 = vadd.f32 0.0, %v1472
    %1474 = vdwg.mxu0
    %1475 = vmatprep.subr.mxu0 0.0
    %1476 = vmatpush1.msra.mxu0 %v182
    %1477 = vmatprep.subr.mxu0 0.0
    %1478 = vmatpush1.msra.mxu0 %v179
    %1479 = vmatprep.subr.mxu0 0.0
    %1480 = vmatpush1.msra.mxu0 %v176
    %1481 = vmatprep.subr.mxu0 0.0
    %1482 = vmatpush1.msra.mxu0 %v173
    %1483 = vmatprep.subr.mxu0 0.0
    %1484 = vmatpush1.msra.mxu0 %v170
    %1485 = vmatprep.subr.mxu0 0.0
    %1486 = vmatpush1.msra.mxu0 %v167
    %1487 = vmatprep.subr.mxu0 0.0
    %1488 = vmatpush1.msra.mxu0 %v164
    %1489 = vmatprep.subr.mxu0 0.0
    %1490 = vmatpush1.msra.mxu0 %v161
    %1491 = vmatprep.subr.mxu0 0.0
    %1492 = vmatpush1.msra.mxu0 %v158
    %1493 = vmatprep.subr.mxu0 0.0
    %1494 = vmatpush1.msra.mxu0 %v155
    %1495 = vmatprep.subr.mxu0 0.0
    %1496 = vmatpush1.msra.mxu0 %v152
    %1497 = vmatprep.subr.mxu0 0.0
    %1498 = vmatpush1.msra.mxu0 %v149
    %1499 = vmatprep.subr.mxu0 0.0
    %1500 = vmatpush1.msra.mxu0 %v146
    %1501 = vmatprep.subr.mxu0 0.0
    %1502 = vmatpush1.msra.mxu0 %v143
    %1503 = vmatprep.subr.mxu0 0.0
    %1504 = vmatpush1.msra.mxu0 %v140
    %1505 = vmatprep.subr.mxu0 0.0
    %1506 = vmatpush1.msra.mxu0 %v137
    %1507 = vmatprep.subr.mxu0 0.0
    %1508 = vmatpush2.msra.mxu0 0.0
    %1509 = vmatprep.subr.mxu0 0.0
    %1510 = vmatpush2.msra.mxu0 0.0
    %1511 = vmatprep.subr.mxu0 0.0
    %1512 = vmatpush2.msra.mxu0 0.0
    %1513 = vmatprep.subr.mxu0 0.0
    %1514 = vmatpush2.msra.mxu0 0.0
    %1515 = vmatprep.subr.mxu0 0.0
    %1516 = vmatpush2.msra.mxu0 0.0
    %1517 = vmatprep.subr.mxu0 0.0
    %1518 = vmatpush2.msra.mxu0 0.0
    %1519 = vmatprep.subr.mxu0 0.0
    %1520 = vmatpush2.msra.mxu0 0.0
    %1521 = vmatprep.subr.mxu0 0.0
    %1522 = vmatpush2.msra.mxu0 0.0
    %1523 = vmatprep.subr.mxu0 0.0
    %1524 = vmatpush2.msra.mxu0 0.0
    %1525 = vmatprep.subr.mxu0 0.0
    %1526 = vmatpush2.msra.mxu0 0.0
    %1527 = vmatprep.subr.mxu0 0.0
    %1528 = vmatpush2.msra.mxu0 0.0
    %1529 = vmatprep.subr.mxu0 0.0
    %1530 = vmatpush2.msra.mxu0 0.0
    %1531 = vmatprep.subr.mxu0 0.0
    %1532 = vmatpush2.msra.mxu0 0.0
    %1533 = vmatprep.subr.mxu0 0.0
    %1534 = vmatpush2.msra.mxu0 0.0
    %1535 = vmatprep.subr.mxu0 0.0
    %1536 = vmatpush2.msra.mxu0 0.0
    %1537 = vmatprep.subr.mxu0 0.0
    %1538 = vmatpush2.msra.mxu0 0.0
    %1539 = vmatprep.mubr.f32.mxu0 0.0
    %1540 = vmatmul.mubr.f32.gmra.mxu0 %v1254
    %v1541 = vpop.f32.mrf.mxu0
    %v1542 = vadd.f32 0.0, %v1541
    %v1543 = vpop.f32.mrf.mxu0
    %1544 = vdwg.mxu0
    %v1545 = vadd.f32 %v1256, %v1330
    %v1546 = vxor.u32 %v1545, 2147483648
    %v1547 = vmul.f32 %v1546, 1.442695
    %v1548 = vpow.pop %v1547
    %v1549 = vadd.f32 %v1548, 1.0
    %v1550 = vrcp.pop %v1549
    %v1551 = vmul.f32 1.0, %v1550
    %v1552 = vadd.f32 %v1257, %v1332
    %v1553 = vxor.u32 %v1552, 2147483648
    %v1554 = vmul.f32 %v1553, 1.442695
    %v1555 = vpow.pop %v1554
    %v1556 = vadd.f32 %v1555, 1.0
    %v1557 = vrcp.pop %v1556
    %v1558 = vmul.f32 1.0, %v1557
    %v1559 = vadd.f32 %v1401, %v492
    %v1560 = vmul.f32 %v1551, %v1559
    %v1561 = vadd.f32 %v1258, %v1560
    %v1562 = vtanh.pop %v1561
    %v1563 = vsub.f32 1.0, %v1558
    %v1564 = vmul.f32 %v1563, %v1562
    %v1565 = vmul.f32 %v1558, %v1253
    %v1566 = vadd.f32 %v1564, %v1565
    %v1567 = vadd.f32 %v1260, %v1471
    %v1568 = vxor.u32 %v1567, 2147483648
    %v1569 = vmul.f32 %v1568, 1.442695
    %v1570 = vpow.pop %v1569
    %v1571 = vadd.f32 %v1570, 1.0
    %v1572 = vrcp.pop %v1571
    %v1573 = vmul.f32 1.0, %v1572
    %v1574 = vadd.f32 %v1261, %v1473
    %v1575 = vxor.u32 %v1574, 2147483648
    %v1576 = vmul.f32 %v1575, 1.442695
    %v1577 = vpow.pop %v1576
    %v1578 = vadd.f32 %v1577, 1.0
    %v1579 = vrcp.pop %v1578
    %v1580 = vmul.f32 1.0, %v1579
    %v1581 = vadd.f32 %v1542, %v520
    %v1582 = vmul.f32 %v1573, %v1581
    %v1583 = vadd.f32 %v1262, %v1582
    %v1584 = vtanh.pop %v1583
    %v1585 = vsub.f32 1.0, %v1580
    %v1586 = vmul.f32 %v1585, %v1584
    %v1587 = vmul.f32 %v1580, %v1254
    %v1588 = vadd.f32 %v1586, %v1587
    %vm1589 = vcmp.gt.s32.totalorder %v86, 3
    %vm1590 = vcmp.gt.s32.totalorder %v86, 4
    %v1591 = vsel %vm1589, 1, 0
    %1592 = vset.pattern.permute.xlu0 0
    %1593 = vperm.xlu0 %1592, %v1591
    %v1594 = vpop.permute.xlu0 %1593
    %vm1595 = vcmp.eq.s32.totalorder %v1594, 1
    %v1596 = vsel %vm1595, %v1566, 0.0
    %s1597 = scalar_lea.vmem [#allocation10], 24
    %1598 = vst [vmem:[%s1597] sm:$0xff] %v1596
    %v1599 = vsel %vm1590, 1, 0
    %1600 = vset.pattern.permute.xlu0 0
    %1601 = vperm.xlu0 %1600, %v1599
    %v1602 = vpop.permute.xlu0 %1601
    %vm1603 = vcmp.eq.s32.totalorder %v1602, 1
    %v1604 = vsel %vm1603, %v1588, 0.0
    %s1605 = scalar_lea.vmem [#allocation11], 32
    %1606 = vst [vmem:[%s1605] sm:$0xff] %v1604
    %v1607 = vsel %vm1595, %v1566, %v1253
    %v1608 = vsel %vm1603, %v1588, %v1254
    %s1609 = scalar_lea.vmem [#allocation2], 96
    %v1610 = vld [vmem:[%s1609] sm:$0xff]
    %v1611 = vld [vmem:[%s1609 + $0x8] sm:$0xff]
    %v1612 = vld [vmem:[%s1609 + $0x10] sm:$0xff]
    %s1613 = scalar_lea.vmem [#allocation5], 72
    %v1614 = vld [vmem:[%s1613] sm:$0xff]
    %v1615 = vld [vmem:[%s1613 + $0x8] sm:$0xff]
    %v1616 = vld [vmem:[%s1613 + $0x10] sm:$0xff]
    %1617 = vmatprep.subr.mxu0 %v133
    %1618 = vmatpush1.msra.mxu0 %v132
    %1619 = vmatprep.subr.mxu0 %v130
    %1620 = vmatpush1.msra.mxu0 %v129
    %1621 = vmatprep.subr.mxu0 %v127
    %1622 = vmatpush1.msra.mxu0 %v126
    %1623 = vmatprep.subr.mxu0 %v124
    %1624 = vmatpush1.msra.mxu0 %v123
    %1625 = vmatprep.subr.mxu0 %v121
    %1626 = vmatpush1.msra.mxu0 %v120
    %1627 = vmatprep.subr.mxu0 %v118
    %1628 = vmatpush1.msra.mxu0 %v117
    %1629 = vmatprep.subr.mxu0 %v115
    %1630 = vmatpush1.msra.mxu0 %v114
    %1631 = vmatprep.subr.mxu0 %v112
    %1632 = vmatpush1.msra.mxu0 %v111
    %1633 = vmatprep.subr.mxu0 %v109
    %1634 = vmatpush1.msra.mxu0 %v108
    %1635 = vmatprep.subr.mxu0 %v106
    %1636 = vmatpush1.msra.mxu0 %v105
    %1637 = vmatprep.subr.mxu0 %v103
    %1638 = vmatpush1.msra.mxu0 %v102
    %1639 = vmatprep.subr.mxu0 %v100
    %1640 = vmatpush1.msra.mxu0 %v99
    %1641 = vmatprep.subr.mxu0 %v97
    %1642 = vmatpush1.msra.mxu0 %v96
    %1643 = vmatprep.subr.mxu0 %v94
    %1644 = vmatpush1.msra.mxu0 %v93
    %1645 = vmatprep.subr.mxu0 %v91
    %1646 = vmatpush1.msra.mxu0 %v90
    %1647 = vmatprep.subr.mxu0 %v88
    %1648 = vmatpush1.msra.mxu0 %v87
    %1649 = vmatprep.subr.mxu0 0.0
    %1650 = vmatpush2.msra.mxu0 0.0
    %1651 = vmatprep.subr.mxu0 0.0
    %1652 = vmatpush2.msra.mxu0 0.0
    %1653 = vmatprep.subr.mxu0 0.0
    %1654 = vmatpush2.msra.mxu0 0.0
    %1655 = vmatprep.subr.mxu0 0.0
    %1656 = vmatpush2.msra.mxu0 0.0
    %1657 = vmatprep.subr.mxu0 0.0
    %1658 = vmatpush2.msra.mxu0 0.0
    %1659 = vmatprep.subr.mxu0 0.0
    %1660 = vmatpush2.msra.mxu0 0.0
    %1661 = vmatprep.subr.mxu0 0.0
    %1662 = vmatpush2.msra.mxu0 0.0
    %1663 = vmatprep.subr.mxu0 0.0
    %1664 = vmatpush2.msra.mxu0 0.0
    %1665 = vmatprep.subr.mxu0 0.0
    %1666 = vmatpush2.msra.mxu0 0.0
    %1667 = vmatprep.subr.mxu0 0.0
    %1668 = vmatpush2.msra.mxu0 0.0
    %1669 = vmatprep.subr.mxu0 0.0
    %1670 = vmatpush2.msra.mxu0 0.0
    %1671 = vmatprep.subr.mxu0 0.0
    %1672 = vmatpush2.msra.mxu0 0.0
    %1673 = vmatprep.subr.mxu0 0.0
    %1674 = vmatpush2.msra.mxu0 0.0
    %1675 = vmatprep.subr.mxu0 0.0
    %1676 = vmatpush2.msra.mxu0 0.0
    %1677 = vmatprep.subr.mxu0 0.0
    %1678 = vmatpush2.msra.mxu0 0.0
    %1679 = vmatprep.subr.mxu0 0.0
    %1680 = vmatpush2.msra.mxu0 0.0
    %1681 = vmatprep.mubr.f32.mxu0 0.0
    %1682 = vmatmul.mubr.f32.gmra.mxu0 %v1607
    %v1683 = vpop.f32.mrf.mxu0
    %v1684 = vadd.f32 0.0, %v1683
    %v1685 = vpop.f32.mrf.mxu0
    %v1686 = vadd.f32 0.0, %v1685
    %1687 = vdwg.mxu0
    %1688 = vmatprep.subr.mxu0 0.0
    %1689 = vmatpush1.msra.mxu0 %v134
    %1690 = vmatprep.subr.mxu0 0.0
    %1691 = vmatpush1.msra.mxu0 %v131
    %1692 = vmatprep.subr.mxu0 0.0
    %1693 = vmatpush1.msra.mxu0 %v128
    %1694 = vmatprep.subr.mxu0 0.0
    %1695 = vmatpush1.msra.mxu0 %v125
    %1696 = vmatprep.subr.mxu0 0.0
    %1697 = vmatpush1.msra.mxu0 %v122
    %1698 = vmatprep.subr.mxu0 0.0
    %1699 = vmatpush1.msra.mxu0 %v119
    %1700 = vmatprep.subr.mxu0 0.0
    %1701 = vmatpush1.msra.mxu0 %v116
    %1702 = vmatprep.subr.mxu0 0.0
    %1703 = vmatpush1.msra.mxu0 %v113
    %1704 = vmatprep.subr.mxu0 0.0
    %1705 = vmatpush1.msra.mxu0 %v110
    %1706 = vmatprep.subr.mxu0 0.0
    %1707 = vmatpush1.msra.mxu0 %v107
    %1708 = vmatprep.subr.mxu0 0.0
    %1709 = vmatpush1.msra.mxu0 %v104
    %1710 = vmatprep.subr.mxu0 0.0
    %1711 = vmatpush1.msra.mxu0 %v101
    %1712 = vmatprep.subr.mxu0 0.0
    %1713 = vmatpush1.msra.mxu0 %v98
    %1714 = vmatprep.subr.mxu0 0.0
    %1715 = vmatpush1.msra.mxu0 %v95
    %1716 = vmatprep.subr.mxu0 0.0
    %1717 = vmatpush1.msra.mxu0 %v92
    %1718 = vmatprep.subr.mxu0 0.0
    %1719 = vmatpush1.msra.mxu0 %v89
    %1720 = vmatprep.subr.mxu0 0.0
    %1721 = vmatpush2.msra.mxu0 0.0
    %1722 = vmatprep.subr.mxu0 0.0
    %1723 = vmatpush2.msra.mxu0 0.0
    %1724 = vmatprep.subr.mxu0 0.0
    %1725 = vmatpush2.msra.mxu0 0.0
    %1726 = vmatprep.subr.mxu0 0.0
    %1727 = vmatpush2.msra.mxu0 0.0
    %1728 = vmatprep.subr.mxu0 0.0
    %1729 = vmatpush2.msra.mxu0 0.0
    %1730 = vmatprep.subr.mxu0 0.0
    %1731 = vmatpush2.msra.mxu0 0.0
    %1732 = vmatprep.subr.mxu0 0.0
    %1733 = vmatpush2.msra.mxu0 0.0
    %1734 = vmatprep.subr.mxu0 0.0
    %1735 = vmatpush2.msra.mxu0 0.0
    %1736 = vmatprep.subr.mxu0 0.0
    %1737 = vmatpush2.msra.mxu0 0.0
    %1738 = vmatprep.subr.mxu0 0.0
    %1739 = vmatpush2.msra.mxu0 0.0
    %1740 = vmatprep.subr.mxu0 0.0
    %1741 = vmatpush2.msra.mxu0 0.0
    %1742 = vmatprep.subr.mxu0 0.0
    %1743 = vmatpush2.msra.mxu0 0.0
    %1744 = vmatprep.subr.mxu0 0.0
    %1745 = vmatpush2.msra.mxu0 0.0
    %1746 = vmatprep.subr.mxu0 0.0
    %1747 = vmatpush2.msra.mxu0 0.0
    %1748 = vmatprep.subr.mxu0 0.0
    %1749 = vmatpush2.msra.mxu0 0.0
    %1750 = vmatprep.subr.mxu0 0.0
    %1751 = vmatpush2.msra.mxu0 0.0
    %1752 = vmatprep.mubr.f32.mxu0 0.0
    %1753 = vmatmul.mubr.f32.gmra.mxu0 %v1607
    %v1754 = vpop.f32.mrf.mxu0
    %v1755 = vadd.f32 0.0, %v1754
    %v1756 = vpop.f32.mrf.mxu0
    %1757 = vdwg.mxu0
    %1758 = vmatprep.subr.mxu0 %v181
    %1759 = vmatpush1.msra.mxu0 %v180
    %1760 = vmatprep.subr.mxu0 %v178
    %1761 = vmatpush1.msra.mxu0 %v177
    %1762 = vmatprep.subr.mxu0 %v175
    %1763 = vmatpush1.msra.mxu0 %v174
    %1764 = vmatprep.subr.mxu0 %v172
    %1765 = vmatpush1.msra.mxu0 %v171
    %1766 = vmatprep.subr.mxu0 %v169
    %1767 = vmatpush1.msra.mxu0 %v168
    %1768 = vmatprep.subr.mxu0 %v166
    %1769 = vmatpush1.msra.mxu0 %v165
    %1770 = vmatprep.subr.mxu0 %v163
    %1771 = vmatpush1.msra.mxu0 %v162
    %1772 = vmatprep.subr.mxu0 %v160
    %1773 = vmatpush1.msra.mxu0 %v159
    %1774 = vmatprep.subr.mxu0 %v157
    %1775 = vmatpush1.msra.mxu0 %v156
    %1776 = vmatprep.subr.mxu0 %v154
    %1777 = vmatpush1.msra.mxu0 %v153
    %1778 = vmatprep.subr.mxu0 %v151
    %1779 = vmatpush1.msra.mxu0 %v150
    %1780 = vmatprep.subr.mxu0 %v148
    %1781 = vmatpush1.msra.mxu0 %v147
    %1782 = vmatprep.subr.mxu0 %v145
    %1783 = vmatpush1.msra.mxu0 %v144
    %1784 = vmatprep.subr.mxu0 %v142
    %1785 = vmatpush1.msra.mxu0 %v141
    %1786 = vmatprep.subr.mxu0 %v139
    %1787 = vmatpush1.msra.mxu0 %v138
    %1788 = vmatprep.subr.mxu0 %v136
    %1789 = vmatpush1.msra.mxu0 %v135
    %1790 = vmatprep.subr.mxu0 0.0
    %1791 = vmatpush2.msra.mxu0 0.0
    %1792 = vmatprep.subr.mxu0 0.0
    %1793 = vmatpush2.msra.mxu0 0.0
    %1794 = vmatprep.subr.mxu0 0.0
    %1795 = vmatpush2.msra.mxu0 0.0
    %1796 = vmatprep.subr.mxu0 0.0
    %1797 = vmatpush2.msra.mxu0 0.0
    %1798 = vmatprep.subr.mxu0 0.0
    %1799 = vmatpush2.msra.mxu0 0.0
    %1800 = vmatprep.subr.mxu0 0.0
    %1801 = vmatpush2.msra.mxu0 0.0
    %1802 = vmatprep.subr.mxu0 0.0
    %1803 = vmatpush2.msra.mxu0 0.0
    %1804 = vmatprep.subr.mxu0 0.0
    %1805 = vmatpush2.msra.mxu0 0.0
    %1806 = vmatprep.subr.mxu0 0.0
    %1807 = vmatpush2.msra.mxu0 0.0
    %1808 = vmatprep.subr.mxu0 0.0
    %1809 = vmatpush2.msra.mxu0 0.0
    %1810 = vmatprep.subr.mxu0 0.0
    %1811 = vmatpush2.msra.mxu0 0.0
    %1812 = vmatprep.subr.mxu0 0.0
    %1813 = vmatpush2.msra.mxu0 0.0
    %1814 = vmatprep.subr.mxu0 0.0
    %1815 = vmatpush2.msra.mxu0 0.0
    %1816 = vmatprep.subr.mxu0 0.0
    %1817 = vmatpush2.msra.mxu0 0.0
    %1818 = vmatprep.subr.mxu0 0.0
    %1819 = vmatpush2.msra.mxu0 0.0
    %1820 = vmatprep.subr.mxu0 0.0
    %1821 = vmatpush2.msra.mxu0 0.0
    %1822 = vmatprep.mubr.f32.mxu0 0.0
    %1823 = vmatmul.mubr.f32.gmra.mxu0 %v1608
    %v1824 = vpop.f32.mrf.mxu0
    %v1825 = vadd.f32 0.0, %v1824
    %v1826 = vpop.f32.mrf.mxu0
    %v1827 = vadd.f32 0.0, %v1826
    %1828 = vdwg.mxu0
    %1829 = vmatprep.subr.mxu0 0.0
    %1830 = vmatpush1.msra.mxu0 %v182
    %1831 = vmatprep.subr.mxu0 0.0
    %1832 = vmatpush1.msra.mxu0 %v179
    %1833 = vmatprep.subr.mxu0 0.0
    %1834 = vmatpush1.msra.mxu0 %v176
    %1835 = vmatprep.subr.mxu0 0.0
    %1836 = vmatpush1.msra.mxu0 %v173
    %1837 = vmatprep.subr.mxu0 0.0
    %1838 = vmatpush1.msra.mxu0 %v170
    %1839 = vmatprep.subr.mxu0 0.0
    %1840 = vmatpush1.msra.mxu0 %v167
    %1841 = vmatprep.subr.mxu0 0.0
    %1842 = vmatpush1.msra.mxu0 %v164
    %1843 = vmatprep.subr.mxu0 0.0
    %1844 = vmatpush1.msra.mxu0 %v161
    %1845 = vmatprep.subr.mxu0 0.0
    %1846 = vmatpush1.msra.mxu0 %v158
    %1847 = vmatprep.subr.mxu0 0.0
    %1848 = vmatpush1.msra.mxu0 %v155
    %1849 = vmatprep.subr.mxu0 0.0
    %1850 = vmatpush1.msra.mxu0 %v152
    %1851 = vmatprep.subr.mxu0 0.0
    %1852 = vmatpush1.msra.mxu0 %v149
    %1853 = vmatprep.subr.mxu0 0.0
    %1854 = vmatpush1.msra.mxu0 %v146
    %1855 = vmatprep.subr.mxu0 0.0
    %1856 = vmatpush1.msra.mxu0 %v143
    %1857 = vmatprep.subr.mxu0 0.0
    %1858 = vmatpush1.msra.mxu0 %v140
    %1859 = vmatprep.subr.mxu0 0.0
    %1860 = vmatpush1.msra.mxu0 %v137
    %1861 = vmatprep.subr.mxu0 0.0
    %1862 = vmatpush2.msra.mxu0 0.0
    %1863 = vmatprep.subr.mxu0 0.0
    %1864 = vmatpush2.msra.mxu0 0.0
    %1865 = vmatprep.subr.mxu0 0.0
    %1866 = vmatpush2.msra.mxu0 0.0
    %1867 = vmatprep.subr.mxu0 0.0
    %1868 = vmatpush2.msra.mxu0 0.0
    %1869 = vmatprep.subr.mxu0 0.0
    %1870 = vmatpush2.msra.mxu0 0.0
    %1871 = vmatprep.subr.mxu0 0.0
    %1872 = vmatpush2.msra.mxu0 0.0
    %1873 = vmatprep.subr.mxu0 0.0
    %1874 = vmatpush2.msra.mxu0 0.0
    %1875 = vmatprep.subr.mxu0 0.0
    %1876 = vmatpush2.msra.mxu0 0.0
    %1877 = vmatprep.subr.mxu0 0.0
    %1878 = vmatpush2.msra.mxu0 0.0
    %1879 = vmatprep.subr.mxu0 0.0
    %1880 = vmatpush2.msra.mxu0 0.0
    %1881 = vmatprep.subr.mxu0 0.0
    %1882 = vmatpush2.msra.mxu0 0.0
    %1883 = vmatprep.subr.mxu0 0.0
    %1884 = vmatpush2.msra.mxu0 0.0
    %1885 = vmatprep.subr.mxu0 0.0
    %1886 = vmatpush2.msra.mxu0 0.0
    %1887 = vmatprep.subr.mxu0 0.0
    %1888 = vmatpush2.msra.mxu0 0.0
    %1889 = vmatprep.subr.mxu0 0.0
    %1890 = vmatpush2.msra.mxu0 0.0
    %1891 = vmatprep.subr.mxu0 0.0
    %1892 = vmatpush2.msra.mxu0 0.0
    %1893 = vmatprep.mubr.f32.mxu0 0.0
    %1894 = vmatmul.mubr.f32.gmra.mxu0 %v1608
    %v1895 = vpop.f32.mrf.mxu0
    %v1896 = vadd.f32 0.0, %v1895
    %v1897 = vpop.f32.mrf.mxu0
    %1898 = vdwg.mxu0
    %v1899 = vadd.f32 %v1610, %v1684
    %v1900 = vxor.u32 %v1899, 2147483648
    %v1901 = vmul.f32 %v1900, 1.442695
    %v1902 = vpow.pop %v1901
    %v1903 = vadd.f32 %v1902, 1.0
    %v1904 = vrcp.pop %v1903
    %v1905 = vmul.f32 1.0, %v1904
    %v1906 = vadd.f32 %v1611, %v1686
    %v1907 = vxor.u32 %v1906, 2147483648
    %v1908 = vmul.f32 %v1907, 1.442695
    %v1909 = vpow.pop %v1908
    %v1910 = vadd.f32 %v1909, 1.0
    %v1911 = vrcp.pop %v1910
    %v1912 = vmul.f32 1.0, %v1911
    %v1913 = vadd.f32 %v1755, %v492
    %v1914 = vmul.f32 %v1905, %v1913
    %v1915 = vadd.f32 %v1612, %v1914
    %v1916 = vtanh.pop %v1915
    %v1917 = vsub.f32 1.0, %v1912
    %v1918 = vmul.f32 %v1917, %v1916
    %v1919 = vmul.f32 %v1912, %v1607
    %v1920 = vadd.f32 %v1918, %v1919
    %v1921 = vadd.f32 %v1614, %v1825
    %v1922 = vxor.u32 %v1921, 2147483648
    %v1923 = vmul.f32 %v1922, 1.442695
    %v1924 = vpow.pop %v1923
    %v1925 = vadd.f32 %v1924, 1.0
    %v1926 = vrcp.pop %v1925
    %v1927 = vmul.f32 1.0, %v1926
    %v1928 = vadd.f32 %v1615, %v1827
    %v1929 = vxor.u32 %v1928, 2147483648
    %v1930 = vmul.f32 %v1929, 1.442695
    %v1931 = vpow.pop %v1930
    %v1932 = vadd.f32 %v1931, 1.0
    %v1933 = vrcp.pop %v1932
    %v1934 = vmul.f32 1.0, %v1933
    %v1935 = vadd.f32 %v1896, %v520
    %v1936 = vmul.f32 %v1927, %v1935
    %v1937 = vadd.f32 %v1616, %v1936
    %v1938 = vtanh.pop %v1937
    %v1939 = vsub.f32 1.0, %v1934
    %v1940 = vmul.f32 %v1939, %v1938
    %v1941 = vmul.f32 %v1934, %v1608
    %v1942 = vadd.f32 %v1940, %v1941
    %v1943 = vsel %vm1603, %v1920, 0.0
    %s1944 = scalar_lea.vmem [#allocation10], 32
    %1945 = vst [vmem:[%s1944] sm:$0xff] %v1943
    %v1946 = vsel %vm1595, %v1942, 0.0
    %s1947 = scalar_lea.vmem [#allocation11], 24
    %1948 = vst [vmem:[%s1947] sm:$0xff] %v1946
    %v1949 = vsel %vm1603, %v1920, %v1607
    %v1950 = vsel %vm1595, %v1942, %v1608
    %s1951 = scalar_lea.vmem [#allocation2], 120
    %v1952 = vld [vmem:[%s1951] sm:$0xff]
    %v1953 = vld [vmem:[%s1951 + $0x8] sm:$0xff]
    %v1954 = vld [vmem:[%s1951 + $0x10] sm:$0xff]
    %s1955 = scalar_lea.vmem [#allocation5], 48
    %v1956 = vld [vmem:[%s1955] sm:$0xff]
    %v1957 = vld [vmem:[%s1955 + $0x8] sm:$0xff]
    %v1958 = vld [vmem:[%s1955 + $0x10] sm:$0xff]
    %1959 = vmatprep.subr.mxu0 %v133
    %1960 = vmatpush1.msra.mxu0 %v132
    %1961 = vmatprep.subr.mxu0 %v130
    %1962 = vmatpush1.msra.mxu0 %v129
    %1963 = vmatprep.subr.mxu0 %v127
    %1964 = vmatpush1.msra.mxu0 %v126
    %1965 = vmatprep.subr.mxu0 %v124
    %1966 = vmatpush1.msra.mxu0 %v123
    %1967 = vmatprep.subr.mxu0 %v121
    %1968 = vmatpush1.msra.mxu0 %v120
    %1969 = vmatprep.subr.mxu0 %v118
    %1970 = vmatpush1.msra.mxu0 %v117
    %1971 = vmatprep.subr.mxu0 %v115
    %1972 = vmatpush1.msra.mxu0 %v114
    %1973 = vmatprep.subr.mxu0 %v112
    %1974 = vmatpush1.msra.mxu0 %v111
    %1975 = vmatprep.subr.mxu0 %v109
    %1976 = vmatpush1.msra.mxu0 %v108
    %1977 = vmatprep.subr.mxu0 %v106
    %1978 = vmatpush1.msra.mxu0 %v105
    %1979 = vmatprep.subr.mxu0 %v103
    %1980 = vmatpush1.msra.mxu0 %v102
    %1981 = vmatprep.subr.mxu0 %v100
    %1982 = vmatpush1.msra.mxu0 %v99
    %1983 = vmatprep.subr.mxu0 %v97
    %1984 = vmatpush1.msra.mxu0 %v96
    %1985 = vmatprep.subr.mxu0 %v94
    %1986 = vmatpush1.msra.mxu0 %v93
    %1987 = vmatprep.subr.mxu0 %v91
    %1988 = vmatpush1.msra.mxu0 %v90
    %1989 = vmatprep.subr.mxu0 %v88
    %1990 = vmatpush1.msra.mxu0 %v87
    %1991 = vmatprep.subr.mxu0 0.0
    %1992 = vmatpush2.msra.mxu0 0.0
    %1993 = vmatprep.subr.mxu0 0.0
    %1994 = vmatpush2.msra.mxu0 0.0
    %1995 = vmatprep.subr.mxu0 0.0
    %1996 = vmatpush2.msra.mxu0 0.0
    %1997 = vmatprep.subr.mxu0 0.0
    %1998 = vmatpush2.msra.mxu0 0.0
    %1999 = vmatprep.subr.mxu0 0.0
    %2000 = vmatpush2.msra.mxu0 0.0
    %2001 = vmatprep.subr.mxu0 0.0
    %2002 = vmatpush2.msra.mxu0 0.0
    %2003 = vmatprep.subr.mxu0 0.0
    %2004 = vmatpush2.msra.mxu0 0.0
    %2005 = vmatprep.subr.mxu0 0.0
    %2006 = vmatpush2.msra.mxu0 0.0
    %2007 = vmatprep.subr.mxu0 0.0
    %2008 = vmatpush2.msra.mxu0 0.0
    %2009 = vmatprep.subr.mxu0 0.0
    %2010 = vmatpush2.msra.mxu0 0.0
    %2011 = vmatprep.subr.mxu0 0.0
    %2012 = vmatpush2.msra.mxu0 0.0
    %2013 = vmatprep.subr.mxu0 0.0
    %2014 = vmatpush2.msra.mxu0 0.0
    %2015 = vmatprep.subr.mxu0 0.0
    %2016 = vmatpush2.msra.mxu0 0.0
    %2017 = vmatprep.subr.mxu0 0.0
    %2018 = vmatpush2.msra.mxu0 0.0
    %2019 = vmatprep.subr.mxu0 0.0
    %2020 = vmatpush2.msra.mxu0 0.0
    %2021 = vmatprep.subr.mxu0 0.0
    %2022 = vmatpush2.msra.mxu0 0.0
    %2023 = vmatprep.mubr.f32.mxu0 0.0
    %2024 = vmatmul.mubr.f32.gmra.mxu0 %v1949
    %v2025 = vpop.f32.mrf.mxu0
    %v2026 = vadd.f32 0.0, %v2025
    %v2027 = vpop.f32.mrf.mxu0
    %v2028 = vadd.f32 0.0, %v2027
    %2029 = vdwg.mxu0
    %2030 = vmatprep.subr.mxu0 0.0
    %2031 = vmatpush1.msra.mxu0 %v134
    %2032 = vmatprep.subr.mxu0 0.0
    %2033 = vmatpush1.msra.mxu0 %v131
    %2034 = vmatprep.subr.mxu0 0.0
    %2035 = vmatpush1.msra.mxu0 %v128
    %2036 = vmatprep.subr.mxu0 0.0
    %2037 = vmatpush1.msra.mxu0 %v125
    %2038 = vmatprep.subr.mxu0 0.0
    %2039 = vmatpush1.msra.mxu0 %v122
    %2040 = vmatprep.subr.mxu0 0.0
    %2041 = vmatpush1.msra.mxu0 %v119
    %2042 = vmatprep.subr.mxu0 0.0
    %2043 = vmatpush1.msra.mxu0 %v116
    %2044 = vmatprep.subr.mxu0 0.0
    %2045 = vmatpush1.msra.mxu0 %v113
    %2046 = vmatprep.subr.mxu0 0.0
    %2047 = vmatpush1.msra.mxu0 %v110
    %2048 = vmatprep.subr.mxu0 0.0
    %2049 = vmatpush1.msra.mxu0 %v107
    %2050 = vmatprep.subr.mxu0 0.0
    %2051 = vmatpush1.msra.mxu0 %v104
    %2052 = vmatprep.subr.mxu0 0.0
    %2053 = vmatpush1.msra.mxu0 %v101
    %2054 = vmatprep.subr.mxu0 0.0
    %2055 = vmatpush1.msra.mxu0 %v98
    %2056 = vmatprep.subr.mxu0 0.0
    %2057 = vmatpush1.msra.mxu0 %v95
    %2058 = vmatprep.subr.mxu0 0.0
    %2059 = vmatpush1.msra.mxu0 %v92
    %2060 = vmatprep.subr.mxu0 0.0
    %2061 = vmatpush1.msra.mxu0 %v89
    %2062 = vmatprep.subr.mxu0 0.0
    %2063 = vmatpush2.msra.mxu0 0.0
    %2064 = vmatprep.subr.mxu0 0.0
    %2065 = vmatpush2.msra.mxu0 0.0
    %2066 = vmatprep.subr.mxu0 0.0
    %2067 = vmatpush2.msra.mxu0 0.0
    %2068 = vmatprep.subr.mxu0 0.0
    %2069 = vmatpush2.msra.mxu0 0.0
    %2070 = vmatprep.subr.mxu0 0.0
    %2071 = vmatpush2.msra.mxu0 0.0
    %2072 = vmatprep.subr.mxu0 0.0
    %2073 = vmatpush2.msra.mxu0 0.0
    %2074 = vmatprep.subr.mxu0 0.0
    %2075 = vmatpush2.msra.mxu0 0.0
    %2076 = vmatprep.subr.mxu0 0.0
    %2077 = vmatpush2.msra.mxu0 0.0
    %2078 = vmatprep.subr.mxu0 0.0
    %2079 = vmatpush2.msra.mxu0 0.0
    %2080 = vmatprep.subr.mxu0 0.0
    %2081 = vmatpush2.msra.mxu0 0.0
    %2082 = vmatprep.subr.mxu0 0.0
    %2083 = vmatpush2.msra.mxu0 0.0
    %2084 = vmatprep.subr.mxu0 0.0
    %2085 = vmatpush2.msra.mxu0 0.0
    %2086 = vmatprep.subr.mxu0 0.0
    %2087 = vmatpush2.msra.mxu0 0.0
    %2088 = vmatprep.subr.mxu0 0.0
    %2089 = vmatpush2.msra.mxu0 0.0
    %2090 = vmatprep.subr.mxu0 0.0
    %2091 = vmatpush2.msra.mxu0 0.0
    %2092 = vmatprep.subr.mxu0 0.0
    %2093 = vmatpush2.msra.mxu0 0.0
    %2094 = vmatprep.mubr.f32.mxu0 0.0
    %2095 = vmatmul.mubr.f32.gmra.mxu0 %v1949
    %v2096 = vpop.f32.mrf.mxu0
    %v2097 = vadd.f32 0.0, %v2096
    %v2098 = vpop.f32.mrf.mxu0
    %2099 = vdwg.mxu0
    %2100 = vmatprep.subr.mxu0 %v181
    %2101 = vmatpush1.msra.mxu0 %v180
    %2102 = vmatprep.subr.mxu0 %v178
    %2103 = vmatpush1.msra.mxu0 %v177
    %2104 = vmatprep.subr.mxu0 %v175
    %2105 = vmatpush1.msra.mxu0 %v174
    %2106 = vmatprep.subr.mxu0 %v172
    %2107 = vmatpush1.msra.mxu0 %v171
    %2108 = vmatprep.subr.mxu0 %v169
    %2109 = vmatpush1.msra.mxu0 %v168
    %2110 = vmatprep.subr.mxu0 %v166
    %2111 = vmatpush1.msra.mxu0 %v165
    %2112 = vmatprep.subr.mxu0 %v163
    %2113 = vmatpush1.msra.mxu0 %v162
    %2114 = vmatprep.subr.mxu0 %v160
    %2115 = vmatpush1.msra.mxu0 %v159
    %2116 = vmatprep.subr.mxu0 %v157
    %2117 = vmatpush1.msra.mxu0 %v156
    %2118 = vmatprep.subr.mxu0 %v154
    %2119 = vmatpush1.msra.mxu0 %v153
    %2120 = vmatprep.subr.mxu0 %v151
    %2121 = vmatpush1.msra.mxu0 %v150
    %2122 = vmatprep.subr.mxu0 %v148
    %2123 = vmatpush1.msra.mxu0 %v147
    %2124 = vmatprep.subr.mxu0 %v145
    %2125 = vmatpush1.msra.mxu0 %v144
    %2126 = vmatprep.subr.mxu0 %v142
    %2127 = vmatpush1.msra.mxu0 %v141
    %2128 = vmatprep.subr.mxu0 %v139
    %2129 = vmatpush1.msra.mxu0 %v138
    %2130 = vmatprep.subr.mxu0 %v136
    %2131 = vmatpush1.msra.mxu0 %v135
    %2132 = vmatprep.subr.mxu0 0.0
    %2133 = vmatpush2.msra.mxu0 0.0
    %2134 = vmatprep.subr.mxu0 0.0
    %2135 = vmatpush2.msra.mxu0 0.0
    %2136 = vmatprep.subr.mxu0 0.0
    %2137 = vmatpush2.msra.mxu0 0.0
    %2138 = vmatprep.subr.mxu0 0.0
    %2139 = vmatpush2.msra.mxu0 0.0
    %2140 = vmatprep.subr.mxu0 0.0
    %2141 = vmatpush2.msra.mxu0 0.0
    %2142 = vmatprep.subr.mxu0 0.0
    %2143 = vmatpush2.msra.mxu0 0.0
    %2144 = vmatprep.subr.mxu0 0.0
    %2145 = vmatpush2.msra.mxu0 0.0
    %2146 = vmatprep.subr.mxu0 0.0
    %2147 = vmatpush2.msra.mxu0 0.0
    %2148 = vmatprep.subr.mxu0 0.0
    %2149 = vmatpush2.msra.mxu0 0.0
    %2150 = vmatprep.subr.mxu0 0.0
    %2151 = vmatpush2.msra.mxu0 0.0
    %2152 = vmatprep.subr.mxu0 0.0
    %2153 = vmatpush2.msra.mxu0 0.0
    %2154 = vmatprep.subr.mxu0 0.0
    %2155 = vmatpush2.msra.mxu0 0.0
    %2156 = vmatprep.subr.mxu0 0.0
    %2157 = vmatpush2.msra.mxu0 0.0
    %2158 = vmatprep.subr.mxu0 0.0
    %2159 = vmatpush2.msra.mxu0 0.0
    %2160 = vmatprep.subr.mxu0 0.0
    %2161 = vmatpush2.msra.mxu0 0.0
    %2162 = vmatprep.subr.mxu0 0.0
    %2163 = vmatpush2.msra.mxu0 0.0
    %2164 = vmatprep.mubr.f32.mxu0 0.0
    %2165 = vmatmul.mubr.f32.gmra.mxu0 %v1950
    %v2166 = vpop.f32.mrf.mxu0
    %v2167 = vadd.f32 0.0, %v2166
    %v2168 = vpop.f32.mrf.mxu0
    %v2169 = vadd.f32 0.0, %v2168
    %2170 = vdwg.mxu0
    %2171 = vmatprep.subr.mxu0 0.0
    %2172 = vmatpush1.msra.mxu0 %v182
    %2173 = vmatprep.subr.mxu0 0.0
    %2174 = vmatpush1.msra.mxu0 %v179
    %2175 = vmatprep.subr.mxu0 0.0
    %2176 = vmatpush1.msra.mxu0 %v176
    %2177 = vmatprep.subr.mxu0 0.0
    %2178 = vmatpush1.msra.mxu0 %v173
    %2179 = vmatprep.subr.mxu0 0.0
    %2180 = vmatpush1.msra.mxu0 %v170
    %2181 = vmatprep.subr.mxu0 0.0
    %2182 = vmatpush1.msra.mxu0 %v167
    %2183 = vmatprep.subr.mxu0 0.0
    %2184 = vmatpush1.msra.mxu0 %v164
    %2185 = vmatprep.subr.mxu0 0.0
    %2186 = vmatpush1.msra.mxu0 %v161
    %2187 = vmatprep.subr.mxu0 0.0
    %2188 = vmatpush1.msra.mxu0 %v158
    %2189 = vmatprep.subr.mxu0 0.0
    %2190 = vmatpush1.msra.mxu0 %v155
    %2191 = vmatprep.subr.mxu0 0.0
    %2192 = vmatpush1.msra.mxu0 %v152
    %2193 = vmatprep.subr.mxu0 0.0
    %2194 = vmatpush1.msra.mxu0 %v149
    %2195 = vmatprep.subr.mxu0 0.0
    %2196 = vmatpush1.msra.mxu0 %v146
    %2197 = vmatprep.subr.mxu0 0.0
    %2198 = vmatpush1.msra.mxu0 %v143
    %2199 = vmatprep.subr.mxu0 0.0
    %2200 = vmatpush1.msra.mxu0 %v140
    %2201 = vmatprep.subr.mxu0 0.0
    %2202 = vmatpush1.msra.mxu0 %v137
    %2203 = vmatprep.subr.mxu0 0.0
    %2204 = vmatpush2.msra.mxu0 0.0
    %2205 = vmatprep.subr.mxu0 0.0
    %2206 = vmatpush2.msra.mxu0 0.0
    %2207 = vmatprep.subr.mxu0 0.0
    %2208 = vmatpush2.msra.mxu0 0.0
    %2209 = vmatprep.subr.mxu0 0.0
    %2210 = vmatpush2.msra.mxu0 0.0
    %2211 = vmatprep.subr.mxu0 0.0
    %2212 = vmatpush2.msra.mxu0 0.0
    %2213 = vmatprep.subr.mxu0 0.0
    %2214 = vmatpush2.msra.mxu0 0.0
    %2215 = vmatprep.subr.mxu0 0.0
    %2216 = vmatpush2.msra.mxu0 0.0
    %2217 = vmatprep.subr.mxu0 0.0
    %2218 = vmatpush2.msra.mxu0 0.0
    %2219 = vmatprep.subr.mxu0 0.0
    %2220 = vmatpush2.msra.mxu0 0.0
    %2221 = vmatprep.subr.mxu0 0.0
    %2222 = vmatpush2.msra.mxu0 0.0
    %2223 = vmatprep.subr.mxu0 0.0
    %2224 = vmatpush2.msra.mxu0 0.0
    %2225 = vmatprep.subr.mxu0 0.0
    %2226 = vmatpush2.msra.mxu0 0.0
    %2227 = vmatprep.subr.mxu0 0.0
    %2228 = vmatpush2.msra.mxu0 0.0
    %2229 = vmatprep.subr.mxu0 0.0
    %2230 = vmatpush2.msra.mxu0 0.0
    %2231 = vmatprep.subr.mxu0 0.0
    %2232 = vmatpush2.msra.mxu0 0.0
    %2233 = vmatprep.subr.mxu0 0.0
    %2234 = vmatpush2.msra.mxu0 0.0
    %2235 = vmatprep.mubr.f32.mxu0 0.0
    %2236 = vmatmul.mubr.f32.gmra.mxu0 %v1950
    %v2237 = vpop.f32.mrf.mxu0
    %v2238 = vadd.f32 0.0, %v2237
    %v2239 = vpop.f32.mrf.mxu0
    %2240 = vdwg.mxu0
    %v2241 = vadd.f32 %v1952, %v2026
    %v2242 = vxor.u32 %v2241, 2147483648
    %v2243 = vmul.f32 %v2242, 1.442695
    %v2244 = vpow.pop %v2243
    %v2245 = vadd.f32 %v2244, 1.0
    %v2246 = vrcp.pop %v2245
    %v2247 = vmul.f32 1.0, %v2246
    %v2248 = vadd.f32 %v1953, %v2028
    %v2249 = vxor.u32 %v2248, 2147483648
    %v2250 = vmul.f32 %v2249, 1.442695
    %v2251 = vpow.pop %v2250
    %v2252 = vadd.f32 %v2251, 1.0
    %v2253 = vrcp.pop %v2252
    %v2254 = vmul.f32 1.0, %v2253
    %v2255 = vadd.f32 %v2097, %v492
    %v2256 = vmul.f32 %v2247, %v2255
    %v2257 = vadd.f32 %v1954, %v2256
    %v2258 = vtanh.pop %v2257
    %v2259 = vsub.f32 1.0, %v2254
    %v2260 = vmul.f32 %v2259, %v2258
    %v2261 = vmul.f32 %v2254, %v1949
    %v2262 = vadd.f32 %v2260, %v2261
    %v2263 = vadd.f32 %v1956, %v2167
    %v2264 = vxor.u32 %v2263, 2147483648
    %v2265 = vmul.f32 %v2264, 1.442695
    %v2266 = vpow.pop %v2265
    %v2267 = vadd.f32 %v2266, 1.0
    %v2268 = vrcp.pop %v2267
    %v2269 = vmul.f32 1.0, %v2268
    %v2270 = vadd.f32 %v1957, %v2169
    %v2271 = vxor.u32 %v2270, 2147483648
    %v2272 = vmul.f32 %v2271, 1.442695
    %v2273 = vpow.pop %v2272
    %v2274 = vadd.f32 %v2273, 1.0
    %v2275 = vrcp.pop %v2274
    %v2276 = vmul.f32 1.0, %v2275
    %v2277 = vadd.f32 %v2238, %v520
    %v2278 = vmul.f32 %v2269, %v2277
    %v2279 = vadd.f32 %v1958, %v2278
    %v2280 = vtanh.pop %v2279
    %v2281 = vsub.f32 1.0, %v2276
    %v2282 = vmul.f32 %v2281, %v2280
    %v2283 = vmul.f32 %v2276, %v1950
    %v2284 = vadd.f32 %v2282, %v2283
    %v2285 = vsel %vm1249, %v2262, 0.0
    %s2286 = scalar_lea.vmem [#allocation10], 40
    %2287 = vst [vmem:[%s2286] sm:$0xff] %v2285
    %v2288 = vsel %vm1241, %v2284, 0.0
    %s2289 = scalar_lea.vmem [#allocation11], 16
    %2290 = vst [vmem:[%s2289] sm:$0xff] %v2288
    %v2291 = vsel %vm1249, %v2262, %v1949
    %v2292 = vsel %vm1241, %v2284, %v1950
    %s2293 = scalar_lea.vmem [#allocation2], 144
    %v2294 = vld [vmem:[%s2293] sm:$0xff]
    %v2295 = vld [vmem:[%s2293 + $0x8] sm:$0xff]
    %v2296 = vld [vmem:[%s2293 + $0x10] sm:$0xff]
    %s2297 = scalar_lea.vmem [#allocation5], 24
    %v2298 = vld [vmem:[%s2297] sm:$0xff]
    %v2299 = vld [vmem:[%s2297 + $0x8] sm:$0xff]
    %v2300 = vld [vmem:[%s2297 + $0x10] sm:$0xff]
    %2301 = vmatprep.subr.mxu0 %v133
    %2302 = vmatpush1.msra.mxu0 %v132
    %2303 = vmatprep.subr.mxu0 %v130
    %2304 = vmatpush1.msra.mxu0 %v129
    %2305 = vmatprep.subr.mxu0 %v127
    %2306 = vmatpush1.msra.mxu0 %v126
    %2307 = vmatprep.subr.mxu0 %v124
    %2308 = vmatpush1.msra.mxu0 %v123
    %2309 = vmatprep.subr.mxu0 %v121
    %2310 = vmatpush1.msra.mxu0 %v120
    %2311 = vmatprep.subr.mxu0 %v118
    %2312 = vmatpush1.msra.mxu0 %v117
    %2313 = vmatprep.subr.mxu0 %v115
    %2314 = vmatpush1.msra.mxu0 %v114
    %2315 = vmatprep.subr.mxu0 %v112
    %2316 = vmatpush1.msra.mxu0 %v111
    %2317 = vmatprep.subr.mxu0 %v109
    %2318 = vmatpush1.msra.mxu0 %v108
    %2319 = vmatprep.subr.mxu0 %v106
    %2320 = vmatpush1.msra.mxu0 %v105
    %2321 = vmatprep.subr.mxu0 %v103
    %2322 = vmatpush1.msra.mxu0 %v102
    %2323 = vmatprep.subr.mxu0 %v100
    %2324 = vmatpush1.msra.mxu0 %v99
    %2325 = vmatprep.subr.mxu0 %v97
    %2326 = vmatpush1.msra.mxu0 %v96
    %2327 = vmatprep.subr.mxu0 %v94
    %2328 = vmatpush1.msra.mxu0 %v93
    %2329 = vmatprep.subr.mxu0 %v91
    %2330 = vmatpush1.msra.mxu0 %v90
    %2331 = vmatprep.subr.mxu0 %v88
    %2332 = vmatpush1.msra.mxu0 %v87
    %2333 = vmatprep.subr.mxu0 0.0
    %2334 = vmatpush2.msra.mxu0 0.0
    %2335 = vmatprep.subr.mxu0 0.0
    %2336 = vmatpush2.msra.mxu0 0.0
    %2337 = vmatprep.subr.mxu0 0.0
    %2338 = vmatpush2.msra.mxu0 0.0
    %2339 = vmatprep.subr.mxu0 0.0
    %2340 = vmatpush2.msra.mxu0 0.0
    %2341 = vmatprep.subr.mxu0 0.0
    %2342 = vmatpush2.msra.mxu0 0.0
    %2343 = vmatprep.subr.mxu0 0.0
    %2344 = vmatpush2.msra.mxu0 0.0
    %2345 = vmatprep.subr.mxu0 0.0
    %2346 = vmatpush2.msra.mxu0 0.0
    %2347 = vmatprep.subr.mxu0 0.0
    %2348 = vmatpush2.msra.mxu0 0.0
    %2349 = vmatprep.subr.mxu0 0.0
    %2350 = vmatpush2.msra.mxu0 0.0
    %2351 = vmatprep.subr.mxu0 0.0
    %2352 = vmatpush2.msra.mxu0 0.0
    %2353 = vmatprep.subr.mxu0 0.0
    %2354 = vmatpush2.msra.mxu0 0.0
    %2355 = vmatprep.subr.mxu0 0.0
    %2356 = vmatpush2.msra.mxu0 0.0
    %2357 = vmatprep.subr.mxu0 0.0
    %2358 = vmatpush2.msra.mxu0 0.0
    %2359 = vmatprep.subr.mxu0 0.0
    %2360 = vmatpush2.msra.mxu0 0.0
    %2361 = vmatprep.subr.mxu0 0.0
    %2362 = vmatpush2.msra.mxu0 0.0
    %2363 = vmatprep.subr.mxu0 0.0
    %2364 = vmatpush2.msra.mxu0 0.0
    %2365 = vmatprep.mubr.f32.mxu0 0.0
    %2366 = vmatmul.mubr.f32.gmra.mxu0 %v2291
    %v2367 = vpop.f32.mrf.mxu0
    %v2368 = vadd.f32 0.0, %v2367
    %v2369 = vpop.f32.mrf.mxu0
    %v2370 = vadd.f32 0.0, %v2369
    %2371 = vdwg.mxu0
    %2372 = vmatprep.subr.mxu0 0.0
    %2373 = vmatpush1.msra.mxu0 %v134
    %2374 = vmatprep.subr.mxu0 0.0
    %2375 = vmatpush1.msra.mxu0 %v131
    %2376 = vmatprep.subr.mxu0 0.0
    %2377 = vmatpush1.msra.mxu0 %v128
    %2378 = vmatprep.subr.mxu0 0.0
    %2379 = vmatpush1.msra.mxu0 %v125
    %2380 = vmatprep.subr.mxu0 0.0
    %2381 = vmatpush1.msra.mxu0 %v122
    %2382 = vmatprep.subr.mxu0 0.0
    %2383 = vmatpush1.msra.mxu0 %v119
    %2384 = vmatprep.subr.mxu0 0.0
    %2385 = vmatpush1.msra.mxu0 %v116
    %2386 = vmatprep.subr.mxu0 0.0
    %2387 = vmatpush1.msra.mxu0 %v113
    %2388 = vmatprep.subr.mxu0 0.0
    %2389 = vmatpush1.msra.mxu0 %v110
    %2390 = vmatprep.subr.mxu0 0.0
    %2391 = vmatpush1.msra.mxu0 %v107
    %2392 = vmatprep.subr.mxu0 0.0
    %2393 = vmatpush1.msra.mxu0 %v104
    %2394 = vmatprep.subr.mxu0 0.0
    %2395 = vmatpush1.msra.mxu0 %v101
    %2396 = vmatprep.subr.mxu0 0.0
    %2397 = vmatpush1.msra.mxu0 %v98
    %2398 = vmatprep.subr.mxu0 0.0
    %2399 = vmatpush1.msra.mxu0 %v95
    %2400 = vmatprep.subr.mxu0 0.0
    %2401 = vmatpush1.msra.mxu0 %v92
    %2402 = vmatprep.subr.mxu0 0.0
    %2403 = vmatpush1.msra.mxu0 %v89
    %2404 = vmatprep.subr.mxu0 0.0
    %2405 = vmatpush2.msra.mxu0 0.0
    %2406 = vmatprep.subr.mxu0 0.0
    %2407 = vmatpush2.msra.mxu0 0.0
    %2408 = vmatprep.subr.mxu0 0.0
    %2409 = vmatpush2.msra.mxu0 0.0
    %2410 = vmatprep.subr.mxu0 0.0
    %2411 = vmatpush2.msra.mxu0 0.0
    %2412 = vmatprep.subr.mxu0 0.0
    %2413 = vmatpush2.msra.mxu0 0.0
    %2414 = vmatprep.subr.mxu0 0.0
    %2415 = vmatpush2.msra.mxu0 0.0
    %2416 = vmatprep.subr.mxu0 0.0
    %2417 = vmatpush2.msra.mxu0 0.0
    %2418 = vmatprep.subr.mxu0 0.0
    %2419 = vmatpush2.msra.mxu0 0.0
    %2420 = vmatprep.subr.mxu0 0.0
    %2421 = vmatpush2.msra.mxu0 0.0
    %2422 = vmatprep.subr.mxu0 0.0
    %2423 = vmatpush2.msra.mxu0 0.0
    %2424 = vmatprep.subr.mxu0 0.0
    %2425 = vmatpush2.msra.mxu0 0.0
    %2426 = vmatprep.subr.mxu0 0.0
    %2427 = vmatpush2.msra.mxu0 0.0
    %2428 = vmatprep.subr.mxu0 0.0
    %2429 = vmatpush2.msra.mxu0 0.0
    %2430 = vmatprep.subr.mxu0 0.0
    %2431 = vmatpush2.msra.mxu0 0.0
    %2432 = vmatprep.subr.mxu0 0.0
    %2433 = vmatpush2.msra.mxu0 0.0
    %2434 = vmatprep.subr.mxu0 0.0
    %2435 = vmatpush2.msra.mxu0 0.0
    %2436 = vmatprep.mubr.f32.mxu0 0.0
    %2437 = vmatmul.mubr.f32.gmra.mxu0 %v2291
    %v2438 = vpop.f32.mrf.mxu0
    %v2439 = vadd.f32 0.0, %v2438
    %v2440 = vpop.f32.mrf.mxu0
    %2441 = vdwg.mxu0
    %2442 = vmatprep.subr.mxu0 %v181
    %2443 = vmatpush1.msra.mxu0 %v180
    %2444 = vmatprep.subr.mxu0 %v178
    %2445 = vmatpush1.msra.mxu0 %v177
    %2446 = vmatprep.subr.mxu0 %v175
    %2447 = vmatpush1.msra.mxu0 %v174
    %2448 = vmatprep.subr.mxu0 %v172
    %2449 = vmatpush1.msra.mxu0 %v171
    %2450 = vmatprep.subr.mxu0 %v169
    %2451 = vmatpush1.msra.mxu0 %v168
    %2452 = vmatprep.subr.mxu0 %v166
    %2453 = vmatpush1.msra.mxu0 %v165
    %2454 = vmatprep.subr.mxu0 %v163
    %2455 = vmatpush1.msra.mxu0 %v162
    %2456 = vmatprep.subr.mxu0 %v160
    %2457 = vmatpush1.msra.mxu0 %v159
    %2458 = vmatprep.subr.mxu0 %v157
    %2459 = vmatpush1.msra.mxu0 %v156
    %2460 = vmatprep.subr.mxu0 %v154
    %2461 = vmatpush1.msra.mxu0 %v153
    %2462 = vmatprep.subr.mxu0 %v151
    %2463 = vmatpush1.msra.mxu0 %v150
    %2464 = vmatprep.subr.mxu0 %v148
    %2465 = vmatpush1.msra.mxu0 %v147
    %2466 = vmatprep.subr.mxu0 %v145
    %2467 = vmatpush1.msra.mxu0 %v144
    %2468 = vmatprep.subr.mxu0 %v142
    %2469 = vmatpush1.msra.mxu0 %v141
    %2470 = vmatprep.subr.mxu0 %v139
    %2471 = vmatpush1.msra.mxu0 %v138
    %2472 = vmatprep.subr.mxu0 %v136
    %2473 = vmatpush1.msra.mxu0 %v135
    %2474 = vmatprep.subr.mxu0 0.0
    %2475 = vmatpush2.msra.mxu0 0.0
    %2476 = vmatprep.subr.mxu0 0.0
    %2477 = vmatpush2.msra.mxu0 0.0
    %2478 = vmatprep.subr.mxu0 0.0
    %2479 = vmatpush2.msra.mxu0 0.0
    %2480 = vmatprep.subr.mxu0 0.0
    %2481 = vmatpush2.msra.mxu0 0.0
    %2482 = vmatprep.subr.mxu0 0.0
    %2483 = vmatpush2.msra.mxu0 0.0
    %2484 = vmatprep.subr.mxu0 0.0
    %2485 = vmatpush2.msra.mxu0 0.0
    %2486 = vmatprep.subr.mxu0 0.0
    %2487 = vmatpush2.msra.mxu0 0.0
    %2488 = vmatprep.subr.mxu0 0.0
    %2489 = vmatpush2.msra.mxu0 0.0
    %2490 = vmatprep.subr.mxu0 0.0
    %2491 = vmatpush2.msra.mxu0 0.0
    %2492 = vmatprep.subr.mxu0 0.0
    %2493 = vmatpush2.msra.mxu0 0.0
    %2494 = vmatprep.subr.mxu0 0.0
    %2495 = vmatpush2.msra.mxu0 0.0
    %2496 = vmatprep.subr.mxu0 0.0
    %2497 = vmatpush2.msra.mxu0 0.0
    %2498 = vmatprep.subr.mxu0 0.0
    %2499 = vmatpush2.msra.mxu0 0.0
    %2500 = vmatprep.subr.mxu0 0.0
    %2501 = vmatpush2.msra.mxu0 0.0
    %2502 = vmatprep.subr.mxu0 0.0
    %2503 = vmatpush2.msra.mxu0 0.0
    %2504 = vmatprep.subr.mxu0 0.0
    %2505 = vmatpush2.msra.mxu0 0.0
    %2506 = vmatprep.mubr.f32.mxu0 0.0
    %2507 = vmatmul.mubr.f32.gmra.mxu0 %v2292
    %v2508 = vpop.f32.mrf.mxu0
    %v2509 = vadd.f32 0.0, %v2508
    %v2510 = vpop.f32.mrf.mxu0
    %v2511 = vadd.f32 0.0, %v2510
    %2512 = vdwg.mxu0
    %2513 = vmatprep.subr.mxu0 0.0
    %2514 = vmatpush1.msra.mxu0 %v182
    %2515 = vmatprep.subr.mxu0 0.0
    %2516 = vmatpush1.msra.mxu0 %v179
    %2517 = vmatprep.subr.mxu0 0.0
    %2518 = vmatpush1.msra.mxu0 %v176
    %2519 = vmatprep.subr.mxu0 0.0
    %2520 = vmatpush1.msra.mxu0 %v173
    %2521 = vmatprep.subr.mxu0 0.0
    %2522 = vmatpush1.msra.mxu0 %v170
    %2523 = vmatprep.subr.mxu0 0.0
    %2524 = vmatpush1.msra.mxu0 %v167
    %2525 = vmatprep.subr.mxu0 0.0
    %2526 = vmatpush1.msra.mxu0 %v164
    %2527 = vmatprep.subr.mxu0 0.0
    %2528 = vmatpush1.msra.mxu0 %v161
    %2529 = vmatprep.subr.mxu0 0.0
    %2530 = vmatpush1.msra.mxu0 %v158
    %2531 = vmatprep.subr.mxu0 0.0
    %2532 = vmatpush1.msra.mxu0 %v155
    %2533 = vmatprep.subr.mxu0 0.0
    %2534 = vmatpush1.msra.mxu0 %v152
    %2535 = vmatprep.subr.mxu0 0.0
    %2536 = vmatpush1.msra.mxu0 %v149
    %2537 = vmatprep.subr.mxu0 0.0
    %2538 = vmatpush1.msra.mxu0 %v146
    %2539 = vmatprep.subr.mxu0 0.0
    %2540 = vmatpush1.msra.mxu0 %v143
    %2541 = vmatprep.subr.mxu0 0.0
    %2542 = vmatpush1.msra.mxu0 %v140
    %2543 = vmatprep.subr.mxu0 0.0
    %2544 = vmatpush1.msra.mxu0 %v137
    %2545 = vmatprep.subr.mxu0 0.0
    %2546 = vmatpush2.msra.mxu0 0.0
    %2547 = vmatprep.subr.mxu0 0.0
    %2548 = vmatpush2.msra.mxu0 0.0
    %2549 = vmatprep.subr.mxu0 0.0
    %2550 = vmatpush2.msra.mxu0 0.0
    %2551 = vmatprep.subr.mxu0 0.0
    %2552 = vmatpush2.msra.mxu0 0.0
    %2553 = vmatprep.subr.mxu0 0.0
    %2554 = vmatpush2.msra.mxu0 0.0
    %2555 = vmatprep.subr.mxu0 0.0
    %2556 = vmatpush2.msra.mxu0 0.0
    %2557 = vmatprep.subr.mxu0 0.0
    %2558 = vmatpush2.msra.mxu0 0.0
    %2559 = vmatprep.subr.mxu0 0.0
    %2560 = vmatpush2.msra.mxu0 0.0
    %2561 = vmatprep.subr.mxu0 0.0
    %2562 = vmatpush2.msra.mxu0 0.0
    %2563 = vmatprep.subr.mxu0 0.0
    %2564 = vmatpush2.msra.mxu0 0.0
    %2565 = vmatprep.subr.mxu0 0.0
    %2566 = vmatpush2.msra.mxu0 0.0
    %2567 = vmatprep.subr.mxu0 0.0
    %2568 = vmatpush2.msra.mxu0 0.0
    %2569 = vmatprep.subr.mxu0 0.0
    %2570 = vmatpush2.msra.mxu0 0.0
    %2571 = vmatprep.subr.mxu0 0.0
    %2572 = vmatpush2.msra.mxu0 0.0
    %2573 = vmatprep.subr.mxu0 0.0
    %2574 = vmatpush2.msra.mxu0 0.0
    %2575 = vmatprep.subr.mxu0 0.0
    %2576 = vmatpush2.msra.mxu0 0.0
    %2577 = vmatprep.mubr.f32.mxu0 0.0
    %2578 = vmatmul.mubr.f32.gmra.mxu0 %v2292
    %v2579 = vpop.f32.mrf.mxu0
    %v2580 = vadd.f32 0.0, %v2579
    %v2581 = vpop.f32.mrf.mxu0
    %2582 = vdwg.mxu0
    %v2583 = vadd.f32 %v2294, %v2368
    %v2584 = vxor.u32 %v2583, 2147483648
    %v2585 = vmul.f32 %v2584, 1.442695
    %v2586 = vpow.pop %v2585
    %v2587 = vadd.f32 %v2586, 1.0
    %v2588 = vrcp.pop %v2587
    %v2589 = vmul.f32 1.0, %v2588
    %v2590 = vadd.f32 %v2295, %v2370
    %v2591 = vxor.u32 %v2590, 2147483648
    %v2592 = vmul.f32 %v2591, 1.442695
    %v2593 = vpow.pop %v2592
    %v2594 = vadd.f32 %v2593, 1.0
    %v2595 = vrcp.pop %v2594
    %v2596 = vmul.f32 1.0, %v2595
    %v2597 = vadd.f32 %v2439, %v492
    %v2598 = vmul.f32 %v2589, %v2597
    %v2599 = vadd.f32 %v2296, %v2598
    %v2600 = vtanh.pop %v2599
    %v2601 = vsub.f32 1.0, %v2596
    %v2602 = vmul.f32 %v2601, %v2600
    %v2603 = vmul.f32 %v2596, %v2291
    %v2604 = vadd.f32 %v2602, %v2603
    %v2605 = vadd.f32 %v2298, %v2509
    %v2606 = vxor.u32 %v2605, 2147483648
    %v2607 = vmul.f32 %v2606, 1.442695
    %v2608 = vpow.pop %v2607
    %v2609 = vadd.f32 %v2608, 1.0
    %v2610 = vrcp.pop %v2609
    %v2611 = vmul.f32 1.0, %v2610
    %v2612 = vadd.f32 %v2299, %v2511
    %v2613 = vxor.u32 %v2612, 2147483648
    %v2614 = vmul.f32 %v2613, 1.442695
    %v2615 = vpow.pop %v2614
    %v2616 = vadd.f32 %v2615, 1.0
    %v2617 = vrcp.pop %v2616
    %v2618 = vmul.f32 1.0, %v2617
    %v2619 = vadd.f32 %v2580, %v520
    %v2620 = vmul.f32 %v2611, %v2619
    %v2621 = vadd.f32 %v2300, %v2620
    %v2622 = vtanh.pop %v2621
    %v2623 = vsub.f32 1.0, %v2618
    %v2624 = vmul.f32 %v2623, %v2622
    %v2625 = vmul.f32 %v2618, %v2292
    %v2626 = vadd.f32 %v2624, %v2625
    %v2627 = vsel %vm895, %v2604, 0.0
    %s2628 = scalar_lea.vmem [#allocation10], 48
    %2629 = vst [vmem:[%s2628] sm:$0xff] %v2627
    %v2630 = vsel %vm887, %v2626, 0.0
    %s2631 = scalar_lea.vmem [#allocation11], 8
    %2632 = vst [vmem:[%s2631] sm:$0xff] %v2630
    %v2633 = vsel %vm895, %v2604, %v2291
    %v2634 = vsel %vm887, %v2626, %v2292
    %s2635 = scalar_lea.vmem [#allocation2], 168
    %v2636 = vld [vmem:[%s2635] sm:$0xff]
    %v2637 = vld [vmem:[%s2635 + $0x8] sm:$0xff]
    %v2638 = vld [vmem:[%s2635 + $0x10] sm:$0xff]
    %v2639 = vld [vmem:[#allocation5] sm:$0xff]
    %v2640 = vld [vmem:[#allocation5 + $0x8] sm:$0xff]
    %v2641 = vld [vmem:[#allocation5 + $0x10] sm:$0xff]
    %2642 = vmatprep.subr.mxu0 %v133
    %2643 = vmatpush1.msra.mxu0 %v132
    %2644 = vmatprep.subr.mxu0 %v130
    %2645 = vmatpush1.msra.mxu0 %v129
    %2646 = vmatprep.subr.mxu0 %v127
    %2647 = vmatpush1.msra.mxu0 %v126
    %2648 = vmatprep.subr.mxu0 %v124
    %2649 = vmatpush1.msra.mxu0 %v123
    %2650 = vmatprep.subr.mxu0 %v121
    %2651 = vmatpush1.msra.mxu0 %v120
    %2652 = vmatprep.subr.mxu0 %v118
    %2653 = vmatpush1.msra.mxu0 %v117
    %2654 = vmatprep.subr.mxu0 %v115
    %2655 = vmatpush1.msra.mxu0 %v114
    %2656 = vmatprep.subr.mxu0 %v112
    %2657 = vmatpush1.msra.mxu0 %v111
    %2658 = vmatprep.subr.mxu0 %v109
    %2659 = vmatpush1.msra.mxu0 %v108
    %2660 = vmatprep.subr.mxu0 %v106
    %2661 = vmatpush1.msra.mxu0 %v105
    %2662 = vmatprep.subr.mxu0 %v103
    %2663 = vmatpush1.msra.mxu0 %v102
    %2664 = vmatprep.subr.mxu0 %v100
    %2665 = vmatpush1.msra.mxu0 %v99
    %2666 = vmatprep.subr.mxu0 %v97
    %2667 = vmatpush1.msra.mxu0 %v96
    %2668 = vmatprep.subr.mxu0 %v94
    %2669 = vmatpush1.msra.mxu0 %v93
    %2670 = vmatprep.subr.mxu0 %v91
    %2671 = vmatpush1.msra.mxu0 %v90
    %2672 = vmatprep.subr.mxu0 %v88
    %2673 = vmatpush1.msra.mxu0 %v87
    %2674 = vmatprep.subr.mxu0 0.0
    %2675 = vmatpush2.msra.mxu0 0.0
    %2676 = vmatprep.subr.mxu0 0.0
    %2677 = vmatpush2.msra.mxu0 0.0
    %2678 = vmatprep.subr.mxu0 0.0
    %2679 = vmatpush2.msra.mxu0 0.0
    %2680 = vmatprep.subr.mxu0 0.0
    %2681 = vmatpush2.msra.mxu0 0.0
    %2682 = vmatprep.subr.mxu0 0.0
    %2683 = vmatpush2.msra.mxu0 0.0
    %2684 = vmatprep.subr.mxu0 0.0
    %2685 = vmatpush2.msra.mxu0 0.0
    %2686 = vmatprep.subr.mxu0 0.0
    %2687 = vmatpush2.msra.mxu0 0.0
    %2688 = vmatprep.subr.mxu0 0.0
    %2689 = vmatpush2.msra.mxu0 0.0
    %2690 = vmatprep.subr.mxu0 0.0
    %2691 = vmatpush2.msra.mxu0 0.0
    %2692 = vmatprep.subr.mxu0 0.0
    %2693 = vmatpush2.msra.mxu0 0.0
    %2694 = vmatprep.subr.mxu0 0.0
    %2695 = vmatpush2.msra.mxu0 0.0
    %2696 = vmatprep.subr.mxu0 0.0
    %2697 = vmatpush2.msra.mxu0 0.0
    %2698 = vmatprep.subr.mxu0 0.0
    %2699 = vmatpush2.msra.mxu0 0.0
    %2700 = vmatprep.subr.mxu0 0.0
    %2701 = vmatpush2.msra.mxu0 0.0
    %2702 = vmatprep.subr.mxu0 0.0
    %2703 = vmatpush2.msra.mxu0 0.0
    %2704 = vmatprep.subr.mxu0 0.0
    %2705 = vmatpush2.msra.mxu0 0.0
    %2706 = vmatprep.mubr.f32.mxu0 0.0
    %2707 = vmatmul.mubr.f32.gmra.mxu0 %v2633
    %v2708 = vpop.f32.mrf.mxu0
    %v2709 = vadd.f32 0.0, %v2708
    %v2710 = vpop.f32.mrf.mxu0
    %v2711 = vadd.f32 0.0, %v2710
    %2712 = vdwg.mxu0
    %2713 = vmatprep.subr.mxu0 0.0
    %2714 = vmatpush1.msra.mxu0 %v134
    %2715 = vmatprep.subr.mxu0 0.0
    %2716 = vmatpush1.msra.mxu0 %v131
    %2717 = vmatprep.subr.mxu0 0.0
    %2718 = vmatpush1.msra.mxu0 %v128
    %2719 = vmatprep.subr.mxu0 0.0
    %2720 = vmatpush1.msra.mxu0 %v125
    %2721 = vmatprep.subr.mxu0 0.0
    %2722 = vmatpush1.msra.mxu0 %v122
    %2723 = vmatprep.subr.mxu0 0.0
    %2724 = vmatpush1.msra.mxu0 %v119
    %2725 = vmatprep.subr.mxu0 0.0
    %2726 = vmatpush1.msra.mxu0 %v116
    %2727 = vmatprep.subr.mxu0 0.0
    %2728 = vmatpush1.msra.mxu0 %v113
    %2729 = vmatprep.subr.mxu0 0.0
    %2730 = vmatpush1.msra.mxu0 %v110
    %2731 = vmatprep.subr.mxu0 0.0
    %2732 = vmatpush1.msra.mxu0 %v107
    %2733 = vmatprep.subr.mxu0 0.0
    %2734 = vmatpush1.msra.mxu0 %v104
    %2735 = vmatprep.subr.mxu0 0.0
    %2736 = vmatpush1.msra.mxu0 %v101
    %2737 = vmatprep.subr.mxu0 0.0
    %2738 = vmatpush1.msra.mxu0 %v98
    %2739 = vmatprep.subr.mxu0 0.0
    %2740 = vmatpush1.msra.mxu0 %v95
    %2741 = vmatprep.subr.mxu0 0.0
    %2742 = vmatpush1.msra.mxu0 %v92
    %2743 = vmatprep.subr.mxu0 0.0
    %2744 = vmatpush1.msra.mxu0 %v89
    %2745 = vmatprep.subr.mxu0 0.0
    %2746 = vmatpush2.msra.mxu0 0.0
    %2747 = vmatprep.subr.mxu0 0.0
    %2748 = vmatpush2.msra.mxu0 0.0
    %2749 = vmatprep.subr.mxu0 0.0
    %2750 = vmatpush2.msra.mxu0 0.0
    %2751 = vmatprep.subr.mxu0 0.0
    %2752 = vmatpush2.msra.mxu0 0.0
    %2753 = vmatprep.subr.mxu0 0.0
    %2754 = vmatpush2.msra.mxu0 0.0
    %2755 = vmatprep.subr.mxu0 0.0
    %2756 = vmatpush2.msra.mxu0 0.0
    %2757 = vmatprep.subr.mxu0 0.0
    %2758 = vmatpush2.msra.mxu0 0.0
    %2759 = vmatprep.subr.mxu0 0.0
    %2760 = vmatpush2.msra.mxu0 0.0
    %2761 = vmatprep.subr.mxu0 0.0
    %2762 = vmatpush2.msra.mxu0 0.0
    %2763 = vmatprep.subr.mxu0 0.0
    %2764 = vmatpush2.msra.mxu0 0.0
    %2765 = vmatprep.subr.mxu0 0.0
    %2766 = vmatpush2.msra.mxu0 0.0
    %2767 = vmatprep.subr.mxu0 0.0
    %2768 = vmatpush2.msra.mxu0 0.0
    %2769 = vmatprep.subr.mxu0 0.0
    %2770 = vmatpush2.msra.mxu0 0.0
    %2771 = vmatprep.subr.mxu0 0.0
    %2772 = vmatpush2.msra.mxu0 0.0
    %2773 = vmatprep.subr.mxu0 0.0
    %2774 = vmatpush2.msra.mxu0 0.0
    %2775 = vmatprep.subr.mxu0 0.0
    %2776 = vmatpush2.msra.mxu0 0.0
    %2777 = vmatprep.mubr.f32.mxu0 0.0
    %2778 = vmatmul.mubr.f32.gmra.mxu0 %v2633
    %v2779 = vpop.f32.mrf.mxu0
    %v2780 = vadd.f32 0.0, %v2779
    %v2781 = vpop.f32.mrf.mxu0
    %2782 = vdwg.mxu0
    %2783 = vmatprep.subr.mxu0 %v181
    %2784 = vmatpush1.msra.mxu0 %v180
    %2785 = vmatprep.subr.mxu0 %v178
    %2786 = vmatpush1.msra.mxu0 %v177
    %2787 = vmatprep.subr.mxu0 %v175
    %2788 = vmatpush1.msra.mxu0 %v174
    %2789 = vmatprep.subr.mxu0 %v172
    %2790 = vmatpush1.msra.mxu0 %v171
    %2791 = vmatprep.subr.mxu0 %v169
    %2792 = vmatpush1.msra.mxu0 %v168
    %2793 = vmatprep.subr.mxu0 %v166
    %2794 = vmatpush1.msra.mxu0 %v165
    %2795 = vmatprep.subr.mxu0 %v163
    %2796 = vmatpush1.msra.mxu0 %v162
    %2797 = vmatprep.subr.mxu0 %v160
    %2798 = vmatpush1.msra.mxu0 %v159
    %2799 = vmatprep.subr.mxu0 %v157
    %2800 = vmatpush1.msra.mxu0 %v156
    %2801 = vmatprep.subr.mxu0 %v154
    %2802 = vmatpush1.msra.mxu0 %v153
    %2803 = vmatprep.subr.mxu0 %v151
    %2804 = vmatpush1.msra.mxu0 %v150
    %2805 = vmatprep.subr.mxu0 %v148
    %2806 = vmatpush1.msra.mxu0 %v147
    %2807 = vmatprep.subr.mxu0 %v145
    %2808 = vmatpush1.msra.mxu0 %v144
    %2809 = vmatprep.subr.mxu0 %v142
    %2810 = vmatpush1.msra.mxu0 %v141
    %2811 = vmatprep.subr.mxu0 %v139
    %2812 = vmatpush1.msra.mxu0 %v138
    %2813 = vmatprep.subr.mxu0 %v136
    %2814 = vmatpush1.msra.mxu0 %v135
    %2815 = vmatprep.subr.mxu0 0.0
    %2816 = vmatpush2.msra.mxu0 0.0
    %2817 = vmatprep.subr.mxu0 0.0
    %2818 = vmatpush2.msra.mxu0 0.0
    %2819 = vmatprep.subr.mxu0 0.0
    %2820 = vmatpush2.msra.mxu0 0.0
    %2821 = vmatprep.subr.mxu0 0.0
    %2822 = vmatpush2.msra.mxu0 0.0
    %2823 = vmatprep.subr.mxu0 0.0
    %2824 = vmatpush2.msra.mxu0 0.0
    %2825 = vmatprep.subr.mxu0 0.0
    %2826 = vmatpush2.msra.mxu0 0.0
    %2827 = vmatprep.subr.mxu0 0.0
    %2828 = vmatpush2.msra.mxu0 0.0
    %2829 = vmatprep.subr.mxu0 0.0
    %2830 = vmatpush2.msra.mxu0 0.0
    %2831 = vmatprep.subr.mxu0 0.0
    %2832 = vmatpush2.msra.mxu0 0.0
    %2833 = vmatprep.subr.mxu0 0.0
    %2834 = vmatpush2.msra.mxu0 0.0
    %2835 = vmatprep.subr.mxu0 0.0
    %2836 = vmatpush2.msra.mxu0 0.0
    %2837 = vmatprep.subr.mxu0 0.0
    %2838 = vmatpush2.msra.mxu0 0.0
    %2839 = vmatprep.subr.mxu0 0.0
    %2840 = vmatpush2.msra.mxu0 0.0
    %2841 = vmatprep.subr.mxu0 0.0
    %2842 = vmatpush2.msra.mxu0 0.0
    %2843 = vmatprep.subr.mxu0 0.0
    %2844 = vmatpush2.msra.mxu0 0.0
    %2845 = vmatprep.subr.mxu0 0.0
    %2846 = vmatpush2.msra.mxu0 0.0
    %2847 = vmatprep.mubr.f32.mxu0 0.0
    %2848 = vmatmul.mubr.f32.gmra.mxu0 %v2634
    %v2849 = vpop.f32.mrf.mxu0
    %v2850 = vadd.f32 0.0, %v2849
    %v2851 = vpop.f32.mrf.mxu0
    %v2852 = vadd.f32 0.0, %v2851
    %2853 = vdwg.mxu0
    %2854 = vmatprep.subr.mxu0 0.0
    %2855 = vmatpush1.msra.mxu0 %v182
    %2856 = vmatprep.subr.mxu0 0.0
    %2857 = vmatpush1.msra.mxu0 %v179
    %2858 = vmatprep.subr.mxu0 0.0
    %2859 = vmatpush1.msra.mxu0 %v176
    %2860 = vmatprep.subr.mxu0 0.0
    %2861 = vmatpush1.msra.mxu0 %v173
    %2862 = vmatprep.subr.mxu0 0.0
    %2863 = vmatpush1.msra.mxu0 %v170
    %2864 = vmatprep.subr.mxu0 0.0
    %2865 = vmatpush1.msra.mxu0 %v167
    %2866 = vmatprep.subr.mxu0 0.0
    %2867 = vmatpush1.msra.mxu0 %v164
    %2868 = vmatprep.subr.mxu0 0.0
    %2869 = vmatpush1.msra.mxu0 %v161
    %2870 = vmatprep.subr.mxu0 0.0
    %2871 = vmatpush1.msra.mxu0 %v158
    %2872 = vmatprep.subr.mxu0 0.0
    %2873 = vmatpush1.msra.mxu0 %v155
    %2874 = vmatprep.subr.mxu0 0.0
    %2875 = vmatpush1.msra.mxu0 %v152
    %2876 = vmatprep.subr.mxu0 0.0
    %2877 = vmatpush1.msra.mxu0 %v149
    %2878 = vmatprep.subr.mxu0 0.0
    %2879 = vmatpush1.msra.mxu0 %v146
    %2880 = vmatprep.subr.mxu0 0.0
    %2881 = vmatpush1.msra.mxu0 %v143
    %2882 = vmatprep.subr.mxu0 0.0
    %2883 = vmatpush1.msra.mxu0 %v140
    %2884 = vmatprep.subr.mxu0 0.0
    %2885 = vmatpush1.msra.mxu0 %v137
    %2886 = vmatprep.subr.mxu0 0.0
    %2887 = vmatpush2.msra.mxu0 0.0
    %2888 = vmatprep.subr.mxu0 0.0
    %2889 = vmatpush2.msra.mxu0 0.0
    %2890 = vmatprep.subr.mxu0 0.0
    %2891 = vmatpush2.msra.mxu0 0.0
    %2892 = vmatprep.subr.mxu0 0.0
    %2893 = vmatpush2.msra.mxu0 0.0
    %2894 = vmatprep.subr.mxu0 0.0
    %2895 = vmatpush2.msra.mxu0 0.0
    %2896 = vmatprep.subr.mxu0 0.0
    %2897 = vmatpush2.msra.mxu0 0.0
    %2898 = vmatprep.subr.mxu0 0.0
    %2899 = vmatpush2.msra.mxu0 0.0
    %2900 = vmatprep.subr.mxu0 0.0
    %2901 = vmatpush2.msra.mxu0 0.0
    %2902 = vmatprep.subr.mxu0 0.0
    %2903 = vmatpush2.msra.mxu0 0.0
    %2904 = vmatprep.subr.mxu0 0.0
    %2905 = vmatpush2.msra.mxu0 0.0
    %2906 = vmatprep.subr.mxu0 0.0
    %2907 = vmatpush2.msra.mxu0 0.0
    %2908 = vmatprep.subr.mxu0 0.0
    %2909 = vmatpush2.msra.mxu0 0.0
    %2910 = vmatprep.subr.mxu0 0.0
    %2911 = vmatpush2.msra.mxu0 0.0
    %2912 = vmatprep.subr.mxu0 0.0
    %2913 = vmatpush2.msra.mxu0 0.0
    %2914 = vmatprep.subr.mxu0 0.0
    %2915 = vmatpush2.msra.mxu0 0.0
    %2916 = vmatprep.subr.mxu0 0.0
    %2917 = vmatpush2.msra.mxu0 0.0
    %2918 = vmatprep.mubr.f32.mxu0 0.0
    %2919 = vmatmul.mubr.f32.gmra.mxu0 %v2634
    %v2920 = vpop.f32.mrf.mxu0
    %v2921 = vadd.f32 0.0, %v2920
    %v2922 = vpop.f32.mrf.mxu0
    %2923 = vdwg.mxu0
    %v2924 = vadd.f32 %v2636, %v2709
    %v2925 = vxor.u32 %v2924, 2147483648
    %v2926 = vmul.f32 %v2925, 1.442695
    %v2927 = vpow.pop %v2926
    %v2928 = vadd.f32 %v2927, 1.0
    %v2929 = vrcp.pop %v2928
    %v2930 = vmul.f32 1.0, %v2929
    %v2931 = vadd.f32 %v2637, %v2711
    %v2932 = vxor.u32 %v2931, 2147483648
    %v2933 = vmul.f32 %v2932, 1.442695
    %v2934 = vpow.pop %v2933
    %v2935 = vadd.f32 %v2934, 1.0
    %v2936 = vrcp.pop %v2935
    %v2937 = vmul.f32 1.0, %v2936
    %v2938 = vadd.f32 %v2780, %v492
    %v2939 = vmul.f32 %v2930, %v2938
    %v2940 = vadd.f32 %v2638, %v2939
    %v2941 = vtanh.pop %v2940
    %v2942 = vsub.f32 1.0, %v2937
    %v2943 = vmul.f32 %v2942, %v2941
    %v2944 = vmul.f32 %v2937, %v2633
    %v2945 = vadd.f32 %v2943, %v2944
    %v2946 = vadd.f32 %v2639, %v2850
    %v2947 = vxor.u32 %v2946, 2147483648
    %v2948 = vmul.f32 %v2947, 1.442695
    %v2949 = vpow.pop %v2948
    %v2950 = vadd.f32 %v2949, 1.0
    %v2951 = vrcp.pop %v2950
    %v2952 = vmul.f32 1.0, %v2951
    %v2953 = vadd.f32 %v2640, %v2852
    %v2954 = vxor.u32 %v2953, 2147483648
    %v2955 = vmul.f32 %v2954, 1.442695
    %v2956 = vpow.pop %v2955
    %v2957 = vadd.f32 %v2956, 1.0
    %v2958 = vrcp.pop %v2957
    %v2959 = vmul.f32 1.0, %v2958
    %v2960 = vadd.f32 %v2921, %v520
    %v2961 = vmul.f32 %v2952, %v2960
    %v2962 = vadd.f32 %v2641, %v2961
    %v2963 = vtanh.pop %v2962
    %v2964 = vsub.f32 1.0, %v2959
    %v2965 = vmul.f32 %v2964, %v2963
    %v2966 = vmul.f32 %v2959, %v2634
    %v2967 = vadd.f32 %v2965, %v2966
    %v2968 = vsel %vm543, %v2945, 0.0
    %s2969 = scalar_lea.vmem [#allocation10], 56
    %2970 = vst [vmem:[%s2969] sm:$0xff] %v2968
    %v2971 = vsel %vm536, %v2967, 0.0
    %2972 = vst [vmem:[#allocation11] sm:$0xff] %v2971
    %v2973 = vsel %vm543, %v2945, %v2633
    %v2974 = vsel %vm536, %v2967, %v2634
    %2975 = vst [vmem:[#allocation13] sm:$0xff] %v2973
    %s2976 = scalar_lea.vmem [#allocation13], 8
    %2977 = vst [vmem:[%s2976] sm:$0xff] %v2974
    // Predicated region
    $region46: #{tpu_custom_call.1} parent=1 // pred_check
      _
    $region47: #{tpu_custom_call.1} parent=1 // pred_check_branch
      %2979 = sbr.rel (0) target = $region49
    $region48: #{tpu_custom_call.1} parent=1 // pred_region
      %s2981 = ssub.s32 1024, 1024
      %2982 = vsyncadd [#allocation4], %s2981
      %s2983 = sshll.u32 [#allocation10], 4
      %s2984 = int_to_ptr.vmem [resolvable:$true] %s2983
      %2989 = dma.vmem_to_hbm [thread:$0]  %s2984, 1024, %s7, [#allocation4], 128, 128, 8
    $region49: #{tpu_custom_call.1} parent=1 // pred_fallthru
      _
    // Predicated region
    $region50: #{tpu_custom_call.1} parent=1 // pred_check
      _
    $region51: #{tpu_custom_call.1} parent=1 // pred_check_branch
      %2991 = sbr.rel (0) target = $region53
    $region52: #{tpu_custom_call.1} parent=1 // pred_region
      %s2993 = ssub.s32 1024, 1024
      %2994 = vsyncadd [#allocation12], %s2993
      %s2995 = sshll.u32 [#allocation11], 4
      %s2996 = int_to_ptr.vmem [resolvable:$true] %s2995
      %3001 = dma.vmem_to_hbm [thread:$0]  %s2996, 1024, %s8, [#allocation12], 128, 128, 8
    $region53: #{tpu_custom_call.1} parent=1 // pred_fallthru
      _
    // Predicated region
    $region54: #{tpu_custom_call.1} parent=1 // pred_check
      _
    $region55: #{tpu_custom_call.1} parent=1 // pred_check_branch
      %3003 = sbr.rel (0) target = $region57
    $region56: #{tpu_custom_call.1} parent=1 // pred_region
      %s3005 = ssub.s32 256, 256
      %3006 = vsyncadd [#allocation12], %s3005
      %s3007 = sshll.u32 [#allocation13], 4
      %s3008 = int_to_ptr.vmem [resolvable:$true] %s3007
      %3013 = dma.vmem_to_hbm [thread:$0]  %s3008, 256, %s9, [#allocation12], 128, 128, 8
    $region57: #{tpu_custom_call.1} parent=1 // pred_fallthru
      _
    // Predicated region
    $region58: #{tpu_custom_call.1} parent=1 // pred_check
      _
    $region59: #{tpu_custom_call.1} parent=1 // pred_check_branch
      %3015 = sbr.rel (0) target = $region61
    $region60: #{tpu_custom_call.1} parent=1 // pred_region
      %3016 = dma.done [#allocation4], 1024
    $region61: #{tpu_custom_call.1} parent=1 // pred_fallthru
      _
    // Predicated region
    $region62: #{tpu_custom_call.1} parent=1 // pred_check
      _
    $region63: #{tpu_custom_call.1} parent=1 // pred_check_branch
      %3018 = sbr.rel (0) target = $region65
    $region64: #{tpu_custom_call.1} parent=1 // pred_region
      %3019 = dma.done [#allocation12], 1024
    $region65: #{tpu_custom_call.1} parent=1 // pred_fallthru
      _
    // Predicated region
    $region66: #{tpu_custom_call.1} parent=1 // pred_check
      _
    $region67: #{tpu_custom_call.1} parent=1 // pred_check_branch
      %3021 = sbr.rel (0) target = $region69
    $region68: #{tpu_custom_call.1} parent=1 // pred_region
      %3022 = dma.done [#allocation12], 256
    $region69: #{tpu_custom_call.1} parent=1 // pred_fallthru
      _
    %3023 = vsyncpa [#allocation3], 1
    %3024 = vsyncpa [#allocation6], 1
    %3025 = vsyncpa [#allocation9], 1
    %3026 = vsyncpa [#allocation4], 1
    %3027 = vsyncpa [#allocation12], 1

</llo_original>
